<compile_context>
chip_gen: v7x
topology: tpu7x:2x2x1
jax: 0.10.0
libtpu: 0.0.40
codegen_flags: <defaults>
</compile_context>

<pallas_src>
import functools

import jax
import jax.numpy as jnp
import numpy as np
from jax.experimental import pallas as pl
from jax.experimental.pallas import tpu as pltpu


def _layernorm(x, gamma, beta, eps=1e-5):
    mean = jnp.mean(x, axis=-1, keepdims=True)
    var = jnp.mean((x - mean) ** 2, axis=-1, keepdims=True)
    return (x - mean) * jax.lax.rsqrt(var + eps) * gamma + beta


def _encoder_layer_kernel(
    # inputs
    x_full_ref, xq_ref,
    wq_ref, bq_ref, wk_ref, bk_ref, wv_ref, bv_ref,
    wfc_ref, bfc_ref, g1_ref, be1_ref,
    w1_ref, b1_ref, w2_ref, b2_ref, g2_ref, be2_ref,
    # outputs (out[, attn]) then scratch (k_sc, v_sc)
    *refs,
    n_head, d_k, d_v, compute_dtype, with_attn,
):
    if with_attn:
        out_ref, attn_ref, k_sc, v_sc = refs
    else:
        out_ref, k_sc, v_sc = refs
        attn_ref = None

    f32 = jnp.float32
    cd = compute_dtype
    bt, L, D = x_full_ref.shape          # batch block, full key length, d_model
    _, tq, _ = xq_ref.shape              # query-tile length
    nq = bt * tq

    def split_heads(t2, length, dh):
        # (bt*length, H*dh) -> (H*bt, length, dh), head-major (g = h*bt + b).
        # Leading-dim reshapes + lane slices + leading-axis concat only.
        t3 = t2.reshape(bt, length, n_head * dh)
        return jnp.concatenate(
            [t3[:, :, h * dh:(h + 1) * dh] for h in range(n_head)], axis=0
        ).astype(cd)

    # --- K/V projections: once per batch block (first q-tile step), then kept
    #     resident in VMEM scratch across the "arbitrary" query-tile axis.
    @pl.when(pl.program_id(1) == 0)
    def _():
        xf = x_full_ref[...].reshape(bt * L, D).astype(cd)
        kp = jnp.dot(xf, wk_ref[...], preferred_element_type=f32) + bk_ref[...]
        vp = jnp.dot(xf, wv_ref[...], preferred_element_type=f32) + bv_ref[...]
        k_sc[...] = split_heads(kp, L, d_k)
        v_sc[...] = split_heads(vp, L, d_v)

    # --- Q projection for this query tile; 1/sqrt(d_k) folded in post-bias
    #     (equivalent to dividing the scores by the temperature).
    scale = np.float32(1.0 / np.sqrt(d_k))
    xq = xq_ref[...].reshape(nq, D)                      # f32 residual source
    qp = (jnp.dot(xq.astype(cd), wq_ref[...], preferred_element_type=f32)
          + bq_ref[...]) * scale
    q3 = split_heads(qp, tq, d_k)                        # (H*bt, tq, d_k)

    # --- batched scaled-dot-product attention (single MXU pipeline, no k.T)
    s = jnp.einsum("gqd,gkd->gqk", q3, k_sc[...], preferred_element_type=f32)
    s = s - jnp.max(s, axis=-1, keepdims=True)
    p = jnp.exp(s)
    # approx reciprocal runs on the otherwise-idle EUP slot (~1e-3-level error).
    p = p * pl.reciprocal(jnp.sum(p, axis=-1, keepdims=True), approx=True)

    if with_attn:
        attn_ref[...] = p.reshape(n_head, bt, tq, L).astype(attn_ref.dtype)

    o = jnp.einsum("gqk,gkd->gqd", p.astype(cd), v_sc[...],
                   preferred_element_type=f32)           # (H*bt, tq, d_v) f32

    # --- merge heads in-registers (no scratch-slab round trip), fc + residual + LN1
    o_m = jnp.concatenate(
        [o[h * bt:(h + 1) * bt].reshape(nq, d_v) for h in range(n_head)], axis=-1)
    oo = jnp.dot(o_m.astype(cd), wfc_ref[...],
                 preferred_element_type=f32) + bfc_ref[...]
    y = _layernorm(oo + xq, g1_ref[...], be1_ref[...])

    # --- position-wise FFN (1x1 convs == pointwise matmuls) + residual + LN2
    h1 = jnp.maximum(
        jnp.dot(y.astype(cd), w1_ref[...], preferred_element_type=f32)
        + b1_ref[...], 0.0)
    h2 = jnp.dot(h1.astype(cd), w2_ref[...],
                 preferred_element_type=f32) + b2_ref[...]
    out_ref[...] = _layernorm(h2 + y, g2_ref[...], be2_ref[...]).reshape(
        bt, tq, D).astype(out_ref.dtype)


def _default_vmem_limit_bytes():
    try:
        cap = int(pltpu.get_tpu_info().vmem_capacity_bytes)
    except Exception:
        cap = 64 * 1024 * 1024          # conservative (v7x-sized) fallback
    # leave ~25% headroom for compiler scratch: ~96 MiB on v5e/v6e, ~48 MiB on v7x
    return int(max(32 * 1024 * 1024, min(cap * 3 // 4, 112 * 1024 * 1024)))


def _step_vmem_estimate(bt, tq, *, L, D, n_head, d_k, d_v, d_inner,
                        cd_bytes, out_bytes, attn_bytes, weight_buffers=1):
    """Rough per-grid-step VMEM footprint (bytes) used by the tiling heuristic."""
    g = n_head * bt
    nq = bt * tq
    weights = cd_bytes * (2 * D * n_head * d_k + D * n_head * d_v
                          + n_head * d_v * D + D * d_inner + d_inner * D)
    blocks = 2 * (bt * L * D * 4          # full x block (double buffered)
                  + nq * D * 4            # q-tile x block
                  + nq * D * out_bytes)   # output block
    if attn_bytes:
        blocks += 2 * g * tq * L * attn_bytes
    scratch = g * L * (d_k + d_v) * cd_bytes            # persistent K/V scratch
    live = (2 * g * tq * L * 4            # scores + probs (f32)
            + nq * d_inner * 4            # FFN hidden
            + 2 * nq * n_head * d_v * 4   # merged heads + fc out
            + g * tq * (d_k + d_v) * 4)   # q3 / o
    return weight_buffers * weights + blocks + scratch + live


def _choose_tiling(B, L, est_fn, budget):
    tq_cands = [t for t in range(1, L + 1)
                if L % t == 0 and (t % 8 == 0 or t == L) and t <= 256]
    if not tq_cands:
        tq_cands = [L]
    tq_cands = sorted(set(tq_cands), reverse=True)

    bt_cands = [b for b in range(1, B + 1) if B % b == 0]
    multi = [b for b in bt_cands if B // b >= 2]
    if multi:                              # keep >=2 pipelined steps on the batch axis
        bt_cands = multi

    best = None
    for bt in bt_cands:
        for tq in tq_cands:                # largest feasible query tile for this bt
            if est_fn(bt, tq) > budget:
                continue
            even = (B // bt) % 2 == 0      # fill both v7x TensorCores evenly
            key = (even, bt, tq)
            if best is None or key > best[0]:
                best = (key, bt, tq)
            break
    if best is None:
        return 1, tq_cands[-1]
    return best[1], best[2]


def encoder_layer_forward(x, params, *, n_head, d_k, d_v,
                          batch_block=None, q_block=None,
                          compute_dtype=jnp.bfloat16,
                          return_attn=True, attn_dtype=jnp.bfloat16,
                          out_dtype=None, vmem_limit_bytes=None):
    B, L, D = x.shape
    d_inner = params["w1"].shape[1]
    cd = compute_dtype
    out_dtype = x.dtype if out_dtype is None else out_dtype

    vmem_limit = (_default_vmem_limit_bytes() if vmem_limit_bytes is None
                  else int(vmem_limit_bytes))

    est_fn = functools.partial(
        _step_vmem_estimate, L=L, D=D, n_head=n_head, d_k=d_k, d_v=d_v,
        d_inner=d_inner, cd_bytes=np.dtype(cd).itemsize,
        out_bytes=np.dtype(out_dtype).itemsize,
        attn_bytes=np.dtype(attn_dtype).itemsize if return_attn else 0,
        weight_buffers=1)
    bt_auto, tq_auto = _choose_tiling(B, L, est_fn, int(0.8 * vmem_limit))
    bt = bt_auto if batch_block is None else batch_block
    tq = tq_auto if q_block is None else q_block
    assert B % bt == 0 and L % tq == 0

    kernel = functools.partial(_encoder_layer_kernel, n_head=n_head, d_k=d_k,
                               d_v=d_v, compute_dtype=cd, with_attn=return_attn)
    grid = (B // bt, L // tq)

    def build(single_buffer_weights):
        def const2d(shape):
            if single_buffer_weights:
                # Constant index map -> never re-DMA'd; one buffer halves resident
                # weight VMEM (matters most on v7x's 64 MiB VMEM).
                return pl.BlockSpec(shape, lambda i, j: (0, 0),
                                    pipeline_mode=pl.Buffered(buffer_count=1))
            return pl.BlockSpec(shape, lambda i, j: (0, 0))

        in_specs = [
            pl.BlockSpec((bt, L, D), lambda i, j: (i, 0, 0)),    # x (full block, K/V)
            pl.BlockSpec((bt, tq, D), lambda i, j: (i, j, 0)),   # x (query tile)
            const2d((D, n_head * d_k)), const2d((1, n_head * d_k)),   # wq, bq
            const2d((D, n_head * d_k)), const2d((1, n_head * d_k)),   # wk, bk
            const2d((D, n_head * d_v)), const2d((1, n_head * d_v)),   # wv, bv
            const2d((n_head * d_v, D)), const2d((1, D)),               # wfc, bfc
            const2d((1, D)), const2d((1, D)),                          # ln1 g, b
            const2d((D, d_inner)), const2d((1, d_inner)),              # w1, b1
            const2d((d_inner, D)), const2d((1, D)),                    # w2, b2
            const2d((1, D)), const2d((1, D)),                          # ln2 g, b
        ]
        out_shape = [jax.ShapeDtypeStruct((B, L, D), out_dtype)]
        out_specs = [pl.BlockSpec((bt, tq, D), lambda i, j: (i, j, 0))]
        if return_attn:
            out_shape.append(jax.ShapeDtypeStruct((n_head, B, L, L), attn_dtype))
            out_specs.append(
                pl.BlockSpec((n_head, bt, tq, L), lambda i, j: (0, i, j, 0)))

        return pl.pallas_call(
            kernel,
            out_shape=tuple(out_shape),
            grid_spec=pltpu.PrefetchScalarGridSpec(
                num_scalar_prefetch=0,
                grid=grid,
                in_specs=in_specs,
                out_specs=out_specs,
                scratch_shapes=[
                    pltpu.VMEM((n_head * bt, L, d_k), cd),   # persistent K (head-major)
                    pltpu.VMEM((n_head * bt, L, d_v), cd),   # persistent V (head-major)
                ],
            ),
            compiler_params=pltpu.CompilerParams(
                dimension_semantics=("parallel", "arbitrary"),
                vmem_limit_bytes=vmem_limit,
            ),
        )

    x32 = x.astype(jnp.float32)
    args = (
        x32, x32,
        params["wq"].astype(cd), params["bq"],
        params["wk"].astype(cd), params["bk"],
        params["wv"].astype(cd), params["bv"],
        params["wfc"].astype(cd), params["bfc"],
        params["ln1_g"], params["ln1_b"],
        params["w1"].astype(cd), params["b1"],
        params["w2"].astype(cd), params["b2"],
        params["ln2_g"], params["ln2_b"],
    )

    try:
        res = build(single_buffer_weights=True)(*args)
    except Exception:
        # pl.Buffered(1) on the constant weight specs is an optimization only;
        # fall back to default double-buffered constants if this build rejects it.
        res = build(single_buffer_weights=False)(*args)

    if return_attn:
        out, attn = res
        # PyTorch attn shape: (n_head * B, Lq, Lk), head-major.
        return out, attn.reshape(n_head * B, L, L)
    (out,) = res
    return out


def encoder_layer_reference(x, params, *, n_head, d_k, d_v):
    """Pure-JAX reference mirroring the PyTorch forward (eval mode)."""
    B, L, D = x.shape

    def ln(v, g, b, eps=1e-5):
        m = jnp.mean(v, axis=-1, keepdims=True)
        var = jnp.mean((v - m) ** 2, axis=-1, keepdims=True)
        return (v - m) * jax.lax.rsqrt(var + eps) * g + b

    qp = x @ params["wq"] + params["bq"]
    kp = x @ params["wk"] + params["bk"]
    vp = x @ params["wv"] + params["bv"]

    def heads(t, dh):
        return t.reshape(B, L, n_head, dh).transpose(2, 0, 1, 3).reshape(n_head * B, L, dh)

    q, k, v = heads(qp, d_k), heads(kp, d_k), heads(vp, d_v)
    s = jnp.einsum("gqd,gkd->gqk", q, k) / np.power(d_k, 0.5)
    p = jax.nn.softmax(s, axis=-1)
    o = jnp.einsum("gqk,gkd->gqd", p, v)
    o = o.reshape(n_head, B, L, d_v).transpose(1, 2, 0, 3).reshape(B, L, n_head * d_v)
    o = o @ params["wfc"] + params["bfc"]
    y = ln(o + x, params["ln1_g"], params["ln1_b"])
    h1 = jnp.maximum(y @ params["w1"] + params["b1"], 0.0)
    h2 = h1 @ params["w2"] + params["b2"]
    return ln(h2 + y, params["ln2_g"], params["ln2_b"]), p


def init_params(key, d_model, d_inner, n_head, d_k, d_v):
    ks = jax.random.split(key, 12)
    std_qk = np.sqrt(2.0 / (d_model + d_k))
    std_v = np.sqrt(2.0 / (d_model + d_v))
    xavier = np.sqrt(2.0 / (n_head * d_v + d_model))
    f32 = jnp.float32
    return {
        # Linear weights stored already transposed: y = x @ W + b
        "wq": (jax.random.normal(ks[0], (d_model, n_head * d_k)) * std_qk).astype(f32),
        "bq": jnp.zeros((1, n_head * d_k), f32),
        "wk": (jax.random.normal(ks[1], (d_model, n_head * d_k)) * std_qk).astype(f32),
        "bk": jnp.zeros((1, n_head * d_k), f32),
        "wv": (jax.random.normal(ks[2], (d_model, n_head * d_v)) * std_v).astype(f32),
        "bv": jnp.zeros((1, n_head * d_v), f32),
        "wfc": (jax.random.normal(ks[3], (n_head * d_v, d_model)) * xavier).astype(f32),
        "bfc": jnp.zeros((1, d_model), f32),
        "ln1_g": jnp.ones((1, d_model), f32),
        "ln1_b": jnp.zeros((1, d_model), f32),
        # Conv1d(d_model, d_inner, 1) -> pointwise matmul weight (d_model, d_inner)
        "w1": (jax.random.normal(ks[4], (d_model, d_inner)) * 0.05).astype(f32),
        "b1": jnp.zeros((1, d_inner), f32),
        "w2": (jax.random.normal(ks[5], (d_inner, d_model)) * 0.05).astype(f32),
        "b2": jnp.zeros((1, d_model), f32),
        "ln2_g": jnp.ones((1, d_model), f32),
        "ln2_b": jnp.zeros((1, d_model), f32),
    }


if __name__ == "__main__":
    B, L = 2, 8
    d_model, d_inner = 32, 64
    n_head, d_k, d_v = 4, 8, 8

    key = jax.random.PRNGKey(0)
    kx, kp = jax.random.split(key)
    x = jax.random.normal(kx, (B, L, d_model), dtype=jnp.float32)
    params = init_params(kp, d_model, d_inner, n_head, d_k, d_v)

    # Default path: output + attention probabilities (attn in bf16).
    out, attn = encoder_layer_forward(x, params, n_head=n_head, d_k=d_k, d_v=d_v)
    # No-attn path (skips the attention-probability writeback entirely).
    out_noattn = encoder_layer_forward(x, params, n_head=n_head, d_k=d_k, d_v=d_v,
                                       return_attn=False)
    jax.block_until_ready((out, attn, out_noattn))

    assert out.shape == (B, L, d_model)
    assert out_noattn.shape == (B, L, d_model)
    assert attn.shape == (n_head * B, L, L)

    # Loose numeric check vs. pure-JAX reference (kernel uses bf16 matmul inputs,
    # bf16 attention export, approx-reciprocal softmax denominator).
    ref_out, ref_attn = encoder_layer_reference(x, params, n_head=n_head, d_k=d_k, d_v=d_v)
    assert float(jnp.max(jnp.abs(out - ref_out))) < 1e-1
    assert float(jnp.max(jnp.abs(out_noattn - ref_out))) < 1e-1
    assert float(jnp.max(jnp.abs(attn.astype(jnp.float32) - ref_attn))) < 5e-2

    print("KERNEL_OK")
</pallas_src>

<mosaic_0001>
module attributes {stable_mosaic.version = 11 : i64} {
  func.func @_encoder_layer_kernel(%arg0: i32, %arg1: i32, %arg2: memref<1x8x32xf32, #tpu.memory_space<vmem>>, %arg3: memref<1x8x32xf32, #tpu.memory_space<vmem>>, %arg4: memref<32x32xbf16, #tpu.memory_space<vmem>>, %arg5: memref<1x32xf32, #tpu.memory_space<vmem>>, %arg6: memref<32x32xbf16, #tpu.memory_space<vmem>>, %arg7: memref<1x32xf32, #tpu.memory_space<vmem>>, %arg8: memref<32x32xbf16, #tpu.memory_space<vmem>>, %arg9: memref<1x32xf32, #tpu.memory_space<vmem>>, %arg10: memref<32x32xbf16, #tpu.memory_space<vmem>>, %arg11: memref<1x32xf32, #tpu.memory_space<vmem>>, %arg12: memref<1x32xf32, #tpu.memory_space<vmem>>, %arg13: memref<1x32xf32, #tpu.memory_space<vmem>>, %arg14: memref<32x64xbf16, #tpu.memory_space<vmem>>, %arg15: memref<1x64xf32, #tpu.memory_space<vmem>>, %arg16: memref<64x32xbf16, #tpu.memory_space<vmem>>, %arg17: memref<1x32xf32, #tpu.memory_space<vmem>>, %arg18: memref<1x32xf32, #tpu.memory_space<vmem>>, %arg19: memref<1x32xf32, #tpu.memory_space<vmem>>, %arg20: memref<1x8x32xf32, #tpu.memory_space<vmem>>, %arg21: memref<4x1x8x8xbf16, #tpu.memory_space<vmem>>, %arg22: memref<4x8x8xbf16, #tpu.memory_space<vmem>>, %arg23: memref<4x8x8xbf16, #tpu.memory_space<vmem>>) attributes {dimension_semantics = [#tpu.dimension_semantics<parallel>, #tpu.dimension_semantics<arbitrary>], iteration_bounds = array<i64: 2, 1>, scalar_prefetch = 0 : i64, scratch_operands = 2 : i64, tpu.core_type = #tpu.core_type<tc>, window_params = [{transform_indices = @transform_0, window_bounds = array<i64: 1, 8, 32>}, {transform_indices = @transform_1, window_bounds = array<i64: 1, 8, 32>}, {pipeline_mode = #tpu.pipeline_mode<synchronous>, transform_indices = @transform_2, window_bounds = array<i64: 32, 32>}, {pipeline_mode = #tpu.pipeline_mode<synchronous>, transform_indices = @transform_3, window_bounds = array<i64: 1, 32>}, {pipeline_mode = #tpu.pipeline_mode<synchronous>, transform_indices = @transform_4, window_bounds = array<i64: 32, 32>}, {pipeline_mode = #tpu.pipeline_mode<synchronous>, transform_indices = @transform_5, window_bounds = array<i64: 1, 32>}, {pipeline_mode = #tpu.pipeline_mode<synchronous>, transform_indices = @transform_6, window_bounds = array<i64: 32, 32>}, {pipeline_mode = #tpu.pipeline_mode<synchronous>, transform_indices = @transform_7, window_bounds = array<i64: 1, 32>}, {pipeline_mode = #tpu.pipeline_mode<synchronous>, transform_indices = @transform_8, window_bounds = array<i64: 32, 32>}, {pipeline_mode = #tpu.pipeline_mode<synchronous>, transform_indices = @transform_9, window_bounds = array<i64: 1, 32>}, {pipeline_mode = #tpu.pipeline_mode<synchronous>, transform_indices = @transform_10, window_bounds = array<i64: 1, 32>}, {pipeline_mode = #tpu.pipeline_mode<synchronous>, transform_indices = @transform_11, window_bounds = array<i64: 1, 32>}, {pipeline_mode = #tpu.pipeline_mode<synchronous>, transform_indices = @transform_12, window_bounds = array<i64: 32, 64>}, {pipeline_mode = #tpu.pipeline_mode<synchronous>, transform_indices = @transform_13, window_bounds = array<i64: 1, 64>}, {pipeline_mode = #tpu.pipeline_mode<synchronous>, transform_indices = @transform_14, window_bounds = array<i64: 64, 32>}, {pipeline_mode = #tpu.pipeline_mode<synchronous>, transform_indices = @transform_15, window_bounds = array<i64: 1, 32>}, {pipeline_mode = #tpu.pipeline_mode<synchronous>, transform_indices = @transform_16, window_bounds = array<i64: 1, 32>}, {pipeline_mode = #tpu.pipeline_mode<synchronous>, transform_indices = @transform_17, window_bounds = array<i64: 1, 32>}, {transform_indices = @transform_18, window_bounds = array<i64: 1, 8, 32>}, {transform_indices = @transform_19, window_bounds = array<i64: 4, 1, 8, 8>}]} {
    %c0_i32 = arith.constant 0 : i32
    %0 = arith.cmpi eq, %arg1, %c0_i32 : i32
    %1 = arith.extui %0 : i1 to i32
    %c0_i32_0 = arith.constant 0 : i32
    %2 = arith.cmpi ne, %1, %c0_i32_0 : i32
    scf.if %2 {
      %c0_59 = arith.constant 0 : index
      %c0_60 = arith.constant 0 : index
      %c0_61 = arith.constant 0 : index
      %119 = vector.load %arg2[%c0_59, %c0_60, %c0_61] : memref<1x8x32xf32, #tpu.memory_space<vmem>>, vector<1x8x32xf32>
      %120 = vector.shape_cast %119 : vector<1x8x32xf32> to vector<8x32xf32>
      %121 = arith.truncf %120 : vector<8x32xf32> to vector<8x32xbf16>
      %c0_62 = arith.constant 0 : index
      %c0_63 = arith.constant 0 : index
      %122 = vector.load %arg6[%c0_62, %c0_63] : memref<32x32xbf16, #tpu.memory_space<vmem>>, vector<32x32xbf16>
      %cst_64 = arith.constant dense<0.000000e+00> : vector<8x32xf32>
      %123 = tpu.matmul %121, %122, %cst_64 {dimension_numbers = #tpu.dot_dimension_numbers<[1], [0], [0], [1], [0, 0, 1, 1], [], []>} : vector<8x32xbf16>, vector<32x32xbf16>, vector<8x32xf32> -> vector<8x32xf32>
      %c0_65 = arith.constant 0 : index
      %c0_66 = arith.constant 0 : index
      %124 = vector.load %arg7[%c0_65, %c0_66] : memref<1x32xf32, #tpu.memory_space<vmem>>, vector<1x32xf32>
      %125 = vector.broadcast %124 : vector<1x32xf32> to vector<8x32xf32>
      %126 = arith.addf %123, %125 : vector<8x32xf32>
      %c0_67 = arith.constant 0 : index
      %c0_68 = arith.constant 0 : index
      %127 = vector.load %arg8[%c0_67, %c0_68] : memref<32x32xbf16, #tpu.memory_space<vmem>>, vector<32x32xbf16>
      %cst_69 = arith.constant dense<0.000000e+00> : vector<8x32xf32>
      %128 = tpu.matmul %121, %127, %cst_69 {dimension_numbers = #tpu.dot_dimension_numbers<[1], [0], [0], [1], [0, 0, 1, 1], [], []>} : vector<8x32xbf16>, vector<32x32xbf16>, vector<8x32xf32> -> vector<8x32xf32>
      %c0_70 = arith.constant 0 : index
      %c0_71 = arith.constant 0 : index
      %129 = vector.load %arg9[%c0_70, %c0_71] : memref<1x32xf32, #tpu.memory_space<vmem>>, vector<1x32xf32>
      %130 = vector.broadcast %129 : vector<1x32xf32> to vector<8x32xf32>
      %131 = arith.addf %128, %130 : vector<8x32xf32>
      %132 = vector.shape_cast %126 : vector<8x32xf32> to vector<1x8x32xf32>
      %133 = vector.extract_strided_slice %132 {offsets = [0, 0, 0], sizes = [1, 8, 8], strides = [1, 1, 1]} : vector<1x8x32xf32> to vector<1x8x8xf32>
      %134 = vector.extract_strided_slice %132 {offsets = [0, 0, 8], sizes = [1, 8, 8], strides = [1, 1, 1]} : vector<1x8x32xf32> to vector<1x8x8xf32>
      %135 = vector.extract_strided_slice %132 {offsets = [0, 0, 16], sizes = [1, 8, 8], strides = [1, 1, 1]} : vector<1x8x32xf32> to vector<1x8x8xf32>
      %136 = vector.extract_strided_slice %132 {offsets = [0, 0, 24], sizes = [1, 8, 8], strides = [1, 1, 1]} : vector<1x8x32xf32> to vector<1x8x8xf32>
      %137 = tpu.concatenate %133, %134, %135, %136 in 0 : vector<1x8x8xf32>, vector<1x8x8xf32>, vector<1x8x8xf32>, vector<1x8x8xf32> -> vector<4x8x8xf32>
      %138 = arith.truncf %137 : vector<4x8x8xf32> to vector<4x8x8xbf16>
      %c0_72 = arith.constant 0 : index
      %c0_73 = arith.constant 0 : index
      %c0_74 = arith.constant 0 : index
      %139 = vector.load %arg22[%c0_72, %c0_73, %c0_74] : memref<4x8x8xbf16, #tpu.memory_space<vmem>>, vector<4x8x8xbf16>
      tpu.vector_store %arg22[%c0_72, %c0_73, %c0_74], %138 {strides = array<i32>} : memref<4x8x8xbf16, #tpu.memory_space<vmem>>, vector<4x8x8xbf16>,
      %140 = vector.shape_cast %131 : vector<8x32xf32> to vector<1x8x32xf32>
      %141 = vector.extract_strided_slice %140 {offsets = [0, 0, 0], sizes = [1, 8, 8], strides = [1, 1, 1]} : vector<1x8x32xf32> to vector<1x8x8xf32>
      %142 = vector.extract_strided_slice %140 {offsets = [0, 0, 8], sizes = [1, 8, 8], strides = [1, 1, 1]} : vector<1x8x32xf32> to vector<1x8x8xf32>
      %143 = vector.extract_strided_slice %140 {offsets = [0, 0, 16], sizes = [1, 8, 8], strides = [1, 1, 1]} : vector<1x8x32xf32> to vector<1x8x8xf32>
      %144 = vector.extract_strided_slice %140 {offsets = [0, 0, 24], sizes = [1, 8, 8], strides = [1, 1, 1]} : vector<1x8x32xf32> to vector<1x8x8xf32>
      %145 = tpu.concatenate %141, %142, %143, %144 in 0 : vector<1x8x8xf32>, vector<1x8x8xf32>, vector<1x8x8xf32>, vector<1x8x8xf32> -> vector<4x8x8xf32>
      %146 = arith.truncf %145 : vector<4x8x8xf32> to vector<4x8x8xbf16>
      %c0_75 = arith.constant 0 : index
      %c0_76 = arith.constant 0 : index
      %c0_77 = arith.constant 0 : index
      %147 = vector.load %arg23[%c0_75, %c0_76, %c0_77] : memref<4x8x8xbf16, #tpu.memory_space<vmem>>, vector<4x8x8xbf16>
      tpu.vector_store %arg23[%c0_75, %c0_76, %c0_77], %146 {strides = array<i32>} : memref<4x8x8xbf16, #tpu.memory_space<vmem>>, vector<4x8x8xbf16>,
    } else {
    }
    %c0 = arith.constant 0 : index
    %c0_1 = arith.constant 0 : index
    %c0_2 = arith.constant 0 : index
    %3 = vector.load %arg3[%c0, %c0_1, %c0_2] : memref<1x8x32xf32, #tpu.memory_space<vmem>>, vector<1x8x32xf32>
    %4 = vector.shape_cast %3 : vector<1x8x32xf32> to vector<8x32xf32>
    %5 = arith.truncf %4 : vector<8x32xf32> to vector<8x32xbf16>
    %c0_3 = arith.constant 0 : index
    %c0_4 = arith.constant 0 : index
    %6 = vector.load %arg4[%c0_3, %c0_4] : memref<32x32xbf16, #tpu.memory_space<vmem>>, vector<32x32xbf16>
    %cst = arith.constant dense<0.000000e+00> : vector<8x32xf32>
    %7 = tpu.matmul %5, %6, %cst {dimension_numbers = #tpu.dot_dimension_numbers<[1], [0], [0], [1], [0, 0, 1, 1], [], []>} : vector<8x32xbf16>, vector<32x32xbf16>, vector<8x32xf32> -> vector<8x32xf32>
    %c0_5 = arith.constant 0 : index
    %c0_6 = arith.constant 0 : index
    %8 = vector.load %arg5[%c0_5, %c0_6] : memref<1x32xf32, #tpu.memory_space<vmem>>, vector<1x32xf32>
    %9 = vector.broadcast %8 : vector<1x32xf32> to vector<8x32xf32>
    %10 = arith.addf %7, %9 : vector<8x32xf32>
    %cst_7 = arith.constant 0.353553385 : f32
    %11 = vector.broadcast %cst_7 : f32 to vector<8x32xf32>
    %12 = arith.mulf %10, %11 : vector<8x32xf32>
    %13 = vector.shape_cast %12 : vector<8x32xf32> to vector<1x8x32xf32>
    %14 = vector.extract_strided_slice %13 {offsets = [0, 0, 0], sizes = [1, 8, 8], strides = [1, 1, 1]} : vector<1x8x32xf32> to vector<1x8x8xf32>
    %15 = vector.extract_strided_slice %13 {offsets = [0, 0, 8], sizes = [1, 8, 8], strides = [1, 1, 1]} : vector<1x8x32xf32> to vector<1x8x8xf32>
    %16 = vector.extract_strided_slice %13 {offsets = [0, 0, 16], sizes = [1, 8, 8], strides = [1, 1, 1]} : vector<1x8x32xf32> to vector<1x8x8xf32>
    %17 = vector.extract_strided_slice %13 {offsets = [0, 0, 24], sizes = [1, 8, 8], strides = [1, 1, 1]} : vector<1x8x32xf32> to vector<1x8x8xf32>
    %18 = tpu.concatenate %14, %15, %16, %17 in 0 : vector<1x8x8xf32>, vector<1x8x8xf32>, vector<1x8x8xf32>, vector<1x8x8xf32> -> vector<4x8x8xf32>
    %19 = arith.truncf %18 : vector<4x8x8xf32> to vector<4x8x8xbf16>
    %c0_8 = arith.constant 0 : index
    %c0_9 = arith.constant 0 : index
    %c0_10 = arith.constant 0 : index
    %20 = vector.load %arg22[%c0_8, %c0_9, %c0_10] : memref<4x8x8xbf16, #tpu.memory_space<vmem>>, vector<4x8x8xbf16>
    "tpu.trace_start"() <{level = 10 : i32, message = "gqd,gkd->gqk"}> : () -> ()
    %cst_11 = arith.constant dense<0.000000e+00> : vector<4x8x8xf32>
    %21 = tpu.matmul %19, %20, %cst_11 {dimension_numbers = #tpu.dot_dimension_numbers<[2], [2], [1], [1], [0, 0, 0, 1, 1, 1], [0], [0]>} : vector<4x8x8xbf16>, vector<4x8x8xbf16>, vector<4x8x8xf32> -> vector<4x8x8xf32>
    "tpu.trace_stop"() : () -> ()
    %cst_12 = arith.constant dense<0xFF800000> : vector<4x8xf32>
    %22 = vector.multi_reduction <maximumf>, %21, %cst_12 [2] : vector<4x8x8xf32> to vector<4x8xf32>
    %23 = vector.shape_cast %22 : vector<4x8xf32> to vector<4x8x1xf32>
    %24 = vector.broadcast %23 : vector<4x8x1xf32> to vector<4x8x8xf32>
    %25 = arith.subf %21, %24 : vector<4x8x8xf32>
    %26 = math.exp %25 : vector<4x8x8xf32>
    %cst_13 = arith.constant dense<0.000000e+00> : vector<4x8xf32>
    %27 = vector.multi_reduction <add>, %26, %cst_13 [2] : vector<4x8x8xf32> to vector<4x8xf32>
    %28 = vector.shape_cast %27 : vector<4x8xf32> to vector<4x8x1xf32>
    %29 = tpu.reciprocal %28 {approx = true} : vector<4x8x1xf32> -> vector<4x8x1xf32>
    %30 = vector.broadcast %29 : vector<4x8x1xf32> to vector<4x8x8xf32>
    %31 = arith.mulf %26, %30 : vector<4x8x8xf32>
    %32 = vector.shape_cast %31 : vector<4x8x8xf32> to vector<4x1x8x8xf32>
    %33 = arith.truncf %32 : vector<4x1x8x8xf32> to vector<4x1x8x8xbf16>
    %c0_14 = arith.constant 0 : index
    %c0_15 = arith.constant 0 : index
    %c0_16 = arith.constant 0 : index
    %c0_17 = arith.constant 0 : index
    %34 = vector.load %arg21[%c0_14, %c0_15, %c0_16, %c0_17] : memref<4x1x8x8xbf16, #tpu.memory_space<vmem>>, vector<4x1x8x8xbf16>
    tpu.vector_store %arg21[%c0_14, %c0_15, %c0_16, %c0_17], %33 {strides = array<i32>} : memref<4x1x8x8xbf16, #tpu.memory_space<vmem>>, vector<4x1x8x8xbf16>,
    %35 = arith.truncf %31 : vector<4x8x8xf32> to vector<4x8x8xbf16>
    %c0_18 = arith.constant 0 : index
    %c0_19 = arith.constant 0 : index
    %c0_20 = arith.constant 0 : index
    %36 = vector.load %arg23[%c0_18, %c0_19, %c0_20] : memref<4x8x8xbf16, #tpu.memory_space<vmem>>, vector<4x8x8xbf16>
    "tpu.trace_start"() <{level = 10 : i32, message = "gqk,gkd->gqd"}> : () -> ()
    %cst_21 = arith.constant dense<0.000000e+00> : vector<4x8x8xf32>
    %37 = tpu.matmul %35, %36, %cst_21 {dimension_numbers = #tpu.dot_dimension_numbers<[2], [1], [1], [2], [0, 0, 0, 1, 1, 2], [0], [0]>} : vector<4x8x8xbf16>, vector<4x8x8xbf16>, vector<4x8x8xf32> -> vector<4x8x8xf32>
    "tpu.trace_stop"() : () -> ()
    %38 = vector.extract_strided_slice %37 {offsets = [0, 0, 0], sizes = [1, 8, 8], strides = [1, 1, 1]} : vector<4x8x8xf32> to vector<1x8x8xf32>
    %39 = vector.shape_cast %38 : vector<1x8x8xf32> to vector<8x8xf32>
    %40 = vector.extract_strided_slice %37 {offsets = [1, 0, 0], sizes = [1, 8, 8], strides = [1, 1, 1]} : vector<4x8x8xf32> to vector<1x8x8xf32>
    %41 = vector.shape_cast %40 : vector<1x8x8xf32> to vector<8x8xf32>
    %42 = vector.extract_strided_slice %37 {offsets = [2, 0, 0], sizes = [1, 8, 8], strides = [1, 1, 1]} : vector<4x8x8xf32> to vector<1x8x8xf32>
    %43 = vector.shape_cast %42 : vector<1x8x8xf32> to vector<8x8xf32>
    %44 = vector.extract_strided_slice %37 {offsets = [3, 0, 0], sizes = [1, 8, 8], strides = [1, 1, 1]} : vector<4x8x8xf32> to vector<1x8x8xf32>
    %45 = vector.shape_cast %44 : vector<1x8x8xf32> to vector<8x8xf32>
    %46 = tpu.concatenate %39, %41, %43, %45 in 1 : vector<8x8xf32>, vector<8x8xf32>, vector<8x8xf32>, vector<8x8xf32> -> vector<8x32xf32>
    %47 = arith.truncf %46 : vector<8x32xf32> to vector<8x32xbf16>
    %c0_22 = arith.constant 0 : index
    %c0_23 = arith.constant 0 : index
    %48 = vector.load %arg10[%c0_22, %c0_23] : memref<32x32xbf16, #tpu.memory_space<vmem>>, vector<32x32xbf16>
    %cst_24 = arith.constant dense<0.000000e+00> : vector<8x32xf32>
    %49 = tpu.matmul %47, %48, %cst_24 {dimension_numbers = #tpu.dot_dimension_numbers<[1], [0], [0], [1], [0, 0, 1, 1], [], []>} : vector<8x32xbf16>, vector<32x32xbf16>, vector<8x32xf32> -> vector<8x32xf32>
    %c0_25 = arith.constant 0 : index
    %c0_26 = arith.constant 0 : index
    %50 = vector.load %arg11[%c0_25, %c0_26] : memref<1x32xf32, #tpu.memory_space<vmem>>, vector<1x32xf32>
    %51 = vector.broadcast %50 : vector<1x32xf32> to vector<8x32xf32>
    %52 = arith.addf %49, %51 : vector<8x32xf32>
    %53 = arith.addf %52, %4 : vector<8x32xf32>
    %c0_27 = arith.constant 0 : index
    %c0_28 = arith.constant 0 : index
    %54 = vector.load %arg12[%c0_27, %c0_28] : memref<1x32xf32, #tpu.memory_space<vmem>>, vector<1x32xf32>
    %c0_29 = arith.constant 0 : index
    %c0_30 = arith.constant 0 : index
    %55 = vector.load %arg13[%c0_29, %c0_30] : memref<1x32xf32, #tpu.memory_space<vmem>>, vector<1x32xf32>
    %cst_31 = arith.constant dense<0.000000e+00> : vector<8xf32>
    %56 = vector.multi_reduction <add>, %53, %cst_31 [1] : vector<8x32xf32> to vector<8xf32>
    %57 = vector.shape_cast %56 : vector<8xf32> to vector<8x1xf32>
    %cst_32 = arith.constant 3.200000e+01 : f32
    %58 = vector.broadcast %cst_32 : f32 to vector<8x1xf32>
    %59 = arith.divf %57, %58 : vector<8x1xf32>
    %60 = vector.broadcast %59 : vector<8x1xf32> to vector<8x32xf32>
    %61 = arith.subf %53, %60 : vector<8x32xf32>
    %62 = arith.mulf %61, %61 : vector<8x32xf32>
    %cst_33 = arith.constant dense<0.000000e+00> : vector<8xf32>
    %63 = vector.multi_reduction <add>, %62, %cst_33 [1] : vector<8x32xf32> to vector<8xf32>
    %64 = vector.shape_cast %63 : vector<8xf32> to vector<8x1xf32>
    %cst_34 = arith.constant 3.200000e+01 : f32
    %65 = vector.broadcast %cst_34 : f32 to vector<8x1xf32>
    %66 = arith.divf %64, %65 : vector<8x1xf32>
    %67 = vector.broadcast %59 : vector<8x1xf32> to vector<8x32xf32>
    %68 = arith.subf %53, %67 : vector<8x32xf32>
    %cst_35 = arith.constant 9.99999974E-6 : f32
    %69 = vector.broadcast %cst_35 : f32 to vector<8x1xf32>
    %70 = arith.addf %66, %69 : vector<8x1xf32>
    %71 = math.rsqrt %70 : vector<8x1xf32>
    %72 = vector.broadcast %71 : vector<8x1xf32> to vector<8x32xf32>
    %73 = arith.mulf %68, %72 : vector<8x32xf32>
    %74 = vector.broadcast %54 : vector<1x32xf32> to vector<8x32xf32>
    %75 = arith.mulf %73, %74 : vector<8x32xf32>
    %76 = vector.broadcast %55 : vector<1x32xf32> to vector<8x32xf32>
    %77 = arith.addf %75, %76 : vector<8x32xf32>
    %78 = arith.truncf %77 : vector<8x32xf32> to vector<8x32xbf16>
    %c0_36 = arith.constant 0 : index
    %c0_37 = arith.constant 0 : index
    %79 = vector.load %arg14[%c0_36, %c0_37] : memref<32x64xbf16, #tpu.memory_space<vmem>>, vector<32x64xbf16>
    %cst_38 = arith.constant dense<0.000000e+00> : vector<8x64xf32>
    %80 = tpu.matmul %78, %79, %cst_38 {dimension_numbers = #tpu.dot_dimension_numbers<[1], [0], [0], [1], [0, 0, 1, 1], [], []>} : vector<8x32xbf16>, vector<32x64xbf16>, vector<8x64xf32> -> vector<8x64xf32>
    %c0_39 = arith.constant 0 : index
    %c0_40 = arith.constant 0 : index
    %81 = vector.load %arg15[%c0_39, %c0_40] : memref<1x64xf32, #tpu.memory_space<vmem>>, vector<1x64xf32>
    %82 = vector.broadcast %81 : vector<1x64xf32> to vector<8x64xf32>
    %83 = arith.addf %80, %82 : vector<8x64xf32>
    %cst_41 = arith.constant 0.000000e+00 : f32
    %84 = vector.broadcast %cst_41 : f32 to vector<8x64xf32>
    %85 = arith.maximumf %83, %84 : vector<8x64xf32>
    %86 = arith.truncf %85 : vector<8x64xf32> to vector<8x64xbf16>
    %c0_42 = arith.constant 0 : index
    %c0_43 = arith.constant 0 : index
    %87 = vector.load %arg16[%c0_42, %c0_43] : memref<64x32xbf16, #tpu.memory_space<vmem>>, vector<64x32xbf16>
    %cst_44 = arith.constant dense<0.000000e+00> : vector<8x32xf32>
    %88 = tpu.matmul %86, %87, %cst_44 {dimension_numbers = #tpu.dot_dimension_numbers<[1], [0], [0], [1], [0, 0, 1, 1], [], []>} : vector<8x64xbf16>, vector<64x32xbf16>, vector<8x32xf32> -> vector<8x32xf32>
    %c0_45 = arith.constant 0 : index
    %c0_46 = arith.constant 0 : index
    %89 = vector.load %arg17[%c0_45, %c0_46] : memref<1x32xf32, #tpu.memory_space<vmem>>, vector<1x32xf32>
    %90 = vector.broadcast %89 : vector<1x32xf32> to vector<8x32xf32>
    %91 = arith.addf %88, %90 : vector<8x32xf32>
    %92 = arith.addf %91, %77 : vector<8x32xf32>
    %c0_47 = arith.constant 0 : index
    %c0_48 = arith.constant 0 : index
    %93 = vector.load %arg18[%c0_47, %c0_48] : memref<1x32xf32, #tpu.memory_space<vmem>>, vector<1x32xf32>
    %c0_49 = arith.constant 0 : index
    %c0_50 = arith.constant 0 : index
    %94 = vector.load %arg19[%c0_49, %c0_50] : memref<1x32xf32, #tpu.memory_space<vmem>>, vector<1x32xf32>
    %cst_51 = arith.constant dense<0.000000e+00> : vector<8xf32>
    %95 = vector.multi_reduction <add>, %92, %cst_51 [1] : vector<8x32xf32> to vector<8xf32>
    %96 = vector.shape_cast %95 : vector<8xf32> to vector<8x1xf32>
    %cst_52 = arith.constant 3.200000e+01 : f32
    %97 = vector.broadcast %cst_52 : f32 to vector<8x1xf32>
    %98 = arith.divf %96, %97 : vector<8x1xf32>
    %99 = vector.broadcast %98 : vector<8x1xf32> to vector<8x32xf32>
    %100 = arith.subf %92, %99 : vector<8x32xf32>
    %101 = arith.mulf %100, %100 : vector<8x32xf32>
    %cst_53 = arith.constant dense<0.000000e+00> : vector<8xf32>
    %102 = vector.multi_reduction <add>, %101, %cst_53 [1] : vector<8x32xf32> to vector<8xf32>
    %103 = vector.shape_cast %102 : vector<8xf32> to vector<8x1xf32>
    %cst_54 = arith.constant 3.200000e+01 : f32
    %104 = vector.broadcast %cst_54 : f32 to vector<8x1xf32>
    %105 = arith.divf %103, %104 : vector<8x1xf32>
    %106 = vector.broadcast %98 : vector<8x1xf32> to vector<8x32xf32>
    %107 = arith.subf %92, %106 : vector<8x32xf32>
    %cst_55 = arith.constant 9.99999974E-6 : f32
    %108 = vector.broadcast %cst_55 : f32 to vector<8x1xf32>
    %109 = arith.addf %105, %108 : vector<8x1xf32>
    %110 = math.rsqrt %109 : vector<8x1xf32>
    %111 = vector.broadcast %110 : vector<8x1xf32> to vector<8x32xf32>
    %112 = arith.mulf %107, %111 : vector<8x32xf32>
    %113 = vector.broadcast %93 : vector<1x32xf32> to vector<8x32xf32>
    %114 = arith.mulf %112, %113 : vector<8x32xf32>
    %115 = vector.broadcast %94 : vector<1x32xf32> to vector<8x32xf32>
    %116 = arith.addf %114, %115 : vector<8x32xf32>
    %117 = vector.shape_cast %116 : vector<8x32xf32> to vector<1x8x32xf32>
    %c0_56 = arith.constant 0 : index
    %c0_57 = arith.constant 0 : index
    %c0_58 = arith.constant 0 : index
    %118 = vector.load %arg20[%c0_56, %c0_57, %c0_58] : memref<1x8x32xf32, #tpu.memory_space<vmem>>, vector<1x8x32xf32>
    tpu.vector_store %arg20[%c0_56, %c0_57, %c0_58], %117 {strides = array<i32>} : memref<1x8x32xf32, #tpu.memory_space<vmem>>, vector<1x8x32xf32>,
    return
  }
  func.func @transform_0(%arg0: i32, %arg1: i32) -> (i32, i32, i32) {
    %c0_i32 = arith.constant 0 : i32
    %c0_i32_0 = arith.constant 0 : i32
    %c0_i32_1 = arith.constant 0 : i32
    return %arg0, %c0_i32, %c0_i32_0 : i32, i32, i32
  }
  func.func @transform_1(%arg0: i32, %arg1: i32) -> (i32, i32, i32) {
    %c0_i32 = arith.constant 0 : i32
    %c0_i32_0 = arith.constant 0 : i32
    return %arg0, %arg1, %c0_i32 : i32, i32, i32
  }
  func.func @transform_2(%arg0: i32, %arg1: i32) -> (i32, i32) {
    %c0_i32 = arith.constant 0 : i32
    %c0_i32_0 = arith.constant 0 : i32
    %c0_i32_1 = arith.constant 0 : i32
    return %c0_i32, %c0_i32_0 : i32, i32
  }
  func.func @transform_3(%arg0: i32, %arg1: i32) -> (i32, i32) {
    %c0_i32 = arith.constant 0 : i32
    %c0_i32_0 = arith.constant 0 : i32
    %c0_i32_1 = arith.constant 0 : i32
    return %c0_i32, %c0_i32_0 : i32, i32
  }
  func.func @transform_4(%arg0: i32, %arg1: i32) -> (i32, i32) {
    %c0_i32 = arith.constant 0 : i32
    %c0_i32_0 = arith.constant 0 : i32
    %c0_i32_1 = arith.constant 0 : i32
    return %c0_i32, %c0_i32_0 : i32, i32
  }
  func.func @transform_5(%arg0: i32, %arg1: i32) -> (i32, i32) {
    %c0_i32 = arith.constant 0 : i32
    %c0_i32_0 = arith.constant 0 : i32
    %c0_i32_1 = arith.constant 0 : i32
    return %c0_i32, %c0_i32_0 : i32, i32
  }
  func.func @transform_6(%arg0: i32, %arg1: i32) -> (i32, i32) {
    %c0_i32 = arith.constant 0 : i32
    %c0_i32_0 = arith.constant 0 : i32
    %c0_i32_1 = arith.constant 0 : i32
    return %c0_i32, %c0_i32_0 : i32, i32
  }
  func.func @transform_7(%arg0: i32, %arg1: i32) -> (i32, i32) {
    %c0_i32 = arith.constant 0 : i32
    %c0_i32_0 = arith.constant 0 : i32
    %c0_i32_1 = arith.constant 0 : i32
    return %c0_i32, %c0_i32_0 : i32, i32
  }
  func.func @transform_8(%arg0: i32, %arg1: i32) -> (i32, i32) {
    %c0_i32 = arith.constant 0 : i32
    %c0_i32_0 = arith.constant 0 : i32
    %c0_i32_1 = arith.constant 0 : i32
    return %c0_i32, %c0_i32_0 : i32, i32
  }
  func.func @transform_9(%arg0: i32, %arg1: i32) -> (i32, i32) {
    %c0_i32 = arith.constant 0 : i32
    %c0_i32_0 = arith.constant 0 : i32
    %c0_i32_1 = arith.constant 0 : i32
    return %c0_i32, %c0_i32_0 : i32, i32
  }
  func.func @transform_10(%arg0: i32, %arg1: i32) -> (i32, i32) {
    %c0_i32 = arith.constant 0 : i32
    %c0_i32_0 = arith.constant 0 : i32
    %c0_i32_1 = arith.constant 0 : i32
    return %c0_i32, %c0_i32_0 : i32, i32
  }
  func.func @transform_11(%arg0: i32, %arg1: i32) -> (i32, i32) {
    %c0_i32 = arith.constant 0 : i32
    %c0_i32_0 = arith.constant 0 : i32
    %c0_i32_1 = arith.constant 0 : i32
    return %c0_i32, %c0_i32_0 : i32, i32
  }
  func.func @transform_12(%arg0: i32, %arg1: i32) -> (i32, i32) {
    %c0_i32 = arith.constant 0 : i32
    %c0_i32_0 = arith.constant 0 : i32
    %c0_i32_1 = arith.constant 0 : i32
    return %c0_i32, %c0_i32_0 : i32, i32
  }
  func.func @transform_13(%arg0: i32, %arg1: i32) -> (i32, i32) {
    %c0_i32 = arith.constant 0 : i32
    %c0_i32_0 = arith.constant 0 : i32
    %c0_i32_1 = arith.constant 0 : i32
    return %c0_i32, %c0_i32_0 : i32, i32
  }
  func.func @transform_14(%arg0: i32, %arg1: i32) -> (i32, i32) {
    %c0_i32 = arith.constant 0 : i32
    %c0_i32_0 = arith.constant 0 : i32
    %c0_i32_1 = arith.constant 0 : i32
    return %c0_i32, %c0_i32_0 : i32, i32
  }
  func.func @transform_15(%arg0: i32, %arg1: i32) -> (i32, i32) {
    %c0_i32 = arith.constant 0 : i32
    %c0_i32_0 = arith.constant 0 : i32
    %c0_i32_1 = arith.constant 0 : i32
    return %c0_i32, %c0_i32_0 : i32, i32
  }
  func.func @transform_16(%arg0: i32, %arg1: i32) -> (i32, i32) {
    %c0_i32 = arith.constant 0 : i32
    %c0_i32_0 = arith.constant 0 : i32
    %c0_i32_1 = arith.constant 0 : i32
    return %c0_i32, %c0_i32_0 : i32, i32
  }
  func.func @transform_17(%arg0: i32, %arg1: i32) -> (i32, i32) {
    %c0_i32 = arith.constant 0 : i32
    %c0_i32_0 = arith.constant 0 : i32
    %c0_i32_1 = arith.constant 0 : i32
    return %c0_i32, %c0_i32_0 : i32, i32
  }
  func.func @transform_18(%arg0: i32, %arg1: i32) -> (i32, i32, i32) {
    %c0_i32 = arith.constant 0 : i32
    %c0_i32_0 = arith.constant 0 : i32
    return %arg0, %arg1, %c0_i32 : i32, i32, i32
  }
  func.func @transform_19(%arg0: i32, %arg1: i32) -> (i32, i32, i32, i32) {
    %c0_i32 = arith.constant 0 : i32
    %c0_i32_0 = arith.constant 0 : i32
    %c0_i32_1 = arith.constant 0 : i32
    return %c0_i32, %arg0, %arg1, %c0_i32_0 : i32, i32, i32, i32
  }
}

module attributes {stable_mosaic.version = 11 : i64} {
  func.func @_encoder_layer_kernel(%arg0: i32, %arg1: i32, %arg2: memref<1x8x32xf32, #tpu.memory_space<vmem>>, %arg3: memref<1x8x32xf32, #tpu.memory_space<vmem>>, %arg4: memref<32x32xbf16, #tpu.memory_space<vmem>>, %arg5: memref<1x32xf32, #tpu.memory_space<vmem>>, %arg6: memref<32x32xbf16, #tpu.memory_space<vmem>>, %arg7: memref<1x32xf32, #tpu.memory_space<vmem>>, %arg8: memref<32x32xbf16, #tpu.memory_space<vmem>>, %arg9: memref<1x32xf32, #tpu.memory_space<vmem>>, %arg10: memref<32x32xbf16, #tpu.memory_space<vmem>>, %arg11: memref<1x32xf32, #tpu.memory_space<vmem>>, %arg12: memref<1x32xf32, #tpu.memory_space<vmem>>, %arg13: memref<1x32xf32, #tpu.memory_space<vmem>>, %arg14: memref<32x64xbf16, #tpu.memory_space<vmem>>, %arg15: memref<1x64xf32, #tpu.memory_space<vmem>>, %arg16: memref<64x32xbf16, #tpu.memory_space<vmem>>, %arg17: memref<1x32xf32, #tpu.memory_space<vmem>>, %arg18: memref<1x32xf32, #tpu.memory_space<vmem>>, %arg19: memref<1x32xf32, #tpu.memory_space<vmem>>, %arg20: memref<1x8x32xf32, #tpu.memory_space<vmem>>, %arg21: memref<4x1x8x8xbf16, #tpu.memory_space<vmem>>, %arg22: memref<4x8x8xbf16, #tpu.memory_space<vmem>>, %arg23: memref<4x8x8xbf16, #tpu.memory_space<vmem>>) attributes {dimension_semantics = [#tpu.dimension_semantics<parallel>, #tpu.dimension_semantics<arbitrary>], iteration_bounds = array<i64: 2, 1>, scalar_prefetch = 0 : i64, scratch_operands = 2 : i64, tpu.core_type = #tpu.core_type<tc>, window_params = [{transform_indices = @transform_0, window_bounds = array<i64: 1, 8, 32>}, {transform_indices = @transform_1, window_bounds = array<i64: 1, 8, 32>}, {pipeline_mode = #tpu.pipeline_mode<synchronous>, transform_indices = @transform_2, window_bounds = array<i64: 32, 32>}, {pipeline_mode = #tpu.pipeline_mode<synchronous>, transform_indices = @transform_3, window_bounds = array<i64: 1, 32>}, {pipeline_mode = #tpu.pipeline_mode<synchronous>, transform_indices = @transform_4, window_bounds = array<i64: 32, 32>}, {pipeline_mode = #tpu.pipeline_mode<synchronous>, transform_indices = @transform_5, window_bounds = array<i64: 1, 32>}, {pipeline_mode = #tpu.pipeline_mode<synchronous>, transform_indices = @transform_6, window_bounds = array<i64: 32, 32>}, {pipeline_mode = #tpu.pipeline_mode<synchronous>, transform_indices = @transform_7, window_bounds = array<i64: 1, 32>}, {pipeline_mode = #tpu.pipeline_mode<synchronous>, transform_indices = @transform_8, window_bounds = array<i64: 32, 32>}, {pipeline_mode = #tpu.pipeline_mode<synchronous>, transform_indices = @transform_9, window_bounds = array<i64: 1, 32>}, {pipeline_mode = #tpu.pipeline_mode<synchronous>, transform_indices = @transform_10, window_bounds = array<i64: 1, 32>}, {pipeline_mode = #tpu.pipeline_mode<synchronous>, transform_indices = @transform_11, window_bounds = array<i64: 1, 32>}, {pipeline_mode = #tpu.pipeline_mode<synchronous>, transform_indices = @transform_12, window_bounds = array<i64: 32, 64>}, {pipeline_mode = #tpu.pipeline_mode<synchronous>, transform_indices = @transform_13, window_bounds = array<i64: 1, 64>}, {pipeline_mode = #tpu.pipeline_mode<synchronous>, transform_indices = @transform_14, window_bounds = array<i64: 64, 32>}, {pipeline_mode = #tpu.pipeline_mode<synchronous>, transform_indices = @transform_15, window_bounds = array<i64: 1, 32>}, {pipeline_mode = #tpu.pipeline_mode<synchronous>, transform_indices = @transform_16, window_bounds = array<i64: 1, 32>}, {pipeline_mode = #tpu.pipeline_mode<synchronous>, transform_indices = @transform_17, window_bounds = array<i64: 1, 32>}, {transform_indices = @transform_18, window_bounds = array<i64: 1, 8, 32>}, {transform_indices = @transform_19, window_bounds = array<i64: 4, 1, 8, 8>}]} {
    %c0_i32 = arith.constant 0 : i32
    %0 = arith.cmpi eq, %arg1, %c0_i32 : i32
    %1 = arith.extui %0 : i1 to i32
    %c0_i32_0 = arith.constant 0 : i32
    %2 = arith.cmpi ne, %1, %c0_i32_0 : i32
    scf.if %2 {
      %c0_59 = arith.constant 0 : index
      %c0_60 = arith.constant 0 : index
      %c0_61 = arith.constant 0 : index
      %119 = vector.load %arg2[%c0_59, %c0_60, %c0_61] : memref<1x8x32xf32, #tpu.memory_space<vmem>>, vector<1x8x32xf32>
      %120 = vector.shape_cast %119 : vector<1x8x32xf32> to vector<8x32xf32>
      %121 = arith.truncf %120 : vector<8x32xf32> to vector<8x32xbf16>
      %c0_62 = arith.constant 0 : index
      %c0_63 = arith.constant 0 : index
      %122 = vector.load %arg6[%c0_62, %c0_63] : memref<32x32xbf16, #tpu.memory_space<vmem>>, vector<32x32xbf16>
      %cst_64 = arith.constant dense<0.000000e+00> : vector<8x32xf32>
      %123 = tpu.matmul %121, %122, %cst_64 {dimension_numbers = #tpu.dot_dimension_numbers<[1], [0], [0], [1], [0, 0, 1, 1], [], []>} : vector<8x32xbf16>, vector<32x32xbf16>, vector<8x32xf32> -> vector<8x32xf32>
      %c0_65 = arith.constant 0 : index
      %c0_66 = arith.constant 0 : index
      %124 = vector.load %arg7[%c0_65, %c0_66] : memref<1x32xf32, #tpu.memory_space<vmem>>, vector<1x32xf32>
      %125 = vector.broadcast %124 : vector<1x32xf32> to vector<8x32xf32>
      %126 = arith.addf %123, %125 : vector<8x32xf32>
      %c0_67 = arith.constant 0 : index
      %c0_68 = arith.constant 0 : index
      %127 = vector.load %arg8[%c0_67, %c0_68] : memref<32x32xbf16, #tpu.memory_space<vmem>>, vector<32x32xbf16>
      %cst_69 = arith.constant dense<0.000000e+00> : vector<8x32xf32>
      %128 = tpu.matmul %121, %127, %cst_69 {dimension_numbers = #tpu.dot_dimension_numbers<[1], [0], [0], [1], [0, 0, 1, 1], [], []>} : vector<8x32xbf16>, vector<32x32xbf16>, vector<8x32xf32> -> vector<8x32xf32>
      %c0_70 = arith.constant 0 : index
      %c0_71 = arith.constant 0 : index
      %129 = vector.load %arg9[%c0_70, %c0_71] : memref<1x32xf32, #tpu.memory_space<vmem>>, vector<1x32xf32>
      %130 = vector.broadcast %129 : vector<1x32xf32> to vector<8x32xf32>
      %131 = arith.addf %128, %130 : vector<8x32xf32>
      %132 = vector.shape_cast %126 : vector<8x32xf32> to vector<1x8x32xf32>
      %133 = vector.extract_strided_slice %132 {offsets = [0, 0, 0], sizes = [1, 8, 8], strides = [1, 1, 1]} : vector<1x8x32xf32> to vector<1x8x8xf32>
      %134 = vector.extract_strided_slice %132 {offsets = [0, 0, 8], sizes = [1, 8, 8], strides = [1, 1, 1]} : vector<1x8x32xf32> to vector<1x8x8xf32>
      %135 = vector.extract_strided_slice %132 {offsets = [0, 0, 16], sizes = [1, 8, 8], strides = [1, 1, 1]} : vector<1x8x32xf32> to vector<1x8x8xf32>
      %136 = vector.extract_strided_slice %132 {offsets = [0, 0, 24], sizes = [1, 8, 8], strides = [1, 1, 1]} : vector<1x8x32xf32> to vector<1x8x8xf32>
      %137 = tpu.concatenate %133, %134, %135, %136 in 0 : vector<1x8x8xf32>, vector<1x8x8xf32>, vector<1x8x8xf32>, vector<1x8x8xf32> -> vector<4x8x8xf32>
      %138 = arith.truncf %137 : vector<4x8x8xf32> to vector<4x8x8xbf16>
      %c0_72 = arith.constant 0 : index
      %c0_73 = arith.constant 0 : index
      %c0_74 = arith.constant 0 : index
      %139 = vector.load %arg22[%c0_72, %c0_73, %c0_74] : memref<4x8x8xbf16, #tpu.memory_space<vmem>>, vector<4x8x8xbf16>
      tpu.vector_store %arg22[%c0_72, %c0_73, %c0_74], %138 {strides = array<i32>} : memref<4x8x8xbf16, #tpu.memory_space<vmem>>, vector<4x8x8xbf16>,
      %140 = vector.shape_cast %131 : vector<8x32xf32> to vector<1x8x32xf32>
      %141 = vector.extract_strided_slice %140 {offsets = [0, 0, 0], sizes = [1, 8, 8], strides = [1, 1, 1]} : vector<1x8x32xf32> to vector<1x8x8xf32>
      %142 = vector.extract_strided_slice %140 {offsets = [0, 0, 8], sizes = [1, 8, 8], strides = [1, 1, 1]} : vector<1x8x32xf32> to vector<1x8x8xf32>
      %143 = vector.extract_strided_slice %140 {offsets = [0, 0, 16], sizes = [1, 8, 8], strides = [1, 1, 1]} : vector<1x8x32xf32> to vector<1x8x8xf32>
      %144 = vector.extract_strided_slice %140 {offsets = [0, 0, 24], sizes = [1, 8, 8], strides = [1, 1, 1]} : vector<1x8x32xf32> to vector<1x8x8xf32>
      %145 = tpu.concatenate %141, %142, %143, %144 in 0 : vector<1x8x8xf32>, vector<1x8x8xf32>, vector<1x8x8xf32>, vector<1x8x8xf32> -> vector<4x8x8xf32>
      %146 = arith.truncf %145 : vector<4x8x8xf32> to vector<4x8x8xbf16>
      %c0_75 = arith.constant 0 : index
      %c0_76 = arith.constant 0 : index
      %c0_77 = arith.constant 0 : index
      %147 = vector.load %arg23[%c0_75, %c0_76, %c0_77] : memref<4x8x8xbf16, #tpu.memory_space<vmem>>, vector<4x8x8xbf16>
      tpu.vector_store %arg23[%c0_75, %c0_76, %c0_77], %146 {strides = array<i32>} : memref<4x8x8xbf16, #tpu.memory_space<vmem>>, vector<4x8x8xbf16>,
    } else {
    }
    %c0 = arith.constant 0 : index
    %c0_1 = arith.constant 0 : index
    %c0_2 = arith.constant 0 : index
    %3 = vector.load %arg3[%c0, %c0_1, %c0_2] : memref<1x8x32xf32, #tpu.memory_space<vmem>>, vector<1x8x32xf32>
    %4 = vector.shape_cast %3 : vector<1x8x32xf32> to vector<8x32xf32>
    %5 = arith.truncf %4 : vector<8x32xf32> to vector<8x32xbf16>
    %c0_3 = arith.constant 0 : index
    %c0_4 = arith.constant 0 : index
    %6 = vector.load %arg4[%c0_3, %c0_4] : memref<32x32xbf16, #tpu.memory_space<vmem>>, vector<32x32xbf16>
    %cst = arith.constant dense<0.000000e+00> : vector<8x32xf32>
    %7 = tpu.matmul %5, %6, %cst {dimension_numbers = #tpu.dot_dimension_numbers<[1], [0], [0], [1], [0, 0, 1, 1], [], []>} : vector<8x32xbf16>, vector<32x32xbf16>, vector<8x32xf32> -> vector<8x32xf32>
    %c0_5 = arith.constant 0 : index
    %c0_6 = arith.constant 0 : index
    %8 = vector.load %arg5[%c0_5, %c0_6] : memref<1x32xf32, #tpu.memory_space<vmem>>, vector<1x32xf32>
    %9 = vector.broadcast %8 : vector<1x32xf32> to vector<8x32xf32>
    %10 = arith.addf %7, %9 : vector<8x32xf32>
    %cst_7 = arith.constant 0.353553385 : f32
    %11 = vector.broadcast %cst_7 : f32 to vector<8x32xf32>
    %12 = arith.mulf %10, %11 : vector<8x32xf32>
    %13 = vector.shape_cast %12 : vector<8x32xf32> to vector<1x8x32xf32>
    %14 = vector.extract_strided_slice %13 {offsets = [0, 0, 0], sizes = [1, 8, 8], strides = [1, 1, 1]} : vector<1x8x32xf32> to vector<1x8x8xf32>
    %15 = vector.extract_strided_slice %13 {offsets = [0, 0, 8], sizes = [1, 8, 8], strides = [1, 1, 1]} : vector<1x8x32xf32> to vector<1x8x8xf32>
    %16 = vector.extract_strided_slice %13 {offsets = [0, 0, 16], sizes = [1, 8, 8], strides = [1, 1, 1]} : vector<1x8x32xf32> to vector<1x8x8xf32>
    %17 = vector.extract_strided_slice %13 {offsets = [0, 0, 24], sizes = [1, 8, 8], strides = [1, 1, 1]} : vector<1x8x32xf32> to vector<1x8x8xf32>
    %18 = tpu.concatenate %14, %15, %16, %17 in 0 : vector<1x8x8xf32>, vector<1x8x8xf32>, vector<1x8x8xf32>, vector<1x8x8xf32> -> vector<4x8x8xf32>
    %19 = arith.truncf %18 : vector<4x8x8xf32> to vector<4x8x8xbf16>
    %c0_8 = arith.constant 0 : index
    %c0_9 = arith.constant 0 : index
    %c0_10 = arith.constant 0 : index
    %20 = vector.load %arg22[%c0_8, %c0_9, %c0_10] : memref<4x8x8xbf16, #tpu.memory_space<vmem>>, vector<4x8x8xbf16>
    "tpu.trace_start"() <{level = 10 : i32, message = "gqd,gkd->gqk"}> : () -> ()
    %cst_11 = arith.constant dense<0.000000e+00> : vector<4x8x8xf32>
    %21 = tpu.matmul %19, %20, %cst_11 {dimension_numbers = #tpu.dot_dimension_numbers<[2], [2], [1], [1], [0, 0, 0, 1, 1, 1], [0], [0]>} : vector<4x8x8xbf16>, vector<4x8x8xbf16>, vector<4x8x8xf32> -> vector<4x8x8xf32>
    "tpu.trace_stop"() : () -> ()
    %cst_12 = arith.constant dense<0xFF800000> : vector<4x8xf32>
    %22 = vector.multi_reduction <maximumf>, %21, %cst_12 [2] : vector<4x8x8xf32> to vector<4x8xf32>
    %23 = vector.shape_cast %22 : vector<4x8xf32> to vector<4x8x1xf32>
    %24 = vector.broadcast %23 : vector<4x8x1xf32> to vector<4x8x8xf32>
    %25 = arith.subf %21, %24 : vector<4x8x8xf32>
    %26 = math.exp %25 : vector<4x8x8xf32>
    %cst_13 = arith.constant dense<0.000000e+00> : vector<4x8xf32>
    %27 = vector.multi_reduction <add>, %26, %cst_13 [2] : vector<4x8x8xf32> to vector<4x8xf32>
    %28 = vector.shape_cast %27 : vector<4x8xf32> to vector<4x8x1xf32>
    %29 = tpu.reciprocal %28 {approx = true} : vector<4x8x1xf32> -> vector<4x8x1xf32>
    %30 = vector.broadcast %29 : vector<4x8x1xf32> to vector<4x8x8xf32>
    %31 = arith.mulf %26, %30 : vector<4x8x8xf32>
    %32 = vector.shape_cast %31 : vector<4x8x8xf32> to vector<4x1x8x8xf32>
    %33 = arith.truncf %32 : vector<4x1x8x8xf32> to vector<4x1x8x8xbf16>
    %c0_14 = arith.constant 0 : index
    %c0_15 = arith.constant 0 : index
    %c0_16 = arith.constant 0 : index
    %c0_17 = arith.constant 0 : index
    %34 = vector.load %arg21[%c0_14, %c0_15, %c0_16, %c0_17] : memref<4x1x8x8xbf16, #tpu.memory_space<vmem>>, vector<4x1x8x8xbf16>
    tpu.vector_store %arg21[%c0_14, %c0_15, %c0_16, %c0_17], %33 {strides = array<i32>} : memref<4x1x8x8xbf16, #tpu.memory_space<vmem>>, vector<4x1x8x8xbf16>,
    %35 = arith.truncf %31 : vector<4x8x8xf32> to vector<4x8x8xbf16>
    %c0_18 = arith.constant 0 : index
    %c0_19 = arith.constant 0 : index
    %c0_20 = arith.constant 0 : index
    %36 = vector.load %arg23[%c0_18, %c0_19, %c0_20] : memref<4x8x8xbf16, #tpu.memory_space<vmem>>, vector<4x8x8xbf16>
    "tpu.trace_start"() <{level = 10 : i32, message = "gqk,gkd->gqd"}> : () -> ()
    %cst_21 = arith.constant dense<0.000000e+00> : vector<4x8x8xf32>
    %37 = tpu.matmul %35, %36, %cst_21 {dimension_numbers = #tpu.dot_dimension_numbers<[2], [1], [1], [2], [0, 0, 0, 1, 1, 2], [0], [0]>} : vector<4x8x8xbf16>, vector<4x8x8xbf16>, vector<4x8x8xf32> -> vector<4x8x8xf32>
    "tpu.trace_stop"() : () -> ()
    %38 = vector.extract_strided_slice %37 {offsets = [0, 0, 0], sizes = [1, 8, 8], strides = [1, 1, 1]} : vector<4x8x8xf32> to vector<1x8x8xf32>
    %39 = vector.shape_cast %38 : vector<1x8x8xf32> to vector<8x8xf32>
    %40 = vector.extract_strided_slice %37 {offsets = [1, 0, 0], sizes = [1, 8, 8], strides = [1, 1, 1]} : vector<4x8x8xf32> to vector<1x8x8xf32>
    %41 = vector.shape_cast %40 : vector<1x8x8xf32> to vector<8x8xf32>
    %42 = vector.extract_strided_slice %37 {offsets = [2, 0, 0], sizes = [1, 8, 8], strides = [1, 1, 1]} : vector<4x8x8xf32> to vector<1x8x8xf32>
    %43 = vector.shape_cast %42 : vector<1x8x8xf32> to vector<8x8xf32>
    %44 = vector.extract_strided_slice %37 {offsets = [3, 0, 0], sizes = [1, 8, 8], strides = [1, 1, 1]} : vector<4x8x8xf32> to vector<1x8x8xf32>
    %45 = vector.shape_cast %44 : vector<1x8x8xf32> to vector<8x8xf32>
    %46 = tpu.concatenate %39, %41, %43, %45 in 1 : vector<8x8xf32>, vector<8x8xf32>, vector<8x8xf32>, vector<8x8xf32> -> vector<8x32xf32>
    %47 = arith.truncf %46 : vector<8x32xf32> to vector<8x32xbf16>
    %c0_22 = arith.constant 0 : index
    %c0_23 = arith.constant 0 : index
    %48 = vector.load %arg10[%c0_22, %c0_23] : memref<32x32xbf16, #tpu.memory_space<vmem>>, vector<32x32xbf16>
    %cst_24 = arith.constant dense<0.000000e+00> : vector<8x32xf32>
    %49 = tpu.matmul %47, %48, %cst_24 {dimension_numbers = #tpu.dot_dimension_numbers<[1], [0], [0], [1], [0, 0, 1, 1], [], []>} : vector<8x32xbf16>, vector<32x32xbf16>, vector<8x32xf32> -> vector<8x32xf32>
    %c0_25 = arith.constant 0 : index
    %c0_26 = arith.constant 0 : index
    %50 = vector.load %arg11[%c0_25, %c0_26] : memref<1x32xf32, #tpu.memory_space<vmem>>, vector<1x32xf32>
    %51 = vector.broadcast %50 : vector<1x32xf32> to vector<8x32xf32>
    %52 = arith.addf %49, %51 : vector<8x32xf32>
    %53 = arith.addf %52, %4 : vector<8x32xf32>
    %c0_27 = arith.constant 0 : index
    %c0_28 = arith.constant 0 : index
    %54 = vector.load %arg12[%c0_27, %c0_28] : memref<1x32xf32, #tpu.memory_space<vmem>>, vector<1x32xf32>
    %c0_29 = arith.constant 0 : index
    %c0_30 = arith.constant 0 : index
    %55 = vector.load %arg13[%c0_29, %c0_30] : memref<1x32xf32, #tpu.memory_space<vmem>>, vector<1x32xf32>
    %cst_31 = arith.constant dense<0.000000e+00> : vector<8xf32>
    %56 = vector.multi_reduction <add>, %53, %cst_31 [1] : vector<8x32xf32> to vector<8xf32>
    %57 = vector.shape_cast %56 : vector<8xf32> to vector<8x1xf32>
    %cst_32 = arith.constant 3.200000e+01 : f32
    %58 = vector.broadcast %cst_32 : f32 to vector<8x1xf32>
    %59 = arith.divf %57, %58 : vector<8x1xf32>
    %60 = vector.broadcast %59 : vector<8x1xf32> to vector<8x32xf32>
    %61 = arith.subf %53, %60 : vector<8x32xf32>
    %62 = arith.mulf %61, %61 : vector<8x32xf32>
    %cst_33 = arith.constant dense<0.000000e+00> : vector<8xf32>
    %63 = vector.multi_reduction <add>, %62, %cst_33 [1] : vector<8x32xf32> to vector<8xf32>
    %64 = vector.shape_cast %63 : vector<8xf32> to vector<8x1xf32>
    %cst_34 = arith.constant 3.200000e+01 : f32
    %65 = vector.broadcast %cst_34 : f32 to vector<8x1xf32>
    %66 = arith.divf %64, %65 : vector<8x1xf32>
    %67 = vector.broadcast %59 : vector<8x1xf32> to vector<8x32xf32>
    %68 = arith.subf %53, %67 : vector<8x32xf32>
    %cst_35 = arith.constant 9.99999974E-6 : f32
    %69 = vector.broadcast %cst_35 : f32 to vector<8x1xf32>
    %70 = arith.addf %66, %69 : vector<8x1xf32>
    %71 = math.rsqrt %70 : vector<8x1xf32>
    %72 = vector.broadcast %71 : vector<8x1xf32> to vector<8x32xf32>
    %73 = arith.mulf %68, %72 : vector<8x32xf32>
    %74 = vector.broadcast %54 : vector<1x32xf32> to vector<8x32xf32>
    %75 = arith.mulf %73, %74 : vector<8x32xf32>
    %76 = vector.broadcast %55 : vector<1x32xf32> to vector<8x32xf32>
    %77 = arith.addf %75, %76 : vector<8x32xf32>
    %78 = arith.truncf %77 : vector<8x32xf32> to vector<8x32xbf16>
    %c0_36 = arith.constant 0 : index
    %c0_37 = arith.constant 0 : index
    %79 = vector.load %arg14[%c0_36, %c0_37] : memref<32x64xbf16, #tpu.memory_space<vmem>>, vector<32x64xbf16>
    %cst_38 = arith.constant dense<0.000000e+00> : vector<8x64xf32>
    %80 = tpu.matmul %78, %79, %cst_38 {dimension_numbers = #tpu.dot_dimension_numbers<[1], [0], [0], [1], [0, 0, 1, 1], [], []>} : vector<8x32xbf16>, vector<32x64xbf16>, vector<8x64xf32> -> vector<8x64xf32>
    %c0_39 = arith.constant 0 : index
    %c0_40 = arith.constant 0 : index
    %81 = vector.load %arg15[%c0_39, %c0_40] : memref<1x64xf32, #tpu.memory_space<vmem>>, vector<1x64xf32>
    %82 = vector.broadcast %81 : vector<1x64xf32> to vector<8x64xf32>
    %83 = arith.addf %80, %82 : vector<8x64xf32>
    %cst_41 = arith.constant 0.000000e+00 : f32
    %84 = vector.broadcast %cst_41 : f32 to vector<8x64xf32>
    %85 = arith.maximumf %83, %84 : vector<8x64xf32>
    %86 = arith.truncf %85 : vector<8x64xf32> to vector<8x64xbf16>
    %c0_42 = arith.constant 0 : index
    %c0_43 = arith.constant 0 : index
    %87 = vector.load %arg16[%c0_42, %c0_43] : memref<64x32xbf16, #tpu.memory_space<vmem>>, vector<64x32xbf16>
    %cst_44 = arith.constant dense<0.000000e+00> : vector<8x32xf32>
    %88 = tpu.matmul %86, %87, %cst_44 {dimension_numbers = #tpu.dot_dimension_numbers<[1], [0], [0], [1], [0, 0, 1, 1], [], []>} : vector<8x64xbf16>, vector<64x32xbf16>, vector<8x32xf32> -> vector<8x32xf32>
    %c0_45 = arith.constant 0 : index
    %c0_46 = arith.constant 0 : index
    %89 = vector.load %arg17[%c0_45, %c0_46] : memref<1x32xf32, #tpu.memory_space<vmem>>, vector<1x32xf32>
    %90 = vector.broadcast %89 : vector<1x32xf32> to vector<8x32xf32>
    %91 = arith.addf %88, %90 : vector<8x32xf32>
    %92 = arith.addf %91, %77 : vector<8x32xf32>
    %c0_47 = arith.constant 0 : index
    %c0_48 = arith.constant 0 : index
    %93 = vector.load %arg18[%c0_47, %c0_48] : memref<1x32xf32, #tpu.memory_space<vmem>>, vector<1x32xf32>
    %c0_49 = arith.constant 0 : index
    %c0_50 = arith.constant 0 : index
    %94 = vector.load %arg19[%c0_49, %c0_50] : memref<1x32xf32, #tpu.memory_space<vmem>>, vector<1x32xf32>
    %cst_51 = arith.constant dense<0.000000e+00> : vector<8xf32>
    %95 = vector.multi_reduction <add>, %92, %cst_51 [1] : vector<8x32xf32> to vector<8xf32>
    %96 = vector.shape_cast %95 : vector<8xf32> to vector<8x1xf32>
    %cst_52 = arith.constant 3.200000e+01 : f32
    %97 = vector.broadcast %cst_52 : f32 to vector<8x1xf32>
    %98 = arith.divf %96, %97 : vector<8x1xf32>
    %99 = vector.broadcast %98 : vector<8x1xf32> to vector<8x32xf32>
    %100 = arith.subf %92, %99 : vector<8x32xf32>
    %101 = arith.mulf %100, %100 : vector<8x32xf32>
    %cst_53 = arith.constant dense<0.000000e+00> : vector<8xf32>
    %102 = vector.multi_reduction <add>, %101, %cst_53 [1] : vector<8x32xf32> to vector<8xf32>
    %103 = vector.shape_cast %102 : vector<8xf32> to vector<8x1xf32>
    %cst_54 = arith.constant 3.200000e+01 : f32
    %104 = vector.broadcast %cst_54 : f32 to vector<8x1xf32>
    %105 = arith.divf %103, %104 : vector<8x1xf32>
    %106 = vector.broadcast %98 : vector<8x1xf32> to vector<8x32xf32>
    %107 = arith.subf %92, %106 : vector<8x32xf32>
    %cst_55 = arith.constant 9.99999974E-6 : f32
    %108 = vector.broadcast %cst_55 : f32 to vector<8x1xf32>
    %109 = arith.addf %105, %108 : vector<8x1xf32>
    %110 = math.rsqrt %109 : vector<8x1xf32>
    %111 = vector.broadcast %110 : vector<8x1xf32> to vector<8x32xf32>
    %112 = arith.mulf %107, %111 : vector<8x32xf32>
    %113 = vector.broadcast %93 : vector<1x32xf32> to vector<8x32xf32>
    %114 = arith.mulf %112, %113 : vector<8x32xf32>
    %115 = vector.broadcast %94 : vector<1x32xf32> to vector<8x32xf32>
    %116 = arith.addf %114, %115 : vector<8x32xf32>
    %117 = vector.shape_cast %116 : vector<8x32xf32> to vector<1x8x32xf32>
    %c0_56 = arith.constant 0 : index
    %c0_57 = arith.constant 0 : index
    %c0_58 = arith.constant 0 : index
    %118 = vector.load %arg20[%c0_56, %c0_57, %c0_58] : memref<1x8x32xf32, #tpu.memory_space<vmem>>, vector<1x8x32xf32>
    tpu.vector_store %arg20[%c0_56, %c0_57, %c0_58], %117 {strides = array<i32>} : memref<1x8x32xf32, #tpu.memory_space<vmem>>, vector<1x8x32xf32>,
    return
  }
  func.func @transform_0(%arg0: i32, %arg1: i32) -> (i32, i32, i32) {
    %c0_i32 = arith.constant 0 : i32
    %c0_i32_0 = arith.constant 0 : i32
    %c0_i32_1 = arith.constant 0 : i32
    return %arg0, %c0_i32, %c0_i32_0 : i32, i32, i32
  }
  func.func @transform_1(%arg0: i32, %arg1: i32) -> (i32, i32, i32) {
    %c0_i32 = arith.constant 0 : i32
    %c0_i32_0 = arith.constant 0 : i32
    return %arg0, %arg1, %c0_i32 : i32, i32, i32
  }
  func.func @transform_2(%arg0: i32, %arg1: i32) -> (i32, i32) {
    %c0_i32 = arith.constant 0 : i32
    %c0_i32_0 = arith.constant 0 : i32
    %c0_i32_1 = arith.constant 0 : i32
    return %c0_i32, %c0_i32_0 : i32, i32
  }
  func.func @transform_3(%arg0: i32, %arg1: i32) -> (i32, i32) {
    %c0_i32 = arith.constant 0 : i32
    %c0_i32_0 = arith.constant 0 : i32
    %c0_i32_1 = arith.constant 0 : i32
    return %c0_i32, %c0_i32_0 : i32, i32
  }
  func.func @transform_4(%arg0: i32, %arg1: i32) -> (i32, i32) {
    %c0_i32 = arith.constant 0 : i32
    %c0_i32_0 = arith.constant 0 : i32
    %c0_i32_1 = arith.constant 0 : i32
    return %c0_i32, %c0_i32_0 : i32, i32
  }
  func.func @transform_5(%arg0: i32, %arg1: i32) -> (i32, i32) {
    %c0_i32 = arith.constant 0 : i32
    %c0_i32_0 = arith.constant 0 : i32
    %c0_i32_1 = arith.constant 0 : i32
    return %c0_i32, %c0_i32_0 : i32, i32
  }
  func.func @transform_6(%arg0: i32, %arg1: i32) -> (i32, i32) {
    %c0_i32 = arith.constant 0 : i32
    %c0_i32_0 = arith.constant 0 : i32
    %c0_i32_1 = arith.constant 0 : i32
    return %c0_i32, %c0_i32_0 : i32, i32
  }
  func.func @transform_7(%arg0: i32, %arg1: i32) -> (i32, i32) {
    %c0_i32 = arith.constant 0 : i32
    %c0_i32_0 = arith.constant 0 : i32
    %c0_i32_1 = arith.constant 0 : i32
    return %c0_i32, %c0_i32_0 : i32, i32
  }
  func.func @transform_8(%arg0: i32, %arg1: i32) -> (i32, i32) {
    %c0_i32 = arith.constant 0 : i32
    %c0_i32_0 = arith.constant 0 : i32
    %c0_i32_1 = arith.constant 0 : i32
    return %c0_i32, %c0_i32_0 : i32, i32
  }
  func.func @transform_9(%arg0: i32, %arg1: i32) -> (i32, i32) {
    %c0_i32 = arith.constant 0 : i32
    %c0_i32_0 = arith.constant 0 : i32
    %c0_i32_1 = arith.constant 0 : i32
    return %c0_i32, %c0_i32_0 : i32, i32
  }
  func.func @transform_10(%arg0: i32, %arg1: i32) -> (i32, i32) {
    %c0_i32 = arith.constant 0 : i32
    %c0_i32_0 = arith.constant 0 : i32
    %c0_i32_1 = arith.constant 0 : i32
    return %c0_i32, %c0_i32_0 : i32, i32
  }
  func.func @transform_11(%arg0: i32, %arg1: i32) -> (i32, i32) {
    %c0_i32 = arith.constant 0 : i32
    %c0_i32_0 = arith.constant 0 : i32
    %c0_i32_1 = arith.constant 0 : i32
    return %c0_i32, %c0_i32_0 : i32, i32
  }
  func.func @transform_12(%arg0: i32, %arg1: i32) -> (i32, i32) {
    %c0_i32 = arith.constant 0 : i32
    %c0_i32_0 = arith.constant 0 : i32
    %c0_i32_1 = arith.constant 0 : i32
    return %c0_i32, %c0_i32_0 : i32, i32
  }
  func.func @transform_13(%arg0: i32, %arg1: i32) -> (i32, i32) {
    %c0_i32 = arith.constant 0 : i32
    %c0_i32_0 = arith.constant 0 : i32
    %c0_i32_1 = arith.constant 0 : i32
    return %c0_i32, %c0_i32_0 : i32, i32
  }
  func.func @transform_14(%arg0: i32, %arg1: i32) -> (i32, i32) {
    %c0_i32 = arith.constant 0 : i32
    %c0_i32_0 = arith.constant 0 : i32
    %c0_i32_1 = arith.constant 0 : i32
    return %c0_i32, %c0_i32_0 : i32, i32
  }
  func.func @transform_15(%arg0: i32, %arg1: i32) -> (i32, i32) {
    %c0_i32 = arith.constant 0 : i32
    %c0_i32_0 = arith.constant 0 : i32
    %c0_i32_1 = arith.constant 0 : i32
    return %c0_i32, %c0_i32_0 : i32, i32
  }
  func.func @transform_16(%arg0: i32, %arg1: i32) -> (i32, i32) {
    %c0_i32 = arith.constant 0 : i32
    %c0_i32_0 = arith.constant 0 : i32
    %c0_i32_1 = arith.constant 0 : i32
    return %c0_i32, %c0_i32_0 : i32, i32
  }
  func.func @transform_17(%arg0: i32, %arg1: i32) -> (i32, i32) {
    %c0_i32 = arith.constant 0 : i32
    %c0_i32_0 = arith.constant 0 : i32
    %c0_i32_1 = arith.constant 0 : i32
    return %c0_i32, %c0_i32_0 : i32, i32
  }
  func.func @transform_18(%arg0: i32, %arg1: i32) -> (i32, i32, i32) {
    %c0_i32 = arith.constant 0 : i32
    %c0_i32_0 = arith.constant 0 : i32
    return %arg0, %arg1, %c0_i32 : i32, i32, i32
  }
  func.func @transform_19(%arg0: i32, %arg1: i32) -> (i32, i32, i32, i32) {
    %c0_i32 = arith.constant 0 : i32
    %c0_i32_0 = arith.constant 0 : i32
    %c0_i32_1 = arith.constant 0 : i32
    return %c0_i32, %arg0, %arg1, %c0_i32_0 : i32, i32, i32, i32
  }
}

</mosaic_0001>

<llo_original>
// kernel: tpu_custom_call.1
$region0: #{tpu_custom_call.1}
  #allocation0 [shape = 'u32[]', space=smem, size = 0x4, offset = 0x4, fixed_abs, tag = 'smem constant byte address 0x4 - core index']
  #allocation1 [shape = 'u32[144,128]{1,0:T(1,128)}', space=vmem, size = 0x12000, scoped, tag = 'internal scratch']
  #allocation2 [shape = 'bf16[4,8,8]{2,1,0:T(8,128)(2,1)}', space=vmem, size = 0x2000, scoped, tag = 'scratch operand']
  #allocation3 [shape = 'bf16[4,8,8]{2,1,0:T(8,128)(2,1)}', space=vmem, size = 0x2000, scoped, tag = 'scratch operand']
  %s0 = inlined_call_operand.vmem [shape: f32[2,8,32], index: 0, kind: input, shape index: {}]
  %s1 = inlined_call_operand.vmem [shape: f32[2,8,32], index: 1, kind: input, shape index: {}]
  %s2 = inlined_call_operand.vmem [shape: bf16[32,32], index: 2, kind: input, shape index: {}]
  %s3 = inlined_call_operand.vmem [shape: f32[1,32], index: 3, kind: input, shape index: {}]
  %s4 = inlined_call_operand.hbm [shape: bf16[32,32], index: 4, kind: input, shape index: {}]
  %s5 = inlined_call_operand.vmem [shape: f32[1,32], index: 5, kind: input, shape index: {}]
  %s6 = inlined_call_operand.hbm [shape: bf16[32,32], index: 6, kind: input, shape index: {}]
  %s7 = inlined_call_operand.hbm [shape: f32[1,32], index: 7, kind: input, shape index: {}]
  %s8 = inlined_call_operand.hbm [shape: bf16[32,32], index: 8, kind: input, shape index: {}]
  %s9 = inlined_call_operand.hbm [shape: f32[1,32], index: 9, kind: input, shape index: {}]
  %s10 = inlined_call_operand.vmem [shape: f32[1,32], index: 10, kind: input, shape index: {}]
  %s11 = inlined_call_operand.vmem [shape: f32[1,32], index: 11, kind: input, shape index: {}]
  %s12 = inlined_call_operand.vmem [shape: bf16[32,64], index: 12, kind: input, shape index: {}]
  %s13 = inlined_call_operand.vmem [shape: f32[1,64], index: 13, kind: input, shape index: {}]
  %s14 = inlined_call_operand.vmem [shape: bf16[64,32], index: 14, kind: input, shape index: {}]
  %s15 = inlined_call_operand.vmem [shape: f32[1,32], index: 15, kind: input, shape index: {}]
  %s16 = inlined_call_operand.vmem [shape: f32[1,32], index: 16, kind: input, shape index: {}]
  %s17 = inlined_call_operand.vmem [shape: f32[1,32], index: 17, kind: input, shape index: {}]
  %s18 = inlined_call_operand.hbm [shape: f32[2,8,32], index: 18, kind: output, shape index: {0}]
  %s19 = inlined_call_operand.hbm [shape: bf16[4,2,8,8], index: 19, kind: output, shape index: {1}]
  %20 = xla_tuple %s18, %s19
  %s21 = sld [smem:[#allocation0]]
  $region137: #{tpu_custom_call.1} parent=0
    _
  %s23 = ssub.s32 1, %s21
  %s24 = scalar_select 0, %s23, %s21
  $region1: #{tpu_custom_call.1} parent=0
    #allocation4 [shape = 'u8[8192]{0}', space=vmem, size = 0x2000, scoped, tag = 'input window, operand 4, single buffered']
    #allocation5 [shape = 's32[2]{0}', space=sflag, size = 0x8, scoped, tag = 'scoped memory for tpu_custom_call.1']
    #allocation6 [shape = 's32[2]{0}', space=sflag, size = 0x8, scoped, tag = 'scoped memory for tpu_custom_call.1']
    #allocation7 [shape = 'u8[8192]{0}', space=vmem, size = 0x2000, scoped, tag = 'input window, operand 6, single buffered']
    #allocation8 [shape = 's32[1]{0}', space=sflag, size = 0x4, scoped, tag = 'scoped memory for tpu_custom_call.1']
    #allocation9 [shape = 'u8[512]{0}', space=vmem, size = 0x400, scoped, tag = 'input window, operand 7, single buffered']
    #allocation10 [shape = 'u8[8192]{0}', space=vmem, size = 0x2000, scoped, tag = 'input window, operand 8, single buffered']
    #allocation11 [shape = 's32[1]{0}', space=sflag, size = 0x4, scoped, tag = 'scoped memory for tpu_custom_call.1']
    #allocation12 [shape = 'u8[512]{0}', space=vmem, size = 0x400, scoped, tag = 'input window, operand 9, single buffered']
    #allocation13 [shape = 'u8[8192]{0}', space=vmem, size = 0x2000, scoped, tag = 'output window, operand 0']
    #allocation14 [shape = 'u8[16384]{0}', space=vmem, size = 0x4000, scoped, tag = 'output window, operand 1']
    #allocation15 [shape = 's32[2]{0}', space=sflag, size = 0x8, scoped, tag = 'scoped memory for tpu_custom_call.1']
    %25 = vsyncpa [#allocation5], 0
    %26 = vsyncpa [#allocation8], 0
    %27 = vsyncpa [#allocation11], 0
    %28 = vsyncpa [#allocation6], 0
    %s29 = scalar_lea.sflag [#allocation6], 1
    %30 = vsyncpa %s29, 0
    %31 = vsyncpa [#allocation15], 0
    %s32 = scalar_lea.sflag [#allocation15], 1
    %33 = vsyncpa %s32, 0
    loop: start=0, step=1, limit=4
    $region2: #{tpu_custom_call.1} parent=1 // loop_pre_header
      _
    $region3: #{tpu_custom_call.1} parent=1 // loop_header
      %s35 = sphi 0, %s39
      %p36 = scmp.ge.s32.totalorder %s35, 4
      %s42 = sphi 0, %s54
      %s43 = sphi 0, %s50
      %s44 = sphi 0, %s42
      %s45 = sphi 0, %s43
      %s46 = sphi 0, %s44
      %s47 = sphi 0, %s45
      %s57 = sphi 0, %s59
      %s60 = sphi 0, %s57
      %s61 = sphi 0, %s60
      %s77 = sphi 0, %s61
      %s85 = sphi 0, %s87
      %s88 = sphi 0, %s85
      %s89 = sphi 0, %s88
      %s105 = sphi 0, %s89
      %s109 = sphi 0, %s109
      %s111 = sphi 0, %s109
      %s112 = sphi 0, %s111
      %s126 = sphi 0, %s112
      %s130 = sphi 0, %s130
      %s132 = sphi 0, %s130
      %s133 = sphi 0, %s132
      %s147 = sphi 0, %s133
      %s151 = sphi 0, %s151
      %s153 = sphi 0, %s151
      %s154 = sphi 0, %s153
      %s168 = sphi 0, %s154
      %s172 = sphi 0, %s172
      %s174 = sphi 0, %s172
      %s175 = sphi 0, %s174
      %s189 = sphi 0, %s175
      %s193 = sphi 0, %s193
      %s195 = sphi 0, %s193
      %s196 = sphi 0, %s195
      %s210 = sphi 0, %s196
      %s214 = sphi 0, %s214
      %s216 = sphi 0, %s214
      %s217 = sphi 0, %s216
      %s231 = sphi 0, %s217
      %s235 = sphi 0, %s235
      %s237 = sphi 0, %s235
      %s238 = sphi 0, %s237
      %s252 = sphi 0, %s238
      %s256 = sphi 0, %s256
      %s258 = sphi 0, %s256
      %s259 = sphi 0, %s258
      %s273 = sphi 0, %s259
      %s277 = sphi 0, %s277
      %s279 = sphi 0, %s277
      %s280 = sphi 0, %s279
      %s294 = sphi 0, %s280
      %s298 = sphi 0, %s298
      %s300 = sphi 0, %s298
      %s301 = sphi 0, %s300
      %s315 = sphi 0, %s301
      %s319 = sphi 0, %s319
      %s321 = sphi 0, %s319
      %s322 = sphi 0, %s321
      %s336 = sphi 0, %s322
      %s340 = sphi 0, %s340
      %s342 = sphi 0, %s340
      %s343 = sphi 0, %s342
      %s357 = sphi 0, %s343
      %s361 = sphi 0, %s361
      %s363 = sphi 0, %s361
      %s364 = sphi 0, %s363
      %s378 = sphi 0, %s364
      %s382 = sphi 0, %s382
      %s384 = sphi 0, %s382
      %s385 = sphi 0, %s384
      %s399 = sphi 0, %s385
      %s403 = sphi 0, %s403
      %s405 = sphi 0, %s403
      %s406 = sphi 0, %s405
      %s420 = sphi 0, %s406
      %s424 = sphi 0, %s424
      %s426 = sphi 0, %s424
      %s427 = sphi 0, %s426
      %s441 = sphi 0, %s427
      %s449 = sphi 0, %s451
      %s452 = sphi 0, %s449
      %s453 = sphi 0, %s452
      %s469 = sphi 0, %s453
      %s477 = sphi 0, %s479
      %s480 = sphi 0, %s477
      %s481 = sphi 0, %s480
      %s497 = sphi 0, %s481
    $region4: #{tpu_custom_call.1} parent=1 // loop_header_branch
      %38 = sbr.rel (%p36) target = $region8
    $region5: #{tpu_custom_call.1} parent=1 // loop_body
      %s40 = ssub.s32 %s35, 1
      %s41 = ssub.s32 %s35, 2
      %s48 = sadd.s32 1, %s43
      %p49 = scmp.ge.s32.totalorder %s48, 1
      %s50 = scalar_select %p49, 0, %s48
      %s51 = sadd.s32 1, %s42
      %s52 = scalar_select %p49, %s51, %s42
      %p53 = scmp.ge.s32.totalorder %s52, 2
      %s54 = scalar_select %p53, 0, %s52
      %s55 = ssub.s32 %s42, %s54
      %p56 = scmp.eq.s32.totalorder %s55, 0
      %s58 = sadd.s32 %s57, 1
      %s59 = scalar_select %p56, %s57, %s58
      %p62 = pneg %p56
      %p63 = scmp.eq.s32.totalorder %s35, 1
      %p64 = por %p62, %p63
      %p65 = scmp.ne.s32.totalorder %s57, %s60
      %p66 = scmp.eq.s32.totalorder %s35, 0
      %p67 = por %p65, %p66
      %p68 = scmp.ne.s32.totalorder %s57, %s60
      %p69 = scmp.eq.s32.totalorder %s40, 1
      %p70 = por %p68, %p69
      %p71 = scmp.ne.s32.totalorder %s60, %s61
      %p72 = scmp.eq.s32.totalorder %s40, 0
      %p73 = por %p71, %p72
      %p74 = scmp.ne.s32.totalorder %s60, %s61
      %p75 = scmp.eq.s32.totalorder %s41, 1
      %p76 = por %p74, %p75
      %p78 = scmp.ne.s32.totalorder %s61, %s77
      %p79 = scmp.eq.s32.totalorder %s41, 0
      %p80 = por %p78, %p79
      %s81 = ssub.s32 %s42, %s54
      %s82 = ssub.s32 %s43, %s50
      %s83 = sor.u32 %s81, %s82
      %p84 = scmp.eq.s32.totalorder %s83, 0
      %s86 = sadd.s32 %s85, 1
      %s87 = scalar_select %p84, %s85, %s86
      %p90 = pneg %p84
      %p91 = scmp.eq.s32.totalorder %s35, 1
      %p92 = por %p90, %p91
      %p93 = scmp.ne.s32.totalorder %s85, %s88
      %p94 = scmp.eq.s32.totalorder %s35, 0
      %p95 = por %p93, %p94
      %p96 = scmp.ne.s32.totalorder %s85, %s88
      %p97 = scmp.eq.s32.totalorder %s40, 1
      %p98 = por %p96, %p97
      %p99 = scmp.ne.s32.totalorder %s88, %s89
      %p100 = scmp.eq.s32.totalorder %s40, 0
      %p101 = por %p99, %p100
      %p102 = scmp.ne.s32.totalorder %s88, %s89
      %p103 = scmp.eq.s32.totalorder %s41, 1
      %p104 = por %p102, %p103
      %p106 = scmp.ne.s32.totalorder %s89, %s105
      %p107 = scmp.eq.s32.totalorder %s41, 0
      %p108 = por %p106, %p107
      %s110 = sadd.s32 %s109, 1
      %p113 = scmp.eq.s32.totalorder %s35, 1
      %p114 = scmp.ne.s32.totalorder %s109, %s111
      %p115 = scmp.eq.s32.totalorder %s35, 0
      %p116 = por %p114, %p115
      %p117 = scmp.ne.s32.totalorder %s109, %s111
      %p118 = scmp.eq.s32.totalorder %s40, 1
      %p119 = por %p117, %p118
      %p120 = scmp.ne.s32.totalorder %s111, %s112
      %p121 = scmp.eq.s32.totalorder %s40, 0
      %p122 = por %p120, %p121
      %p123 = scmp.ne.s32.totalorder %s111, %s112
      %p124 = scmp.eq.s32.totalorder %s41, 1
      %p125 = por %p123, %p124
      %p127 = scmp.ne.s32.totalorder %s112, %s126
      %p128 = scmp.eq.s32.totalorder %s41, 0
      %p129 = por %p127, %p128
      %s131 = sadd.s32 %s130, 1
      %p134 = scmp.eq.s32.totalorder %s35, 1
      %p135 = scmp.ne.s32.totalorder %s130, %s132
      %p136 = scmp.eq.s32.totalorder %s35, 0
      %p137 = por %p135, %p136
      %p138 = scmp.ne.s32.totalorder %s130, %s132
      %p139 = scmp.eq.s32.totalorder %s40, 1
      %p140 = por %p138, %p139
      %p141 = scmp.ne.s32.totalorder %s132, %s133
      %p142 = scmp.eq.s32.totalorder %s40, 0
      %p143 = por %p141, %p142
      %p144 = scmp.ne.s32.totalorder %s132, %s133
      %p145 = scmp.eq.s32.totalorder %s41, 1
      %p146 = por %p144, %p145
      %p148 = scmp.ne.s32.totalorder %s133, %s147
      %p149 = scmp.eq.s32.totalorder %s41, 0
      %p150 = por %p148, %p149
      %s152 = sadd.s32 %s151, 1
      %p155 = scmp.eq.s32.totalorder %s35, 1
      %p156 = scmp.ne.s32.totalorder %s151, %s153
      %p157 = scmp.eq.s32.totalorder %s35, 0
      %p158 = por %p156, %p157
      %p159 = scmp.ne.s32.totalorder %s151, %s153
      %p160 = scmp.eq.s32.totalorder %s40, 1
      %p161 = por %p159, %p160
      %p162 = scmp.ne.s32.totalorder %s153, %s154
      %p163 = scmp.eq.s32.totalorder %s40, 0
      %p164 = por %p162, %p163
      %p165 = scmp.ne.s32.totalorder %s153, %s154
      %p166 = scmp.eq.s32.totalorder %s41, 1
      %p167 = por %p165, %p166
      %p169 = scmp.ne.s32.totalorder %s154, %s168
      %p170 = scmp.eq.s32.totalorder %s41, 0
      %p171 = por %p169, %p170
      %s173 = sadd.s32 %s172, 1
      %p176 = scmp.eq.s32.totalorder %s35, 1
      %p177 = scmp.ne.s32.totalorder %s172, %s174
      %p178 = scmp.eq.s32.totalorder %s35, 0
      %p179 = por %p177, %p178
      %p180 = scmp.ne.s32.totalorder %s172, %s174
      %p181 = scmp.eq.s32.totalorder %s40, 1
      %p182 = por %p180, %p181
      %p183 = scmp.ne.s32.totalorder %s174, %s175
      %p184 = scmp.eq.s32.totalorder %s40, 0
      %p185 = por %p183, %p184
      %p186 = scmp.ne.s32.totalorder %s174, %s175
      %p187 = scmp.eq.s32.totalorder %s41, 1
      %p188 = por %p186, %p187
      %p190 = scmp.ne.s32.totalorder %s175, %s189
      %p191 = scmp.eq.s32.totalorder %s41, 0
      %p192 = por %p190, %p191
      %s194 = sadd.s32 %s193, 1
      %p197 = scmp.eq.s32.totalorder %s35, 1
      %p198 = scmp.ne.s32.totalorder %s193, %s195
      %p199 = scmp.eq.s32.totalorder %s35, 0
      %p200 = por %p198, %p199
      %p201 = scmp.ne.s32.totalorder %s193, %s195
      %p202 = scmp.eq.s32.totalorder %s40, 1
      %p203 = por %p201, %p202
      %p204 = scmp.ne.s32.totalorder %s195, %s196
      %p205 = scmp.eq.s32.totalorder %s40, 0
      %p206 = por %p204, %p205
      %p207 = scmp.ne.s32.totalorder %s195, %s196
      %p208 = scmp.eq.s32.totalorder %s41, 1
      %p209 = por %p207, %p208
      %p211 = scmp.ne.s32.totalorder %s196, %s210
      %p212 = scmp.eq.s32.totalorder %s41, 0
      %p213 = por %p211, %p212
      %s215 = sadd.s32 %s214, 1
      %p218 = scmp.eq.s32.totalorder %s35, 1
      %p219 = scmp.ne.s32.totalorder %s214, %s216
      %p220 = scmp.eq.s32.totalorder %s35, 0
      %p221 = por %p219, %p220
      %p222 = scmp.ne.s32.totalorder %s214, %s216
      %p223 = scmp.eq.s32.totalorder %s40, 1
      %p224 = por %p222, %p223
      %p225 = scmp.ne.s32.totalorder %s216, %s217
      %p226 = scmp.eq.s32.totalorder %s40, 0
      %p227 = por %p225, %p226
      %p228 = scmp.ne.s32.totalorder %s216, %s217
      %p229 = scmp.eq.s32.totalorder %s41, 1
      %p230 = por %p228, %p229
      %p232 = scmp.ne.s32.totalorder %s217, %s231
      %p233 = scmp.eq.s32.totalorder %s41, 0
      %p234 = por %p232, %p233
      %s236 = sadd.s32 %s235, 1
      %p239 = scmp.eq.s32.totalorder %s35, 1
      %p240 = scmp.ne.s32.totalorder %s235, %s237
      %p241 = scmp.eq.s32.totalorder %s35, 0
      %p242 = por %p240, %p241
      %p243 = scmp.ne.s32.totalorder %s235, %s237
      %p244 = scmp.eq.s32.totalorder %s40, 1
      %p245 = por %p243, %p244
      %p246 = scmp.ne.s32.totalorder %s237, %s238
      %p247 = scmp.eq.s32.totalorder %s40, 0
      %p248 = por %p246, %p247
      %p249 = scmp.ne.s32.totalorder %s237, %s238
      %p250 = scmp.eq.s32.totalorder %s41, 1
      %p251 = por %p249, %p250
      %p253 = scmp.ne.s32.totalorder %s238, %s252
      %p254 = scmp.eq.s32.totalorder %s41, 0
      %p255 = por %p253, %p254
      %s257 = sadd.s32 %s256, 1
      %p260 = scmp.eq.s32.totalorder %s35, 1
      %p261 = scmp.ne.s32.totalorder %s256, %s258
      %p262 = scmp.eq.s32.totalorder %s35, 0
      %p263 = por %p261, %p262
      %p264 = scmp.ne.s32.totalorder %s256, %s258
      %p265 = scmp.eq.s32.totalorder %s40, 1
      %p266 = por %p264, %p265
      %p267 = scmp.ne.s32.totalorder %s258, %s259
      %p268 = scmp.eq.s32.totalorder %s40, 0
      %p269 = por %p267, %p268
      %p270 = scmp.ne.s32.totalorder %s258, %s259
      %p271 = scmp.eq.s32.totalorder %s41, 1
      %p272 = por %p270, %p271
      %p274 = scmp.ne.s32.totalorder %s259, %s273
      %p275 = scmp.eq.s32.totalorder %s41, 0
      %p276 = por %p274, %p275
      %s278 = sadd.s32 %s277, 1
      %p281 = scmp.eq.s32.totalorder %s35, 1
      %p282 = scmp.ne.s32.totalorder %s277, %s279
      %p283 = scmp.eq.s32.totalorder %s35, 0
      %p284 = por %p282, %p283
      %p285 = scmp.ne.s32.totalorder %s277, %s279
      %p286 = scmp.eq.s32.totalorder %s40, 1
      %p287 = por %p285, %p286
      %p288 = scmp.ne.s32.totalorder %s279, %s280
      %p289 = scmp.eq.s32.totalorder %s40, 0
      %p290 = por %p288, %p289
      %p291 = scmp.ne.s32.totalorder %s279, %s280
      %p292 = scmp.eq.s32.totalorder %s41, 1
      %p293 = por %p291, %p292
      %p295 = scmp.ne.s32.totalorder %s280, %s294
      %p296 = scmp.eq.s32.totalorder %s41, 0
      %p297 = por %p295, %p296
      %s299 = sadd.s32 %s298, 1
      %p302 = scmp.eq.s32.totalorder %s35, 1
      %p303 = scmp.ne.s32.totalorder %s298, %s300
      %p304 = scmp.eq.s32.totalorder %s35, 0
      %p305 = por %p303, %p304
      %p306 = scmp.ne.s32.totalorder %s298, %s300
      %p307 = scmp.eq.s32.totalorder %s40, 1
      %p308 = por %p306, %p307
      %p309 = scmp.ne.s32.totalorder %s300, %s301
      %p310 = scmp.eq.s32.totalorder %s40, 0
      %p311 = por %p309, %p310
      %p312 = scmp.ne.s32.totalorder %s300, %s301
      %p313 = scmp.eq.s32.totalorder %s41, 1
      %p314 = por %p312, %p313
      %p316 = scmp.ne.s32.totalorder %s301, %s315
      %p317 = scmp.eq.s32.totalorder %s41, 0
      %p318 = por %p316, %p317
      %s320 = sadd.s32 %s319, 1
      %p323 = scmp.eq.s32.totalorder %s35, 1
      %p324 = scmp.ne.s32.totalorder %s319, %s321
      %p325 = scmp.eq.s32.totalorder %s35, 0
      %p326 = por %p324, %p325
      %p327 = scmp.ne.s32.totalorder %s319, %s321
      %p328 = scmp.eq.s32.totalorder %s40, 1
      %p329 = por %p327, %p328
      %p330 = scmp.ne.s32.totalorder %s321, %s322
      %p331 = scmp.eq.s32.totalorder %s40, 0
      %p332 = por %p330, %p331
      %p333 = scmp.ne.s32.totalorder %s321, %s322
      %p334 = scmp.eq.s32.totalorder %s41, 1
      %p335 = por %p333, %p334
      %p337 = scmp.ne.s32.totalorder %s322, %s336
      %p338 = scmp.eq.s32.totalorder %s41, 0
      %p339 = por %p337, %p338
      %s341 = sadd.s32 %s340, 1
      %p344 = scmp.eq.s32.totalorder %s35, 1
      %p345 = scmp.ne.s32.totalorder %s340, %s342
      %p346 = scmp.eq.s32.totalorder %s35, 0
      %p347 = por %p345, %p346
      %p348 = scmp.ne.s32.totalorder %s340, %s342
      %p349 = scmp.eq.s32.totalorder %s40, 1
      %p350 = por %p348, %p349
      %p351 = scmp.ne.s32.totalorder %s342, %s343
      %p352 = scmp.eq.s32.totalorder %s40, 0
      %p353 = por %p351, %p352
      %p354 = scmp.ne.s32.totalorder %s342, %s343
      %p355 = scmp.eq.s32.totalorder %s41, 1
      %p356 = por %p354, %p355
      %p358 = scmp.ne.s32.totalorder %s343, %s357
      %p359 = scmp.eq.s32.totalorder %s41, 0
      %p360 = por %p358, %p359
      %s362 = sadd.s32 %s361, 1
      %p365 = scmp.eq.s32.totalorder %s35, 1
      %p366 = scmp.ne.s32.totalorder %s361, %s363
      %p367 = scmp.eq.s32.totalorder %s35, 0
      %p368 = por %p366, %p367
      %p369 = scmp.ne.s32.totalorder %s361, %s363
      %p370 = scmp.eq.s32.totalorder %s40, 1
      %p371 = por %p369, %p370
      %p372 = scmp.ne.s32.totalorder %s363, %s364
      %p373 = scmp.eq.s32.totalorder %s40, 0
      %p374 = por %p372, %p373
      %p375 = scmp.ne.s32.totalorder %s363, %s364
      %p376 = scmp.eq.s32.totalorder %s41, 1
      %p377 = por %p375, %p376
      %p379 = scmp.ne.s32.totalorder %s364, %s378
      %p380 = scmp.eq.s32.totalorder %s41, 0
      %p381 = por %p379, %p380
      %s383 = sadd.s32 %s382, 1
      %p386 = scmp.eq.s32.totalorder %s35, 1
      %p387 = scmp.ne.s32.totalorder %s382, %s384
      %p388 = scmp.eq.s32.totalorder %s35, 0
      %p389 = por %p387, %p388
      %p390 = scmp.ne.s32.totalorder %s382, %s384
      %p391 = scmp.eq.s32.totalorder %s40, 1
      %p392 = por %p390, %p391
      %p393 = scmp.ne.s32.totalorder %s384, %s385
      %p394 = scmp.eq.s32.totalorder %s40, 0
      %p395 = por %p393, %p394
      %p396 = scmp.ne.s32.totalorder %s384, %s385
      %p397 = scmp.eq.s32.totalorder %s41, 1
      %p398 = por %p396, %p397
      %p400 = scmp.ne.s32.totalorder %s385, %s399
      %p401 = scmp.eq.s32.totalorder %s41, 0
      %p402 = por %p400, %p401
      %s404 = sadd.s32 %s403, 1
      %p407 = scmp.eq.s32.totalorder %s35, 1
      %p408 = scmp.ne.s32.totalorder %s403, %s405
      %p409 = scmp.eq.s32.totalorder %s35, 0
      %p410 = por %p408, %p409
      %p411 = scmp.ne.s32.totalorder %s403, %s405
      %p412 = scmp.eq.s32.totalorder %s40, 1
      %p413 = por %p411, %p412
      %p414 = scmp.ne.s32.totalorder %s405, %s406
      %p415 = scmp.eq.s32.totalorder %s40, 0
      %p416 = por %p414, %p415
      %p417 = scmp.ne.s32.totalorder %s405, %s406
      %p418 = scmp.eq.s32.totalorder %s41, 1
      %p419 = por %p417, %p418
      %p421 = scmp.ne.s32.totalorder %s406, %s420
      %p422 = scmp.eq.s32.totalorder %s41, 0
      %p423 = por %p421, %p422
      %s425 = sadd.s32 %s424, 1
      %p428 = scmp.eq.s32.totalorder %s35, 1
      %p429 = scmp.ne.s32.totalorder %s424, %s426
      %p430 = scmp.eq.s32.totalorder %s35, 0
      %p431 = por %p429, %p430
      %p432 = scmp.ne.s32.totalorder %s424, %s426
      %p433 = scmp.eq.s32.totalorder %s40, 1
      %p434 = por %p432, %p433
      %p435 = scmp.ne.s32.totalorder %s426, %s427
      %p436 = scmp.eq.s32.totalorder %s40, 0
      %p437 = por %p435, %p436
      %p438 = scmp.ne.s32.totalorder %s426, %s427
      %p439 = scmp.eq.s32.totalorder %s41, 1
      %p440 = por %p438, %p439
      %p442 = scmp.ne.s32.totalorder %s427, %s441
      %p443 = scmp.eq.s32.totalorder %s41, 0
      %p444 = por %p442, %p443
      %s445 = ssub.s32 %s42, %s54
      %s446 = ssub.s32 %s43, %s50
      %s447 = sor.u32 %s445, %s446
      %p448 = scmp.eq.s32.totalorder %s447, 0
      %s450 = sadd.s32 %s449, 1
      %s451 = scalar_select %p448, %s449, %s450
      %p454 = pneg %p448
      %p455 = scmp.eq.s32.totalorder %s35, 1
      %p456 = por %p454, %p455
      %p457 = scmp.ne.s32.totalorder %s449, %s452
      %p458 = scmp.eq.s32.totalorder %s35, 0
      %p459 = por %p457, %p458
      %p460 = scmp.ne.s32.totalorder %s449, %s452
      %p461 = scmp.eq.s32.totalorder %s40, 1
      %p462 = por %p460, %p461
      %p463 = scmp.ne.s32.totalorder %s452, %s453
      %p464 = scmp.eq.s32.totalorder %s40, 0
      %p465 = por %p463, %p464
      %p466 = scmp.ne.s32.totalorder %s452, %s453
      %p467 = scmp.eq.s32.totalorder %s41, 1
      %p468 = por %p466, %p467
      %p470 = scmp.ne.s32.totalorder %s453, %s469
      %p471 = scmp.eq.s32.totalorder %s41, 0
      %p472 = por %p470, %p471
      %s473 = ssub.s32 %s42, %s54
      %s474 = ssub.s32 %s43, %s50
      %s475 = sor.u32 %s473, %s474
      %p476 = scmp.eq.s32.totalorder %s475, 0
      %s478 = sadd.s32 %s477, 1
      %s479 = scalar_select %p476, %s477, %s478
      %p482 = pneg %p476
      %p483 = scmp.eq.s32.totalorder %s35, 1
      %p484 = por %p482, %p483
      %p485 = scmp.ne.s32.totalorder %s477, %s480
      %p486 = scmp.eq.s32.totalorder %s35, 0
      %p487 = por %p485, %p486
      %p488 = scmp.ne.s32.totalorder %s477, %s480
      %p489 = scmp.eq.s32.totalorder %s40, 1
      %p490 = por %p488, %p489
      %p491 = scmp.ne.s32.totalorder %s480, %s481
      %p492 = scmp.eq.s32.totalorder %s40, 0
      %p493 = por %p491, %p492
      %p494 = scmp.ne.s32.totalorder %s480, %s481
      %p495 = scmp.eq.s32.totalorder %s41, 1
      %p496 = por %p494, %p495
      %p498 = scmp.ne.s32.totalorder %s481, %s497
      %p499 = scmp.eq.s32.totalorder %s41, 0
      %p500 = por %p498, %p499
      %p501 = scmp.le.s32.totalorder 1, %s35
      %p502 = scmp.lt.s32.totalorder %s35, 3
      %p503 = pnand %p501, %p502
      %p504 = pneg %p503
      // Predicated region
      $region9: #{tpu_custom_call.1} parent=5 // pred_check
        _
      $region10: #{tpu_custom_call.1} parent=5 // pred_check_branch
        %506 = sbr.rel (%p503) target = $region12
      $region11: #{tpu_custom_call.1} parent=5 // pred_region
        %s507 = ssub.s32 %s35, 1
        // Predicated region
        $region13: #{tpu_custom_call.1} parent=11 // pred_check
          %p508 = pneg %p122
        $region14: #{tpu_custom_call.1} parent=11 // pred_check_branch
          %510 = sbr.rel (%p508) target = $region16
        $region15: #{tpu_custom_call.1} parent=11 // pred_region
          _
        $region16: #{tpu_custom_call.1} parent=11 // pred_fallthru
          _
        // Predicated region
        $region17: #{tpu_custom_call.1} parent=11 // pred_check
          %p511 = pneg %p143
        $region18: #{tpu_custom_call.1} parent=11 // pred_check_branch
          %513 = sbr.rel (%p511) target = $region20
        $region19: #{tpu_custom_call.1} parent=11 // pred_region
          _
        $region20: #{tpu_custom_call.1} parent=11 // pred_fallthru
          _
        // Predicated region
        $region21: #{tpu_custom_call.1} parent=11 // pred_check
          %p514 = pneg %p164
        $region22: #{tpu_custom_call.1} parent=11 // pred_check_branch
          %516 = sbr.rel (%p514) target = $region24
        $region23: #{tpu_custom_call.1} parent=11 // pred_region
          %s518 = ssub.s32 256, 256
          %519 = vsyncadd [#allocation5], %s518
          %s520 = sshll.u32 [#allocation4], 4
          %s521 = int_to_ptr.vmem [resolvable:$true] %s520
          %526 = dma.hbm_to_vmem [thread:$0]  %s4, 256, %s521, [#allocation5], 64, 64, 4
        $region24: #{tpu_custom_call.1} parent=11 // pred_fallthru
          _
        // Predicated region
        $region25: #{tpu_custom_call.1} parent=11 // pred_check
          %p527 = pneg %p185
        $region26: #{tpu_custom_call.1} parent=11 // pred_check_branch
          %529 = sbr.rel (%p527) target = $region28
        $region27: #{tpu_custom_call.1} parent=11 // pred_region
          _
        $region28: #{tpu_custom_call.1} parent=11 // pred_fallthru
          _
        // Predicated region
        $region29: #{tpu_custom_call.1} parent=11 // pred_check
          %p530 = pneg %p206
        $region30: #{tpu_custom_call.1} parent=11 // pred_check_branch
          %532 = sbr.rel (%p530) target = $region32
        $region31: #{tpu_custom_call.1} parent=11 // pred_region
          %s534 = ssub.s32 256, 256
          %535 = vsyncadd [#allocation8], %s534
          %s536 = sshll.u32 [#allocation7], 4
          %s537 = int_to_ptr.vmem [resolvable:$true] %s536
          %542 = dma.hbm_to_vmem [thread:$0]  %s6, 256, %s537, [#allocation8], 64, 64, 4
        $region32: #{tpu_custom_call.1} parent=11 // pred_fallthru
          _
        // Predicated region
        $region33: #{tpu_custom_call.1} parent=11 // pred_check
          %p543 = pneg %p227
        $region34: #{tpu_custom_call.1} parent=11 // pred_check_branch
          %545 = sbr.rel (%p543) target = $region36
        $region35: #{tpu_custom_call.1} parent=11 // pred_region
          %s547 = ssub.s32 16, 16
          %548 = vsyncadd [#allocation8], %s547
          %s550 = sshll.u32 [#allocation9], 4
          %s551 = int_to_ptr.vmem [resolvable:$true] %s550
          %553 = dma.hbm_to_vmem [thread:$0]  %s7, 16, %s551, [#allocation8]
        $region36: #{tpu_custom_call.1} parent=11 // pred_fallthru
          _
        // Predicated region
        $region37: #{tpu_custom_call.1} parent=11 // pred_check
          %p554 = pneg %p248
        $region38: #{tpu_custom_call.1} parent=11 // pred_check_branch
          %556 = sbr.rel (%p554) target = $region40
        $region39: #{tpu_custom_call.1} parent=11 // pred_region
          %s558 = ssub.s32 256, 256
          %559 = vsyncadd [#allocation11], %s558
          %s560 = sshll.u32 [#allocation10], 4
          %s561 = int_to_ptr.vmem [resolvable:$true] %s560
          %566 = dma.hbm_to_vmem [thread:$0]  %s8, 256, %s561, [#allocation11], 64, 64, 4
        $region40: #{tpu_custom_call.1} parent=11 // pred_fallthru
          _
        // Predicated region
        $region41: #{tpu_custom_call.1} parent=11 // pred_check
          %p567 = pneg %p269
        $region42: #{tpu_custom_call.1} parent=11 // pred_check_branch
          %569 = sbr.rel (%p567) target = $region44
        $region43: #{tpu_custom_call.1} parent=11 // pred_region
          %s571 = ssub.s32 16, 16
          %572 = vsyncadd [#allocation11], %s571
          %s574 = sshll.u32 [#allocation12], 4
          %s575 = int_to_ptr.vmem [resolvable:$true] %s574
          %577 = dma.hbm_to_vmem [thread:$0]  %s9, 16, %s575, [#allocation11]
        $region44: #{tpu_custom_call.1} parent=11 // pred_fallthru
          _
        // Predicated region
        $region45: #{tpu_custom_call.1} parent=11 // pred_check
          %p578 = pneg %p290
        $region46: #{tpu_custom_call.1} parent=11 // pred_check_branch
          %580 = sbr.rel (%p578) target = $region48
        $region47: #{tpu_custom_call.1} parent=11 // pred_region
          _
        $region48: #{tpu_custom_call.1} parent=11 // pred_fallthru
          _
        // Predicated region
        $region49: #{tpu_custom_call.1} parent=11 // pred_check
          %p581 = pneg %p311
        $region50: #{tpu_custom_call.1} parent=11 // pred_check_branch
          %583 = sbr.rel (%p581) target = $region52
        $region51: #{tpu_custom_call.1} parent=11 // pred_region
          _
        $region52: #{tpu_custom_call.1} parent=11 // pred_fallthru
          _
        // Predicated region
        $region53: #{tpu_custom_call.1} parent=11 // pred_check
          %p584 = pneg %p332
        $region54: #{tpu_custom_call.1} parent=11 // pred_check_branch
          %586 = sbr.rel (%p584) target = $region56
        $region55: #{tpu_custom_call.1} parent=11 // pred_region
          _
        $region56: #{tpu_custom_call.1} parent=11 // pred_fallthru
          _
        // Predicated region
        $region57: #{tpu_custom_call.1} parent=11 // pred_check
          %p587 = pneg %p353
        $region58: #{tpu_custom_call.1} parent=11 // pred_check_branch
          %589 = sbr.rel (%p587) target = $region60
        $region59: #{tpu_custom_call.1} parent=11 // pred_region
          _
        $region60: #{tpu_custom_call.1} parent=11 // pred_fallthru
          _
        // Predicated region
        $region61: #{tpu_custom_call.1} parent=11 // pred_check
          %p590 = pneg %p374
        $region62: #{tpu_custom_call.1} parent=11 // pred_check_branch
          %592 = sbr.rel (%p590) target = $region64
        $region63: #{tpu_custom_call.1} parent=11 // pred_region
          _
        $region64: #{tpu_custom_call.1} parent=11 // pred_fallthru
          _
        // Predicated region
        $region65: #{tpu_custom_call.1} parent=11 // pred_check
          %p593 = pneg %p395
        $region66: #{tpu_custom_call.1} parent=11 // pred_check_branch
          %595 = sbr.rel (%p593) target = $region68
        $region67: #{tpu_custom_call.1} parent=11 // pred_region
          _
        $region68: #{tpu_custom_call.1} parent=11 // pred_fallthru
          _
        // Predicated region
        $region69: #{tpu_custom_call.1} parent=11 // pred_check
          %p596 = pneg %p416
        $region70: #{tpu_custom_call.1} parent=11 // pred_check_branch
          %598 = sbr.rel (%p596) target = $region72
        $region71: #{tpu_custom_call.1} parent=11 // pred_region
          _
        $region72: #{tpu_custom_call.1} parent=11 // pred_fallthru
          _
        // Predicated region
        $region73: #{tpu_custom_call.1} parent=11 // pred_check
          %p599 = pneg %p437
        $region74: #{tpu_custom_call.1} parent=11 // pred_check_branch
          %601 = sbr.rel (%p599) target = $region76
        $region75: #{tpu_custom_call.1} parent=11 // pred_region
          _
        $region76: #{tpu_custom_call.1} parent=11 // pred_fallthru
          _
      $region12: #{tpu_custom_call.1} parent=5 // pred_fallthru
        _
      %p602 = scmp.lt.s32.totalorder %s35, 2
      // Predicated region
      $region77: #{tpu_custom_call.1} parent=5 // pred_check
        %p603 = pneg %p602
      $region78: #{tpu_custom_call.1} parent=5 // pred_check_branch
        %605 = sbr.rel (%p603) target = $region80
      $region79: #{tpu_custom_call.1} parent=5 // pred_region
        // Predicated region
        $region81: #{tpu_custom_call.1} parent=79 // pred_check
          %p606 = pneg %p67
        $region82: #{tpu_custom_call.1} parent=79 // pred_check_branch
          %608 = sbr.rel (%p606) target = $region84
        $region83: #{tpu_custom_call.1} parent=79 // pred_region
          %p609 = scmp.lt.s32.totalorder %s42, 1
          %s610 = scalar_select %p609, %s42, 1
          %s611 = smul.addr %s610, 8
          %s612 = scalar_lea.vmem %s0, %s611
        $region84: #{tpu_custom_call.1} parent=79 // pred_fallthru
          _
        // Predicated region
        $region85: #{tpu_custom_call.1} parent=79 // pred_check
          %p613 = pneg %p95
        $region86: #{tpu_custom_call.1} parent=79 // pred_check_branch
          %615 = sbr.rel (%p613) target = $region88
        $region87: #{tpu_custom_call.1} parent=79 // pred_region
          %p616 = scmp.lt.s32.totalorder %s42, 1
          %s617 = scalar_select %p616, %s42, 1
          %p618 = scmp.lt.s32.totalorder %s43, 0
          %s619 = scalar_select %p618, %s43, 0
          %s620 = sadd.s32 %s619, %s617
          %s621 = smul.addr %s620, 8
          %s622 = scalar_lea.vmem %s1, %s621
        $region88: #{tpu_custom_call.1} parent=79 // pred_fallthru
          _
      $region80: #{tpu_custom_call.1} parent=5 // pred_fallthru
        _
      %p623 = scmp.le.s32.totalorder 1, %s35
      %p624 = scmp.lt.s32.totalorder %s35, 3
      %p625 = pnand %p623, %p624
      %p626 = pneg %p625
      // Predicated region
      $region89: #{tpu_custom_call.1} parent=5 // pred_check
        _
      $region90: #{tpu_custom_call.1} parent=5 // pred_check_branch
        %628 = sbr.rel (%p625) target = $region92
      $region91: #{tpu_custom_call.1} parent=5 // pred_region
        %s629 = ssub.s32 %s35, 1
        // Predicated region
        $region93: #{tpu_custom_call.1} parent=91 // pred_check
          %p630 = pneg %p164
        $region94: #{tpu_custom_call.1} parent=91 // pred_check_branch
          %632 = sbr.rel (%p630) target = $region96
        $region95: #{tpu_custom_call.1} parent=91 // pred_region
          %633 = dma.done [#allocation5], 256
        $region96: #{tpu_custom_call.1} parent=91 // pred_fallthru
          _
        // Predicated region
        $region97: #{tpu_custom_call.1} parent=91 // pred_check
          %p634 = pneg %p206
        $region98: #{tpu_custom_call.1} parent=91 // pred_check_branch
          %636 = sbr.rel (%p634) target = $region100
        $region99: #{tpu_custom_call.1} parent=91 // pred_region
          %637 = dma.done [#allocation8], 256
        $region100: #{tpu_custom_call.1} parent=91 // pred_fallthru
          _
        // Predicated region
        $region101: #{tpu_custom_call.1} parent=91 // pred_check
          %p638 = pneg %p227
        $region102: #{tpu_custom_call.1} parent=91 // pred_check_branch
          %640 = sbr.rel (%p638) target = $region104
        $region103: #{tpu_custom_call.1} parent=91 // pred_region
          %641 = dma.done [#allocation8], 16
        $region104: #{tpu_custom_call.1} parent=91 // pred_fallthru
          _
        // Predicated region
        $region105: #{tpu_custom_call.1} parent=91 // pred_check
          %p642 = pneg %p248
        $region106: #{tpu_custom_call.1} parent=91 // pred_check_branch
          %644 = sbr.rel (%p642) target = $region108
        $region107: #{tpu_custom_call.1} parent=91 // pred_region
          %645 = dma.done [#allocation11], 256
        $region108: #{tpu_custom_call.1} parent=91 // pred_fallthru
          _
        // Predicated region
        $region109: #{tpu_custom_call.1} parent=91 // pred_check
          %p646 = pneg %p269
        $region110: #{tpu_custom_call.1} parent=91 // pred_check_branch
          %648 = sbr.rel (%p646) target = $region112
        $region111: #{tpu_custom_call.1} parent=91 // pred_region
          %649 = dma.done [#allocation11], 16
        $region112: #{tpu_custom_call.1} parent=91 // pred_fallthru
          _
        %p650 = scmp.lt.s32.totalorder %s44, 1
        %s651 = scalar_select %p650, %s44, 1
        %s652 = smul.addr %s651, 8
        %s653 = scalar_lea.vmem %s0, %s652
        %p654 = pneg %p73
        %p655 = pneg %p70
        %p656 = scmp.lt.s32.totalorder %s44, 1
        %s657 = scalar_select %p656, %s44, 1
        %p658 = scmp.lt.s32.totalorder %s45, 0
        %s659 = scalar_select %p658, %s45, 0
        %s660 = sadd.s32 %s659, %s657
        %s661 = smul.addr %s660, 8
        %s662 = scalar_lea.vmem %s1, %s661
        %p663 = pneg %p101
        %p664 = pneg %p98
        %p665 = pneg %p122
        %p666 = pneg %p119
        %p667 = pneg %p143
        %p668 = pneg %p140
        %p669 = pneg %p164
        %p670 = pneg %p161
        %p671 = pneg %p185
        %p672 = pneg %p182
        %p673 = pneg %p206
        %p674 = pneg %p203
        %p675 = pneg %p227
        %p676 = pneg %p224
        %p677 = pneg %p248
        %p678 = pneg %p245
        %p679 = pneg %p269
        %p680 = pneg %p266
        %p681 = pneg %p290
        %p682 = pneg %p287
        %p683 = pneg %p311
        %p684 = pneg %p308
        %p685 = pneg %p332
        %p686 = pneg %p329
        %p687 = pneg %p353
        %p688 = pneg %p350
        %p689 = pneg %p374
        %p690 = pneg %p371
        %p691 = pneg %p395
        %p692 = pneg %p392
        %p693 = pneg %p416
        %p694 = pneg %p413
        %p695 = pneg %p437
        %p696 = pneg %p434
        %p697 = pneg %p465
        %p698 = pneg %p462
        %s699 = sand.u32 %s452, 1
        %s700 = scalar_lea.sflag [#allocation6], %s699
        %s701 = sand.u32 %s452, 1
        %s702 = smul.addr %s701, 8
        %s703 = scalar_lea.vmem [#allocation13], %s702
        %p704 = pneg %p493
        %p705 = pneg %p490
        %s706 = sand.u32 %s480, 1
        %s707 = scalar_lea.sflag [#allocation15], %s706
        %s708 = sand.u32 %s480, 1
        %s709 = smul.addr %s708, 16
        %s710 = scalar_lea.vmem [#allocation14], %s709
        %p711 = scmp.lt.s32.totalorder %s44, 1
        %s712 = scalar_select %p711, %s44, 1
        %s713 = smul.addr %s712, 8
        %s714 = scalar_lea.vmem %s0, %s713
        %p715 = scmp.lt.s32.totalorder %s44, 1
        %s716 = scalar_select %p715, %s44, 1
        %p717 = scmp.lt.s32.totalorder %s45, 0
        %s718 = scalar_select %p717, %s45, 0
        %s719 = sadd.s32 %s718, %s716
        %s720 = smul.addr %s719, 8
        %s721 = scalar_lea.vmem %s1, %s720
        %p723 = scmp.eq.s32.totalorder %s45, 0
        // Predicated region
        $region113: #{tpu_custom_call.1} parent=91 // pred_check
          %p724 = pneg %p723
        $region114: #{tpu_custom_call.1} parent=91 // pred_check_branch
          %726 = sbr.rel (%p724) target = $region116
        $region115: #{tpu_custom_call.1} parent=91 // pred_region
          %v727 = vld [vmem:[%s714] sm:$0xff]
          %v728 = vpack.c.bf16 %v727, %v727
          %v729 = vld [vmem:[#allocation4] sm:$0xf]
          %v730 = vld [vmem:[#allocation4 + $0x4] sm:$0xf]
          %v731 = vld [vmem:[#allocation4 + $0x8] sm:$0xf]
          %v732 = vld [vmem:[#allocation4 + $0xc] sm:$0xf]
          %v733 = vld [vmem:[%s5] sm:$0x1]
          %v735 = vlaneseq
          %v736 = vshrl.u32 %v735, 7
          %v737 = vsub.s32 0, %v736
          %v738 = vrot.slane %v733, %v737
          %v744 = vunpack.c.l.b16 %v729
          %v745 = vunpack.c.l.b16 %v730
          %v746 = vunpack.c.l.b16 %v731
          %v747 = vunpack.c.l.b16 %v732
          %v748 = vpack.c.b16 %v745, %v744
          %v749 = vpack.c.b16 %v747, %v746
          %vm752 = vcmask 261120
          %v754 = vsel %vm752, %v728, 0
          %756 = vmatprep.subr.bf16.mxu0 0
          %757 = vmatpush1.bf16.msra.mxu0 %v748
          %758 = vmatprep.subr.bf16.mxu0 0
          %759 = vmatpush1.bf16.msra.mxu0 %v749
          %760 = vmatprep.subr.bf16.mxu0 0
          %761 = vmatpush1.bf16.msra.mxu0 0
          %762 = vmatprep.subr.bf16.mxu0 0
          %763 = vmatpush1.bf16.msra.mxu0 0
          %764 = vmatprep.subr.bf16.mxu0 0
          %765 = vmatpush1.bf16.msra.mxu0 0
          %766 = vmatprep.subr.bf16.mxu0 0
          %767 = vmatpush1.bf16.msra.mxu0 0
          %768 = vmatprep.subr.bf16.mxu0 0
          %769 = vmatpush1.bf16.msra.mxu0 0
          %770 = vmatprep.subr.bf16.mxu0 0
          %771 = vmatpush1.bf16.msra.mxu0 0
          %772 = vmatprep.subr.bf16.mxu0 0
          %773 = vmatpush1.bf16.msra.mxu0 0
          %774 = vmatprep.subr.bf16.mxu0 0
          %775 = vmatpush1.bf16.msra.mxu0 0
          %776 = vmatprep.subr.bf16.mxu0 0
          %777 = vmatpush1.bf16.msra.mxu0 0
          %778 = vmatprep.subr.bf16.mxu0 0
          %779 = vmatpush1.bf16.msra.mxu0 0
          %780 = vmatprep.subr.bf16.mxu0 0
          %781 = vmatpush1.bf16.msra.mxu0 0
          %782 = vmatprep.subr.bf16.mxu0 0
          %783 = vmatpush1.bf16.msra.mxu0 0
          %784 = vmatprep.subr.bf16.mxu0 0
          %785 = vmatpush1.bf16.msra.mxu0 0
          %786 = vmatprep.subr.bf16.mxu0 0
          %787 = vmatpush1.bf16.msra.mxu0 0
          %788 = vmatprep.mubr.bf16.mxu0 0
          %789 = vmatmul.mubr.bf16.gmra.mrb[0].mxu0 %v754
          %v790 = vpop.f32.mrb[0].mxu0
          %v791 = vadd.f32 %v738, %v790
          %v792 = vpop.f32.mrb[0].mxu0
          %v793 = vpop.f32.mrb[0].mxu0
          %v794 = vpop.f32.mrb[0].mxu0
          %795 = vdwg.mxu0
          %v796 = vld [vmem:[#allocation7] sm:$0xf]
          %v797 = vld [vmem:[#allocation7 + $0x4] sm:$0xf]
          %v798 = vld [vmem:[#allocation7 + $0x8] sm:$0xf]
          %v799 = vld [vmem:[#allocation7 + $0xc] sm:$0xf]
          %v800 = vld [vmem:[#allocation9] sm:$0x1]
          %v802 = vlaneseq
          %v803 = vshrl.u32 %v802, 7
          %v804 = vsub.s32 0, %v803
          %v805 = vrot.slane %v800, %v804
          %v811 = vunpack.c.l.b16 %v796
          %v812 = vunpack.c.l.b16 %v797
          %v813 = vunpack.c.l.b16 %v798
          %v814 = vunpack.c.l.b16 %v799
          %v815 = vpack.c.b16 %v812, %v811
          %v816 = vpack.c.b16 %v814, %v813
          %819 = vmatprep.subr.bf16.mxu0 0
          %820 = vmatpush1.bf16.msra.mxu0 %v815
          %821 = vmatprep.subr.bf16.mxu0 0
          %822 = vmatpush1.bf16.msra.mxu0 %v816
          %823 = vmatprep.subr.bf16.mxu0 0
          %824 = vmatpush1.bf16.msra.mxu0 0
          %825 = vmatprep.subr.bf16.mxu0 0
          %826 = vmatpush1.bf16.msra.mxu0 0
          %827 = vmatprep.subr.bf16.mxu0 0
          %828 = vmatpush1.bf16.msra.mxu0 0
          %829 = vmatprep.subr.bf16.mxu0 0
          %830 = vmatpush1.bf16.msra.mxu0 0
          %831 = vmatprep.subr.bf16.mxu0 0
          %832 = vmatpush1.bf16.msra.mxu0 0
          %833 = vmatprep.subr.bf16.mxu0 0
          %834 = vmatpush1.bf16.msra.mxu0 0
          %835 = vmatprep.subr.bf16.mxu0 0
          %836 = vmatpush1.bf16.msra.mxu0 0
          %837 = vmatprep.subr.bf16.mxu0 0
          %838 = vmatpush1.bf16.msra.mxu0 0
          %839 = vmatprep.subr.bf16.mxu0 0
          %840 = vmatpush1.bf16.msra.mxu0 0
          %841 = vmatprep.subr.bf16.mxu0 0
          %842 = vmatpush1.bf16.msra.mxu0 0
          %843 = vmatprep.subr.bf16.mxu0 0
          %844 = vmatpush1.bf16.msra.mxu0 0
          %845 = vmatprep.subr.bf16.mxu0 0
          %846 = vmatpush1.bf16.msra.mxu0 0
          %847 = vmatprep.subr.bf16.mxu0 0
          %848 = vmatpush1.bf16.msra.mxu0 0
          %849 = vmatprep.subr.bf16.mxu0 0
          %850 = vmatpush1.bf16.msra.mxu0 0
          %851 = vmatprep.mubr.bf16.mxu0 0
          %852 = vmatmul.mubr.bf16.gmra.mrb[0].mxu0 %v754
          %v853 = vpop.f32.mrb[0].mxu0
          %v854 = vadd.f32 %v805, %v853
          %v855 = vpop.f32.mrb[0].mxu0
          %v856 = vpop.f32.mrb[0].mxu0
          %v857 = vpop.f32.mrb[0].mxu0
          %858 = vdwg.mxu0
          %860 = vrot.lane.b32.xlu0 %v791, 120
          %v861 = vpop.permute.xlu0 %860
          %863 = vrot.lane.b32.xlu0 %v791, 112
          %v864 = vpop.permute.xlu0 %863
          %866 = vrot.lane.b32.xlu0 %v791, 104
          %v867 = vpop.permute.xlu0 %866
          %v869 = vpack.c.bf16 %v791, %v791
          %v870 = vpack.c.bf16 %v861, %v861
          %v871 = vpack.c.bf16 %v864, %v864
          %v872 = vpack.c.bf16 %v867, %v867
          %vm873 = vcmask 60416
          %874 = vst.msk [vmem:[#allocation2] sm:$0xf] %vm873, %v869
          %875 = vst.msk [vmem:[#allocation2 + $0x4] sm:$0xf] %vm873, %v870
          %876 = vst.msk [vmem:[#allocation2 + $0x8] sm:$0xf] %vm873, %v871
          %877 = vst.msk [vmem:[#allocation2 + $0xc] sm:$0xf] %vm873, %v872
          %879 = vrot.lane.b32.xlu0 %v854, 120
          %v880 = vpop.permute.xlu0 %879
          %882 = vrot.lane.b32.xlu0 %v854, 112
          %v883 = vpop.permute.xlu0 %882
          %885 = vrot.lane.b32.xlu0 %v854, 104
          %v886 = vpop.permute.xlu0 %885
          %v888 = vpack.c.bf16 %v854, %v854
          %v889 = vpack.c.bf16 %v880, %v880
          %v890 = vpack.c.bf16 %v883, %v883
          %v891 = vpack.c.bf16 %v886, %v886
          %892 = vst.msk [vmem:[#allocation3] sm:$0xf] %vm873, %v888
          %893 = vst.msk [vmem:[#allocation3 + $0x4] sm:$0xf] %vm873, %v889
          %894 = vst.msk [vmem:[#allocation3 + $0x8] sm:$0xf] %vm873, %v890
          %895 = vst.msk [vmem:[#allocation3 + $0xc] sm:$0xf] %vm873, %v891
        $region116: #{tpu_custom_call.1} parent=91 // pred_fallthru
          _
        %v896 = vld [vmem:[%s721] sm:$0xff]
        %v897 = vpack.c.bf16 %v896, %v896
        %v898 = vld [vmem:[%s2] sm:$0xf]
        %v899 = vld [vmem:[%s2 + $0x4] sm:$0xf]
        %v900 = vld [vmem:[%s2 + $0x8] sm:$0xf]
        %v901 = vld [vmem:[%s2 + $0xc] sm:$0xf]
        %v902 = vld [vmem:[%s3] sm:$0x1]
        %v904 = vlaneseq
        %v905 = vshrl.u32 %v904, 7
        %v906 = vsub.s32 0, %v905
        %v907 = vrot.slane %v902, %v906
        %v913 = vunpack.c.l.b16 %v898
        %v914 = vunpack.c.l.b16 %v899
        %v915 = vunpack.c.l.b16 %v900
        %v916 = vunpack.c.l.b16 %v901
        %v917 = vpack.c.b16 %v914, %v913
        %v918 = vpack.c.b16 %v916, %v915
        %vm921 = vcmask 261120
        %v923 = vsel %vm921, %v897, 0
        %925 = vmatprep.subr.bf16.mxu0 0
        %926 = vmatpush1.bf16.msra.mxu0 %v917
        %927 = vmatprep.subr.bf16.mxu0 0
        %928 = vmatpush1.bf16.msra.mxu0 %v918
        %929 = vmatprep.subr.bf16.mxu0 0
        %930 = vmatpush1.bf16.msra.mxu0 0
        %931 = vmatprep.subr.bf16.mxu0 0
        %932 = vmatpush1.bf16.msra.mxu0 0
        %933 = vmatprep.subr.bf16.mxu0 0
        %934 = vmatpush1.bf16.msra.mxu0 0
        %935 = vmatprep.subr.bf16.mxu0 0
        %936 = vmatpush1.bf16.msra.mxu0 0
        %937 = vmatprep.subr.bf16.mxu0 0
        %938 = vmatpush1.bf16.msra.mxu0 0
        %939 = vmatprep.subr.bf16.mxu0 0
        %940 = vmatpush1.bf16.msra.mxu0 0
        %941 = vmatprep.subr.bf16.mxu0 0
        %942 = vmatpush1.bf16.msra.mxu0 0
        %943 = vmatprep.subr.bf16.mxu0 0
        %944 = vmatpush1.bf16.msra.mxu0 0
        %945 = vmatprep.subr.bf16.mxu0 0
        %946 = vmatpush1.bf16.msra.mxu0 0
        %947 = vmatprep.subr.bf16.mxu0 0
        %948 = vmatpush1.bf16.msra.mxu0 0
        %949 = vmatprep.subr.bf16.mxu0 0
        %950 = vmatpush1.bf16.msra.mxu0 0
        %951 = vmatprep.subr.bf16.mxu0 0
        %952 = vmatpush1.bf16.msra.mxu0 0
        %953 = vmatprep.subr.bf16.mxu0 0
        %954 = vmatpush1.bf16.msra.mxu0 0
        %955 = vmatprep.subr.bf16.mxu0 0
        %956 = vmatpush1.bf16.msra.mxu0 0
        %957 = vmatprep.mubr.bf16.mxu0 0
        %958 = vmatmul.mubr.bf16.gmra.mrb[0].mxu0 %v923
        %v959 = vpop.f32.mrb[0].mxu0
        %v960 = vadd.f32 %v907, %v959
        %v961 = vpop.f32.mrb[0].mxu0
        %v962 = vpop.f32.mrb[0].mxu0
        %v963 = vpop.f32.mrb[0].mxu0
        %964 = vdwg.mxu0
        %v965 = vmul.f32 %v960, 0.35355338
        %967 = vrot.lane.b32.xlu0 %v965, 120
        %v968 = vpop.permute.xlu0 %967
        %970 = vrot.lane.b32.xlu0 %v965, 112
        %v971 = vpop.permute.xlu0 %970
        %973 = vrot.lane.b32.xlu0 %v965, 104
        %v974 = vpop.permute.xlu0 %973
        %v976 = vpack.c.bf16 %v965, %v965
        %v977 = vpack.c.bf16 %v968, %v968
        %v978 = vpack.c.bf16 %v971, %v971
        %v979 = vpack.c.bf16 %v974, %v974
        %v980 = vld [vmem:[#allocation2] sm:$0xf]
        %v981 = vld [vmem:[#allocation2 + $0x4] sm:$0xf]
        %v982 = vld [vmem:[#allocation2 + $0x8] sm:$0xf]
        %v983 = vld [vmem:[#allocation2 + $0xc] sm:$0xf]
        %vm984 = vcmask 64512
        %v986 = vsel %vm984, %v976, 0
        %v989 = vsel %vm984, %v980, 0
        %991 = vmatprep.subr.bf16.mxu0 0
        %992 = vmatpush1.bf16.xpose.msra.mxu0 %v989
        %993 = vmatprep.subr.bf16.mxu0 0
        %994 = vmatpush1.bf16.xpose.msra.mxu0 0
        %995 = vmatprep.subr.bf16.mxu0 0
        %996 = vmatpush1.bf16.xpose.msra.mxu0 0
        %997 = vmatprep.subr.bf16.mxu0 0
        %998 = vmatpush1.bf16.xpose.msra.mxu0 0
        %999 = vmatprep.subr.bf16.mxu0 0
        %1000 = vmatpush1.bf16.xpose.msra.mxu0 0
        %1001 = vmatprep.subr.bf16.mxu0 0
        %1002 = vmatpush1.bf16.xpose.msra.mxu0 0
        %1003 = vmatprep.subr.bf16.mxu0 0
        %1004 = vmatpush1.bf16.xpose.msra.mxu0 0
        %1005 = vmatprep.subr.bf16.mxu0 0
        %1006 = vmatpush1.bf16.xpose.msra.mxu0 0
        %1007 = vmatprep.subr.bf16.mxu0 0
        %1008 = vmatpush1.bf16.xpose.msra.mxu0 0
        %1009 = vmatprep.subr.bf16.mxu0 0
        %1010 = vmatpush1.bf16.xpose.msra.mxu0 0
        %1011 = vmatprep.subr.bf16.mxu0 0
        %1012 = vmatpush1.bf16.xpose.msra.mxu0 0
        %1013 = vmatprep.subr.bf16.mxu0 0
        %1014 = vmatpush1.bf16.xpose.msra.mxu0 0
        %1015 = vmatprep.subr.bf16.mxu0 0
        %1016 = vmatpush1.bf16.xpose.msra.mxu0 0
        %1017 = vmatprep.subr.bf16.mxu0 0
        %1018 = vmatpush1.bf16.xpose.msra.mxu0 0
        %1019 = vmatprep.subr.bf16.mxu0 0
        %1020 = vmatpush1.bf16.xpose.msra.mxu0 0
        %1021 = vmatprep.subr.bf16.mxu0 0
        %1022 = vmatpush1.bf16.xpose.msra.mxu0 0
        %1023 = vmatprep.mubr.bf16.mxu0 0
        %1024 = vmatmul.mubr.bf16.gmra.mrb[0].mxu0 %v986
        %v1025 = vpop.f32.mrb[0].mxu0
        %v1026 = vadd.f32 0.0, %v1025
        %v1027 = vpop.f32.mrb[0].mxu0
        %v1028 = vpop.f32.mrb[0].mxu0
        %v1029 = vpop.f32.mrb[0].mxu0
        %1030 = vdwg.mxu0
        %v1032 = vsel %vm984, %v977, 0
        %v1035 = vsel %vm984, %v981, 0
        %1037 = vmatprep.subr.bf16.mxu0 0
        %1038 = vmatpush1.bf16.xpose.msra.mxu0 %v1035
        %1039 = vmatprep.subr.bf16.mxu0 0
        %1040 = vmatpush1.bf16.xpose.msra.mxu0 0
        %1041 = vmatprep.subr.bf16.mxu0 0
        %1042 = vmatpush1.bf16.xpose.msra.mxu0 0
        %1043 = vmatprep.subr.bf16.mxu0 0
        %1044 = vmatpush1.bf16.xpose.msra.mxu0 0
        %1045 = vmatprep.subr.bf16.mxu0 0
        %1046 = vmatpush1.bf16.xpose.msra.mxu0 0
        %1047 = vmatprep.subr.bf16.mxu0 0
        %1048 = vmatpush1.bf16.xpose.msra.mxu0 0
        %1049 = vmatprep.subr.bf16.mxu0 0
        %1050 = vmatpush1.bf16.xpose.msra.mxu0 0
        %1051 = vmatprep.subr.bf16.mxu0 0
        %1052 = vmatpush1.bf16.xpose.msra.mxu0 0
        %1053 = vmatprep.subr.bf16.mxu0 0
        %1054 = vmatpush1.bf16.xpose.msra.mxu0 0
        %1055 = vmatprep.subr.bf16.mxu0 0
        %1056 = vmatpush1.bf16.xpose.msra.mxu0 0
        %1057 = vmatprep.subr.bf16.mxu0 0
        %1058 = vmatpush1.bf16.xpose.msra.mxu0 0
        %1059 = vmatprep.subr.bf16.mxu0 0
        %1060 = vmatpush1.bf16.xpose.msra.mxu0 0
        %1061 = vmatprep.subr.bf16.mxu0 0
        %1062 = vmatpush1.bf16.xpose.msra.mxu0 0
        %1063 = vmatprep.subr.bf16.mxu0 0
        %1064 = vmatpush1.bf16.xpose.msra.mxu0 0
        %1065 = vmatprep.subr.bf16.mxu0 0
        %1066 = vmatpush1.bf16.xpose.msra.mxu0 0
        %1067 = vmatprep.subr.bf16.mxu0 0
        %1068 = vmatpush1.bf16.xpose.msra.mxu0 0
        %1069 = vmatprep.mubr.bf16.mxu0 0
        %1070 = vmatmul.mubr.bf16.gmra.mrb[0].mxu0 %v1032
        %v1071 = vpop.f32.mrb[0].mxu0
        %v1072 = vadd.f32 0.0, %v1071
        %v1073 = vpop.f32.mrb[0].mxu0
        %v1074 = vpop.f32.mrb[0].mxu0
        %v1075 = vpop.f32.mrb[0].mxu0
        %1076 = vdwg.mxu0
        %v1078 = vsel %vm984, %v978, 0
        %v1081 = vsel %vm984, %v982, 0
        %1083 = vmatprep.subr.bf16.mxu0 0
        %1084 = vmatpush1.bf16.xpose.msra.mxu0 %v1081
        %1085 = vmatprep.subr.bf16.mxu0 0
        %1086 = vmatpush1.bf16.xpose.msra.mxu0 0
        %1087 = vmatprep.subr.bf16.mxu0 0
        %1088 = vmatpush1.bf16.xpose.msra.mxu0 0
        %1089 = vmatprep.subr.bf16.mxu0 0
        %1090 = vmatpush1.bf16.xpose.msra.mxu0 0
        %1091 = vmatprep.subr.bf16.mxu0 0
        %1092 = vmatpush1.bf16.xpose.msra.mxu0 0
        %1093 = vmatprep.subr.bf16.mxu0 0
        %1094 = vmatpush1.bf16.xpose.msra.mxu0 0
        %1095 = vmatprep.subr.bf16.mxu0 0
        %1096 = vmatpush1.bf16.xpose.msra.mxu0 0
        %1097 = vmatprep.subr.bf16.mxu0 0
        %1098 = vmatpush1.bf16.xpose.msra.mxu0 0
        %1099 = vmatprep.subr.bf16.mxu0 0
        %1100 = vmatpush1.bf16.xpose.msra.mxu0 0
        %1101 = vmatprep.subr.bf16.mxu0 0
        %1102 = vmatpush1.bf16.xpose.msra.mxu0 0
        %1103 = vmatprep.subr.bf16.mxu0 0
        %1104 = vmatpush1.bf16.xpose.msra.mxu0 0
        %1105 = vmatprep.subr.bf16.mxu0 0
        %1106 = vmatpush1.bf16.xpose.msra.mxu0 0
        %1107 = vmatprep.subr.bf16.mxu0 0
        %1108 = vmatpush1.bf16.xpose.msra.mxu0 0
        %1109 = vmatprep.subr.bf16.mxu0 0
        %1110 = vmatpush1.bf16.xpose.msra.mxu0 0
        %1111 = vmatprep.subr.bf16.mxu0 0
        %1112 = vmatpush1.bf16.xpose.msra.mxu0 0
        %1113 = vmatprep.subr.bf16.mxu0 0
        %1114 = vmatpush1.bf16.xpose.msra.mxu0 0
        %1115 = vmatprep.mubr.bf16.mxu0 0
        %1116 = vmatmul.mubr.bf16.gmra.mrb[0].mxu0 %v1078
        %v1117 = vpop.f32.mrb[0].mxu0
        %v1118 = vadd.f32 0.0, %v1117
        %v1119 = vpop.f32.mrb[0].mxu0
        %v1120 = vpop.f32.mrb[0].mxu0
        %v1121 = vpop.f32.mrb[0].mxu0
        %1122 = vdwg.mxu0
        %v1124 = vsel %vm984, %v979, 0
        %v1127 = vsel %vm984, %v983, 0
        %1129 = vmatprep.subr.bf16.mxu0 0
        %1130 = vmatpush1.bf16.xpose.msra.mxu0 %v1127
        %1131 = vmatprep.subr.bf16.mxu0 0
        %1132 = vmatpush1.bf16.xpose.msra.mxu0 0
        %1133 = vmatprep.subr.bf16.mxu0 0
        %1134 = vmatpush1.bf16.xpose.msra.mxu0 0
        %1135 = vmatprep.subr.bf16.mxu0 0
        %1136 = vmatpush1.bf16.xpose.msra.mxu0 0
        %1137 = vmatprep.subr.bf16.mxu0 0
        %1138 = vmatpush1.bf16.xpose.msra.mxu0 0
        %1139 = vmatprep.subr.bf16.mxu0 0
        %1140 = vmatpush1.bf16.xpose.msra.mxu0 0
        %1141 = vmatprep.subr.bf16.mxu0 0
        %1142 = vmatpush1.bf16.xpose.msra.mxu0 0
        %1143 = vmatprep.subr.bf16.mxu0 0
        %1144 = vmatpush1.bf16.xpose.msra.mxu0 0
        %1145 = vmatprep.subr.bf16.mxu0 0
        %1146 = vmatpush1.bf16.xpose.msra.mxu0 0
        %1147 = vmatprep.subr.bf16.mxu0 0
        %1148 = vmatpush1.bf16.xpose.msra.mxu0 0
        %1149 = vmatprep.subr.bf16.mxu0 0
        %1150 = vmatpush1.bf16.xpose.msra.mxu0 0
        %1151 = vmatprep.subr.bf16.mxu0 0
        %1152 = vmatpush1.bf16.xpose.msra.mxu0 0
        %1153 = vmatprep.subr.bf16.mxu0 0
        %1154 = vmatpush1.bf16.xpose.msra.mxu0 0
        %1155 = vmatprep.subr.bf16.mxu0 0
        %1156 = vmatpush1.bf16.xpose.msra.mxu0 0
        %1157 = vmatprep.subr.bf16.mxu0 0
        %1158 = vmatpush1.bf16.xpose.msra.mxu0 0
        %1159 = vmatprep.subr.bf16.mxu0 0
        %1160 = vmatpush1.bf16.xpose.msra.mxu0 0
        %1161 = vmatprep.mubr.bf16.mxu0 0
        %1162 = vmatmul.mubr.bf16.gmra.mrb[0].mxu0 %v1124
        %v1163 = vpop.f32.mrb[0].mxu0
        %v1164 = vadd.f32 0.0, %v1163
        %v1165 = vpop.f32.mrb[0].mxu0
        %v1166 = vpop.f32.mrb[0].mxu0
        %v1167 = vpop.f32.mrb[0].mxu0
        %1168 = vdwg.mxu0
        %v1169 = vsel %vm984, %v1026, -inf
        %1170 = vmax.xlane.f32.xlu0 %v1169
        %v1171 = vpop.xlane.xlu0 %1170
        %v1172 = vsel %vm984, %v1072, -inf
        %1173 = vmax.xlane.f32.xlu0 %v1172
        %v1174 = vpop.xlane.xlu0 %1173
        %v1175 = vsel %vm984, %v1118, -inf
        %1176 = vmax.xlane.f32.xlu0 %v1175
        %v1177 = vpop.xlane.xlu0 %1176
        %v1178 = vsel %vm984, %v1164, -inf
        %1179 = vmax.xlane.f32.xlu0 %v1178
        %v1180 = vpop.xlane.xlu0 %1179
        %v1181 = vsub.f32 %v1026, %v1171
        %v1182 = vsub.f32 %v1072, %v1174
        %v1183 = vsub.f32 %v1118, %v1177
        %v1184 = vsub.f32 %v1164, %v1180
        %v1185 = vmul.f32 %v1181, 1.442695
        %v1186 = vpow.pop %v1185
        %v1187 = vmul.f32 %v1182, 1.442695
        %v1188 = vpow.pop %v1187
        %v1189 = vmul.f32 %v1183, 1.442695
        %v1190 = vpow.pop %v1189
        %v1191 = vmul.f32 %v1184, 1.442695
        %v1192 = vpow.pop %v1191
        %v1193 = vsel %vm984, %v1186, 0.0
        %1194 = vadd.xlane.f32.xlu0 %v1193
        %v1195 = vpop.xlane.xlu0 %1194
        %v1196 = vsel %vm984, %v1188, 0.0
        %1197 = vadd.xlane.f32.xlu0 %v1196
        %v1198 = vpop.xlane.xlu0 %1197
        %v1199 = vsel %vm984, %v1190, 0.0
        %1200 = vadd.xlane.f32.xlu0 %v1199
        %v1201 = vpop.xlane.xlu0 %1200
        %v1202 = vsel %vm984, %v1192, 0.0
        %1203 = vadd.xlane.f32.xlu0 %v1202
        %v1204 = vpop.xlane.xlu0 %1203
        %v1205 = vrcp.pop %v1195
        %v1206 = vrcp.pop %v1198
        %v1207 = vrcp.pop %v1201
        %v1208 = vrcp.pop %v1204
        %v1209 = vmul.f32 %v1186, %v1205
        %v1210 = vmul.f32 %v1188, %v1206
        %v1211 = vmul.f32 %v1190, %v1207
        %v1212 = vmul.f32 %v1192, %v1208
        %v1213 = vpack.c.bf16 %v1209, %v1209
        %v1214 = vpack.c.bf16 %v1210, %v1210
        %v1215 = vpack.c.bf16 %v1211, %v1211
        %v1216 = vpack.c.bf16 %v1212, %v1212
        %vm1217 = vcmask 60416
        %1218 = vst.msk [vmem:[%s710] sm:$0xf] %vm1217, %v1213
        %1219 = vst.msk [vmem:[%s710 + $0x4] sm:$0xf] %vm1217, %v1214
        %1220 = vst.msk [vmem:[%s710 + $0x8] sm:$0xf] %vm1217, %v1215
        %1221 = vst.msk [vmem:[%s710 + $0xc] sm:$0xf] %vm1217, %v1216
        %v1222 = vld [vmem:[#allocation3] sm:$0xf]
        %v1223 = vld [vmem:[#allocation3 + $0x4] sm:$0xf]
        %v1224 = vld [vmem:[#allocation3 + $0x8] sm:$0xf]
        %v1225 = vld [vmem:[#allocation3 + $0xc] sm:$0xf]
        %v1227 = vsel %vm984, %v1213, 0
        %vm1229 = vcmask 1043456
        %v1231 = vsel %vm1229, %v1222, 0
        %1233 = vmatprep.subr.bf16.mxu0 0
        %1234 = vmatpush1.bf16.msra.mxu0 %v1231
        %1235 = vmatprep.subr.bf16.mxu0 0
        %1236 = vmatpush1.bf16.msra.mxu0 0
        %1237 = vmatprep.subr.bf16.mxu0 0
        %1238 = vmatpush1.bf16.msra.mxu0 0
        %1239 = vmatprep.subr.bf16.mxu0 0
        %1240 = vmatpush1.bf16.msra.mxu0 0
        %1241 = vmatprep.subr.bf16.mxu0 0
        %1242 = vmatpush1.bf16.msra.mxu0 0
        %1243 = vmatprep.subr.bf16.mxu0 0
        %1244 = vmatpush1.bf16.msra.mxu0 0
        %1245 = vmatprep.subr.bf16.mxu0 0
        %1246 = vmatpush1.bf16.msra.mxu0 0
        %1247 = vmatprep.subr.bf16.mxu0 0
        %1248 = vmatpush1.bf16.msra.mxu0 0
        %1249 = vmatprep.subr.bf16.mxu0 0
        %1250 = vmatpush1.bf16.msra.mxu0 0
        %1251 = vmatprep.subr.bf16.mxu0 0
        %1252 = vmatpush1.bf16.msra.mxu0 0
        %1253 = vmatprep.subr.bf16.mxu0 0
        %1254 = vmatpush1.bf16.msra.mxu0 0
        %1255 = vmatprep.subr.bf16.mxu0 0
        %1256 = vmatpush1.bf16.msra.mxu0 0
        %1257 = vmatprep.subr.bf16.mxu0 0
        %1258 = vmatpush1.bf16.msra.mxu0 0
        %1259 = vmatprep.subr.bf16.mxu0 0
        %1260 = vmatpush1.bf16.msra.mxu0 0
        %1261 = vmatprep.subr.bf16.mxu0 0
        %1262 = vmatpush1.bf16.msra.mxu0 0
        %1263 = vmatprep.subr.bf16.mxu0 0
        %1264 = vmatpush1.bf16.msra.mxu0 0
        %1265 = vmatprep.mubr.bf16.mxu0 0
        %1266 = vmatmul.mubr.bf16.gmra.mrb[0].mxu0 %v1227
        %v1267 = vpop.f32.mrb[0].mxu0
        %v1268 = vadd.f32 0.0, %v1267
        %v1269 = vpop.f32.mrb[0].mxu0
        %v1270 = vpop.f32.mrb[0].mxu0
        %v1271 = vpop.f32.mrb[0].mxu0
        %1272 = vdwg.mxu0
        %v1274 = vsel %vm984, %v1214, 0
        %v1277 = vsel %vm1229, %v1223, 0
        %1279 = vmatprep.subr.bf16.mxu0 0
        %1280 = vmatpush1.bf16.msra.mxu0 %v1277
        %1281 = vmatprep.subr.bf16.mxu0 0
        %1282 = vmatpush1.bf16.msra.mxu0 0
        %1283 = vmatprep.subr.bf16.mxu0 0
        %1284 = vmatpush1.bf16.msra.mxu0 0
        %1285 = vmatprep.subr.bf16.mxu0 0
        %1286 = vmatpush1.bf16.msra.mxu0 0
        %1287 = vmatprep.subr.bf16.mxu0 0
        %1288 = vmatpush1.bf16.msra.mxu0 0
        %1289 = vmatprep.subr.bf16.mxu0 0
        %1290 = vmatpush1.bf16.msra.mxu0 0
        %1291 = vmatprep.subr.bf16.mxu0 0
        %1292 = vmatpush1.bf16.msra.mxu0 0
        %1293 = vmatprep.subr.bf16.mxu0 0
        %1294 = vmatpush1.bf16.msra.mxu0 0
        %1295 = vmatprep.subr.bf16.mxu0 0
        %1296 = vmatpush1.bf16.msra.mxu0 0
        %1297 = vmatprep.subr.bf16.mxu0 0
        %1298 = vmatpush1.bf16.msra.mxu0 0
        %1299 = vmatprep.subr.bf16.mxu0 0
        %1300 = vmatpush1.bf16.msra.mxu0 0
        %1301 = vmatprep.subr.bf16.mxu0 0
        %1302 = vmatpush1.bf16.msra.mxu0 0
        %1303 = vmatprep.subr.bf16.mxu0 0
        %1304 = vmatpush1.bf16.msra.mxu0 0
        %1305 = vmatprep.subr.bf16.mxu0 0
        %1306 = vmatpush1.bf16.msra.mxu0 0
        %1307 = vmatprep.subr.bf16.mxu0 0
        %1308 = vmatpush1.bf16.msra.mxu0 0
        %1309 = vmatprep.subr.bf16.mxu0 0
        %1310 = vmatpush1.bf16.msra.mxu0 0
        %1311 = vmatprep.mubr.bf16.mxu0 0
        %1312 = vmatmul.mubr.bf16.gmra.mrb[0].mxu0 %v1274
        %v1313 = vpop.f32.mrb[0].mxu0
        %v1314 = vadd.f32 0.0, %v1313
        %v1315 = vpop.f32.mrb[0].mxu0
        %v1316 = vpop.f32.mrb[0].mxu0
        %v1317 = vpop.f32.mrb[0].mxu0
        %1318 = vdwg.mxu0
        %v1320 = vsel %vm984, %v1215, 0
        %v1323 = vsel %vm1229, %v1224, 0
        %1325 = vmatprep.subr.bf16.mxu0 0
        %1326 = vmatpush1.bf16.msra.mxu0 %v1323
        %1327 = vmatprep.subr.bf16.mxu0 0
        %1328 = vmatpush1.bf16.msra.mxu0 0
        %1329 = vmatprep.subr.bf16.mxu0 0
        %1330 = vmatpush1.bf16.msra.mxu0 0
        %1331 = vmatprep.subr.bf16.mxu0 0
        %1332 = vmatpush1.bf16.msra.mxu0 0
        %1333 = vmatprep.subr.bf16.mxu0 0
        %1334 = vmatpush1.bf16.msra.mxu0 0
        %1335 = vmatprep.subr.bf16.mxu0 0
        %1336 = vmatpush1.bf16.msra.mxu0 0
        %1337 = vmatprep.subr.bf16.mxu0 0
        %1338 = vmatpush1.bf16.msra.mxu0 0
        %1339 = vmatprep.subr.bf16.mxu0 0
        %1340 = vmatpush1.bf16.msra.mxu0 0
        %1341 = vmatprep.subr.bf16.mxu0 0
        %1342 = vmatpush1.bf16.msra.mxu0 0
        %1343 = vmatprep.subr.bf16.mxu0 0
        %1344 = vmatpush1.bf16.msra.mxu0 0
        %1345 = vmatprep.subr.bf16.mxu0 0
        %1346 = vmatpush1.bf16.msra.mxu0 0
        %1347 = vmatprep.subr.bf16.mxu0 0
        %1348 = vmatpush1.bf16.msra.mxu0 0
        %1349 = vmatprep.subr.bf16.mxu0 0
        %1350 = vmatpush1.bf16.msra.mxu0 0
        %1351 = vmatprep.subr.bf16.mxu0 0
        %1352 = vmatpush1.bf16.msra.mxu0 0
        %1353 = vmatprep.subr.bf16.mxu0 0
        %1354 = vmatpush1.bf16.msra.mxu0 0
        %1355 = vmatprep.subr.bf16.mxu0 0
        %1356 = vmatpush1.bf16.msra.mxu0 0
        %1357 = vmatprep.mubr.bf16.mxu0 0
        %1358 = vmatmul.mubr.bf16.gmra.mrb[0].mxu0 %v1320
        %v1359 = vpop.f32.mrb[0].mxu0
        %v1360 = vadd.f32 0.0, %v1359
        %v1361 = vpop.f32.mrb[0].mxu0
        %v1362 = vpop.f32.mrb[0].mxu0
        %v1363 = vpop.f32.mrb[0].mxu0
        %1364 = vdwg.mxu0
        %v1366 = vsel %vm984, %v1216, 0
        %v1369 = vsel %vm1229, %v1225, 0
        %1371 = vmatprep.subr.bf16.mxu0 0
        %1372 = vmatpush1.bf16.msra.mxu0 %v1369
        %1373 = vmatprep.subr.bf16.mxu0 0
        %1374 = vmatpush1.bf16.msra.mxu0 0
        %1375 = vmatprep.subr.bf16.mxu0 0
        %1376 = vmatpush1.bf16.msra.mxu0 0
        %1377 = vmatprep.subr.bf16.mxu0 0
        %1378 = vmatpush1.bf16.msra.mxu0 0
        %1379 = vmatprep.subr.bf16.mxu0 0
        %1380 = vmatpush1.bf16.msra.mxu0 0
        %1381 = vmatprep.subr.bf16.mxu0 0
        %1382 = vmatpush1.bf16.msra.mxu0 0
        %1383 = vmatprep.subr.bf16.mxu0 0
        %1384 = vmatpush1.bf16.msra.mxu0 0
        %1385 = vmatprep.subr.bf16.mxu0 0
        %1386 = vmatpush1.bf16.msra.mxu0 0
        %1387 = vmatprep.subr.bf16.mxu0 0
        %1388 = vmatpush1.bf16.msra.mxu0 0
        %1389 = vmatprep.subr.bf16.mxu0 0
        %1390 = vmatpush1.bf16.msra.mxu0 0
        %1391 = vmatprep.subr.bf16.mxu0 0
        %1392 = vmatpush1.bf16.msra.mxu0 0
        %1393 = vmatprep.subr.bf16.mxu0 0
        %1394 = vmatpush1.bf16.msra.mxu0 0
        %1395 = vmatprep.subr.bf16.mxu0 0
        %1396 = vmatpush1.bf16.msra.mxu0 0
        %1397 = vmatprep.subr.bf16.mxu0 0
        %1398 = vmatpush1.bf16.msra.mxu0 0
        %1399 = vmatprep.subr.bf16.mxu0 0
        %1400 = vmatpush1.bf16.msra.mxu0 0
        %1401 = vmatprep.subr.bf16.mxu0 0
        %1402 = vmatpush1.bf16.msra.mxu0 0
        %1403 = vmatprep.mubr.bf16.mxu0 0
        %1404 = vmatmul.mubr.bf16.gmra.mrb[0].mxu0 %v1366
        %v1405 = vpop.f32.mrb[0].mxu0
        %v1406 = vadd.f32 0.0, %v1405
        %v1407 = vpop.f32.mrb[0].mxu0
        %v1408 = vpop.f32.mrb[0].mxu0
        %v1409 = vpop.f32.mrb[0].mxu0
        %1410 = vdwg.mxu0
        %1412 = vrot.lane.b32.xlu0 %v1314, 8
        %v1413 = vpop.permute.xlu0 %1412
        %1416 = vrot.lane.b32.xlu0 %v1360, 16
        %v1417 = vpop.permute.xlu0 %1416
        %1420 = vrot.lane.b32.xlu0 %v1406, 24
        %v1421 = vpop.permute.xlu0 %1420
        %v1423 = vsel %vm984, %v1268, %v1413
        %vm1424 = vcmask 130048
        %v1425 = vsel %vm1424, %v1423, %v1417
        %vm1426 = vcmask 195584
        %v1427 = vsel %vm1426, %v1425, %v1421
        %v1428 = vpack.c.bf16 %v1427, %v1427
        %v1429 = vld [vmem:[#allocation10] sm:$0xf]
        %v1430 = vld [vmem:[#allocation10 + $0x4] sm:$0xf]
        %v1431 = vld [vmem:[#allocation10 + $0x8] sm:$0xf]
        %v1432 = vld [vmem:[#allocation10 + $0xc] sm:$0xf]
        %v1433 = vld [vmem:[#allocation12] sm:$0x1]
        %v1435 = vlaneseq
        %v1436 = vshrl.u32 %v1435, 7
        %v1437 = vsub.s32 0, %v1436
        %v1438 = vrot.slane %v1433, %v1437
        %v1444 = vunpack.c.l.b16 %v1429
        %v1445 = vunpack.c.l.b16 %v1430
        %v1446 = vunpack.c.l.b16 %v1431
        %v1447 = vunpack.c.l.b16 %v1432
        %v1448 = vpack.c.b16 %v1445, %v1444
        %v1449 = vpack.c.b16 %v1447, %v1446
        %v1453 = vsel %vm921, %v1428, 0
        %1455 = vmatprep.subr.bf16.mxu0 0
        %1456 = vmatpush1.bf16.msra.mxu0 %v1448
        %1457 = vmatprep.subr.bf16.mxu0 0
        %1458 = vmatpush1.bf16.msra.mxu0 %v1449
        %1459 = vmatprep.subr.bf16.mxu0 0
        %1460 = vmatpush1.bf16.msra.mxu0 0
        %1461 = vmatprep.subr.bf16.mxu0 0
        %1462 = vmatpush1.bf16.msra.mxu0 0
        %1463 = vmatprep.subr.bf16.mxu0 0
        %1464 = vmatpush1.bf16.msra.mxu0 0
        %1465 = vmatprep.subr.bf16.mxu0 0
        %1466 = vmatpush1.bf16.msra.mxu0 0
        %1467 = vmatprep.subr.bf16.mxu0 0
        %1468 = vmatpush1.bf16.msra.mxu0 0
        %1469 = vmatprep.subr.bf16.mxu0 0
        %1470 = vmatpush1.bf16.msra.mxu0 0
        %1471 = vmatprep.subr.bf16.mxu0 0
        %1472 = vmatpush1.bf16.msra.mxu0 0
        %1473 = vmatprep.subr.bf16.mxu0 0
        %1474 = vmatpush1.bf16.msra.mxu0 0
        %1475 = vmatprep.subr.bf16.mxu0 0
        %1476 = vmatpush1.bf16.msra.mxu0 0
        %1477 = vmatprep.subr.bf16.mxu0 0
        %1478 = vmatpush1.bf16.msra.mxu0 0
        %1479 = vmatprep.subr.bf16.mxu0 0
        %1480 = vmatpush1.bf16.msra.mxu0 0
        %1481 = vmatprep.subr.bf16.mxu0 0
        %1482 = vmatpush1.bf16.msra.mxu0 0
        %1483 = vmatprep.subr.bf16.mxu0 0
        %1484 = vmatpush1.bf16.msra.mxu0 0
        %1485 = vmatprep.subr.bf16.mxu0 0
        %1486 = vmatpush1.bf16.msra.mxu0 0
        %1487 = vmatprep.mubr.bf16.mxu0 0
        %1488 = vmatmul.mubr.bf16.gmra.mrb[0].mxu0 %v1453
        %v1489 = vpop.f32.mrb[0].mxu0
        %v1490 = vadd.f32 %v1438, %v1489
        %v1491 = vpop.f32.mrb[0].mxu0
        %v1492 = vpop.f32.mrb[0].mxu0
        %v1493 = vpop.f32.mrb[0].mxu0
        %1494 = vdwg.mxu0
        %v1495 = vadd.f32 %v1490, %v896
        %v1496 = vld [vmem:[%s10] sm:$0x1]
        %v1497 = vld [vmem:[%s11] sm:$0x1]
        %v1498 = vsel %vm921, %v1495, 0.0
        %1499 = vadd.xlane.f32.xlu0 %v1498
        %v1500 = vpop.xlane.xlu0 %1499
        %v1501 = vrcp.pop 32.0
        %v1502 = vmul.f32 %v1500, %v1501
        %v1503 = vsub.f32 %v1495, %v1502
        %v1504 = vmul.f32 %v1503, %v1503
        %v1505 = vsel %vm921, %v1504, 0.0
        %1506 = vadd.xlane.f32.xlu0 %v1505
        %v1507 = vpop.xlane.xlu0 %1506
        %v1508 = vmul.f32 %v1507, %v1501
        %v1509 = vadd.f32 %v1508, 1e-05
        %v1510 = vrsqrt.pop %v1509
        %v1511 = vmul.f32 %v1503, %v1510
        %v1513 = vlaneseq
        %v1514 = vshrl.u32 %v1513, 7
        %v1515 = vsub.s32 0, %v1514
        %v1516 = vrot.slane %v1496, %v1515
        %v1518 = vmul.f32 %v1511, %v1516
        %v1520 = vlaneseq
        %v1521 = vshrl.u32 %v1520, 7
        %v1522 = vsub.s32 0, %v1521
        %v1523 = vrot.slane %v1497, %v1522
        %v1525 = vadd.f32 %v1518, %v1523
        %v1526 = vpack.c.bf16 %v1525, %v1525
        %v1527 = vld [vmem:[%s12] sm:$0xf]
        %v1528 = vld [vmem:[%s12 + $0x4] sm:$0xf]
        %v1529 = vld [vmem:[%s12 + $0x8] sm:$0xf]
        %v1530 = vld [vmem:[%s12 + $0xc] sm:$0xf]
        %v1531 = vld [vmem:[%s13] sm:$0x1]
        %v1533 = vlaneseq
        %v1534 = vshrl.u32 %v1533, 7
        %v1535 = vsub.s32 0, %v1534
        %v1536 = vrot.slane %v1531, %v1535
        %v1542 = vunpack.c.l.b16 %v1527
        %v1543 = vunpack.c.l.b16 %v1528
        %v1544 = vunpack.c.l.b16 %v1529
        %v1545 = vunpack.c.l.b16 %v1530
        %v1546 = vpack.c.b16 %v1543, %v1542
        %v1547 = vpack.c.b16 %v1545, %v1544
        %v1551 = vsel %vm921, %v1526, 0
        %1553 = vmatprep.subr.bf16.mxu0 0
        %1554 = vmatpush1.bf16.msra.mxu0 %v1546
        %1555 = vmatprep.subr.bf16.mxu0 0
        %1556 = vmatpush1.bf16.msra.mxu0 %v1547
        %1557 = vmatprep.subr.bf16.mxu0 0
        %1558 = vmatpush1.bf16.msra.mxu0 0
        %1559 = vmatprep.subr.bf16.mxu0 0
        %1560 = vmatpush1.bf16.msra.mxu0 0
        %1561 = vmatprep.subr.bf16.mxu0 0
        %1562 = vmatpush1.bf16.msra.mxu0 0
        %1563 = vmatprep.subr.bf16.mxu0 0
        %1564 = vmatpush1.bf16.msra.mxu0 0
        %1565 = vmatprep.subr.bf16.mxu0 0
        %1566 = vmatpush1.bf16.msra.mxu0 0
        %1567 = vmatprep.subr.bf16.mxu0 0
        %1568 = vmatpush1.bf16.msra.mxu0 0
        %1569 = vmatprep.subr.bf16.mxu0 0
        %1570 = vmatpush1.bf16.msra.mxu0 0
        %1571 = vmatprep.subr.bf16.mxu0 0
        %1572 = vmatpush1.bf16.msra.mxu0 0
        %1573 = vmatprep.subr.bf16.mxu0 0
        %1574 = vmatpush1.bf16.msra.mxu0 0
        %1575 = vmatprep.subr.bf16.mxu0 0
        %1576 = vmatpush1.bf16.msra.mxu0 0
        %1577 = vmatprep.subr.bf16.mxu0 0
        %1578 = vmatpush1.bf16.msra.mxu0 0
        %1579 = vmatprep.subr.bf16.mxu0 0
        %1580 = vmatpush1.bf16.msra.mxu0 0
        %1581 = vmatprep.subr.bf16.mxu0 0
        %1582 = vmatpush1.bf16.msra.mxu0 0
        %1583 = vmatprep.subr.bf16.mxu0 0
        %1584 = vmatpush1.bf16.msra.mxu0 0
        %1585 = vmatprep.mubr.bf16.mxu0 0
        %1586 = vmatmul.mubr.bf16.gmra.mrb[0].mxu0 %v1551
        %v1587 = vpop.f32.mrb[0].mxu0
        %v1588 = vadd.f32 %v1536, %v1587
        %v1589 = vpop.f32.mrb[0].mxu0
        %v1590 = vpop.f32.mrb[0].mxu0
        %v1591 = vpop.f32.mrb[0].mxu0
        %1592 = vdwg.mxu0
        %v1593 = vmax.f32 %v1588, 0.0
        %v1594 = vpack.c.bf16 %v1593, %v1593
        %v1595 = vld [vmem:[%s14] sm:$0xf]
        %v1596 = vld [vmem:[%s14 + $0x4] sm:$0xf]
        %v1597 = vld [vmem:[%s14 + $0x8] sm:$0xf]
        %v1598 = vld [vmem:[%s14 + $0xc] sm:$0xf]
        %v1599 = vld [vmem:[%s14 + $0x10] sm:$0xf]
        %v1600 = vld [vmem:[%s14 + $0x14] sm:$0xf]
        %v1601 = vld [vmem:[%s14 + $0x18] sm:$0xf]
        %v1602 = vld [vmem:[%s14 + $0x1c] sm:$0xf]
        %v1603 = vld [vmem:[%s15] sm:$0x1]
        %v1605 = vlaneseq
        %v1606 = vshrl.u32 %v1605, 7
        %v1607 = vsub.s32 0, %v1606
        %v1608 = vrot.slane %v1603, %v1607
        %v1618 = vunpack.c.l.b16 %v1595
        %v1619 = vunpack.c.l.b16 %v1596
        %v1620 = vunpack.c.l.b16 %v1597
        %v1621 = vunpack.c.l.b16 %v1598
        %v1622 = vunpack.c.l.b16 %v1599
        %v1623 = vunpack.c.l.b16 %v1600
        %v1624 = vunpack.c.l.b16 %v1601
        %v1625 = vunpack.c.l.b16 %v1602
        %v1626 = vpack.c.b16 %v1619, %v1618
        %v1627 = vpack.c.b16 %v1621, %v1620
        %v1628 = vpack.c.b16 %v1623, %v1622
        %v1629 = vpack.c.b16 %v1625, %v1624
        %vm1634 = vcmask 523264
        %v1636 = vsel %vm1634, %v1594, 0
        %1638 = vmatprep.subr.bf16.mxu0 0
        %1639 = vmatpush1.bf16.msra.mxu0 %v1626
        %1640 = vmatprep.subr.bf16.mxu0 0
        %1641 = vmatpush1.bf16.msra.mxu0 %v1627
        %1642 = vmatprep.subr.bf16.mxu0 0
        %1643 = vmatpush1.bf16.msra.mxu0 %v1628
        %1644 = vmatprep.subr.bf16.mxu0 0
        %1645 = vmatpush1.bf16.msra.mxu0 %v1629
        %1646 = vmatprep.subr.bf16.mxu0 0
        %1647 = vmatpush1.bf16.msra.mxu0 0
        %1648 = vmatprep.subr.bf16.mxu0 0
        %1649 = vmatpush1.bf16.msra.mxu0 0
        %1650 = vmatprep.subr.bf16.mxu0 0
        %1651 = vmatpush1.bf16.msra.mxu0 0
        %1652 = vmatprep.subr.bf16.mxu0 0
        %1653 = vmatpush1.bf16.msra.mxu0 0
        %1654 = vmatprep.subr.bf16.mxu0 0
        %1655 = vmatpush1.bf16.msra.mxu0 0
        %1656 = vmatprep.subr.bf16.mxu0 0
        %1657 = vmatpush1.bf16.msra.mxu0 0
        %1658 = vmatprep.subr.bf16.mxu0 0
        %1659 = vmatpush1.bf16.msra.mxu0 0
        %1660 = vmatprep.subr.bf16.mxu0 0
        %1661 = vmatpush1.bf16.msra.mxu0 0
        %1662 = vmatprep.subr.bf16.mxu0 0
        %1663 = vmatpush1.bf16.msra.mxu0 0
        %1664 = vmatprep.subr.bf16.mxu0 0
        %1665 = vmatpush1.bf16.msra.mxu0 0
        %1666 = vmatprep.subr.bf16.mxu0 0
        %1667 = vmatpush1.bf16.msra.mxu0 0
        %1668 = vmatprep.subr.bf16.mxu0 0
        %1669 = vmatpush1.bf16.msra.mxu0 0
        %1670 = vmatprep.mubr.bf16.mxu0 0
        %1671 = vmatmul.mubr.bf16.gmra.mrb[0].mxu0 %v1636
        %v1672 = vpop.f32.mrb[0].mxu0
        %v1673 = vadd.f32 %v1608, %v1672
        %v1674 = vpop.f32.mrb[0].mxu0
        %v1675 = vpop.f32.mrb[0].mxu0
        %v1676 = vpop.f32.mrb[0].mxu0
        %1677 = vdwg.mxu0
        %v1678 = vadd.f32 %v1673, %v1525
        %v1679 = vld [vmem:[%s16] sm:$0x1]
        %v1680 = vld [vmem:[%s17] sm:$0x1]
        %v1681 = vsel %vm921, %v1678, 0.0
        %1682 = vadd.xlane.f32.xlu0 %v1681
        %v1683 = vpop.xlane.xlu0 %1682
        %v1684 = vmul.f32 %v1683, %v1501
        %v1685 = vsub.f32 %v1678, %v1684
        %v1686 = vmul.f32 %v1685, %v1685
        %v1687 = vsel %vm921, %v1686, 0.0
        %1688 = vadd.xlane.f32.xlu0 %v1687
        %v1689 = vpop.xlane.xlu0 %1688
        %v1690 = vmul.f32 %v1689, %v1501
        %v1691 = vadd.f32 %v1690, 1e-05
        %v1692 = vrsqrt.pop %v1691
        %v1693 = vmul.f32 %v1685, %v1692
        %v1695 = vlaneseq
        %v1696 = vshrl.u32 %v1695, 7
        %v1697 = vsub.s32 0, %v1696
        %v1698 = vrot.slane %v1679, %v1697
        %v1700 = vmul.f32 %v1693, %v1698
        %v1702 = vlaneseq
        %v1703 = vshrl.u32 %v1702, 7
        %v1704 = vsub.s32 0, %v1703
        %v1705 = vrot.slane %v1680, %v1704
        %v1707 = vadd.f32 %v1700, %v1705
        %1708 = vst.msk [vmem:[%s703] sm:$0xff] %vm921, %v1707
        %s1709 = sand.u32 %s452, 1
        %s1710 = scalar_lea.sflag [#allocation6], %s1709
        %s1711 = sand.u32 %s452, 1
        %s1712 = smul.addr %s1711, 8
        %s1713 = scalar_lea.vmem [#allocation13], %s1712
        %s1714 = sand.u32 %s480, 1
        %s1715 = scalar_lea.sflag [#allocation15], %s1714
        %s1716 = sand.u32 %s480, 1
        %s1717 = smul.addr %s1716, 16
        %s1718 = scalar_lea.vmem [#allocation14], %s1717
        // Predicated region
        $region117: #{tpu_custom_call.1} parent=91 // pred_check
          %p1719 = pneg %p462
        $region118: #{tpu_custom_call.1} parent=91 // pred_check_branch
          %1721 = sbr.rel (%p1719) target = $region120
        $region119: #{tpu_custom_call.1} parent=91 // pred_region
          %s1723 = ssub.s32 128, 128
          %1724 = vsyncadd %s1710, %s1723
          %s1725 = sadd.s32 %s45, %s44
          %s1726 = smul.addr %s1725, 128
          %s1727 = scalar_lea.hbm %s18, %s1726
          %s1729 = sshll.u32 %s1713, 4
          %s1730 = int_to_ptr.vmem [resolvable:$true] %s1729
          %1732 = dma.vmem_to_hbm [thread:$0]  %s1730, 128, %s1727, %s1710
        $region120: #{tpu_custom_call.1} parent=91 // pred_fallthru
          _
        // Predicated region
        $region121: #{tpu_custom_call.1} parent=91 // pred_check
          %p1733 = pneg %p490
        $region122: #{tpu_custom_call.1} parent=91 // pred_check_branch
          %1735 = sbr.rel (%p1733) target = $region124
        $region123: #{tpu_custom_call.1} parent=91 // pred_region
          %s1737 = ssub.s32 256, 256
          %1738 = vsyncadd %s1715, %s1737
          %s1739 = sadd.s32 %s45, %s44
          %s1740 = smul.addr %s1739, 64
          %s1741 = scalar_lea.hbm %s19, %s1740
          %s1742 = sshll.u32 %s1718, 4
          %s1743 = int_to_ptr.vmem [resolvable:$true] %s1742
          %1748 = dma.vmem_to_hbm [thread:$0]  %s1743, 256, %s1741, %s1715, 64, 128, 4
        $region124: #{tpu_custom_call.1} parent=91 // pred_fallthru
          _
      $region92: #{tpu_custom_call.1} parent=5 // pred_fallthru
        _
      %p1749 = scmp.le.s32.totalorder 2, %s35
      // Predicated region
      $region125: #{tpu_custom_call.1} parent=5 // pred_check
        %p1750 = pneg %p1749
      $region126: #{tpu_custom_call.1} parent=5 // pred_check_branch
        %1752 = sbr.rel (%p1750) target = $region128
      $region127: #{tpu_custom_call.1} parent=5 // pred_region
        %s1753 = ssub.s32 %s35, 2
        // Predicated region
        $region129: #{tpu_custom_call.1} parent=127 // pred_check
          %p1754 = pneg %p468
        $region130: #{tpu_custom_call.1} parent=127 // pred_check_branch
          %1756 = sbr.rel (%p1754) target = $region132
        $region131: #{tpu_custom_call.1} parent=127 // pred_region
          %s1757 = sand.u32 %s453, 1
          %s1758 = scalar_lea.sflag [#allocation6], %s1757
          %s1759 = sand.u32 %s453, 1
          %s1760 = smul.addr %s1759, 8
          %s1761 = scalar_lea.vmem [#allocation13], %s1760
          %1762 = dma.done %s1758, 128
        $region132: #{tpu_custom_call.1} parent=127 // pred_fallthru
          _
        // Predicated region
        $region133: #{tpu_custom_call.1} parent=127 // pred_check
          %p1763 = pneg %p496
        $region134: #{tpu_custom_call.1} parent=127 // pred_check_branch
          %1765 = sbr.rel (%p1763) target = $region136
        $region135: #{tpu_custom_call.1} parent=127 // pred_region
          %s1766 = sand.u32 %s481, 1
          %s1767 = scalar_lea.sflag [#allocation15], %s1766
          %s1768 = sand.u32 %s481, 1
          %s1769 = smul.addr %s1768, 16
          %s1770 = scalar_lea.vmem [#allocation14], %s1769
          %1771 = dma.done %s1767, 256
        $region136: #{tpu_custom_call.1} parent=127 // pred_fallthru
          _
      $region128: #{tpu_custom_call.1} parent=5 // pred_fallthru
        _
    $region6: #{tpu_custom_call.1} parent=1 // loop_footer
      %s39 = sadd.s32 1, %s35
    $region7: #{tpu_custom_call.1} parent=1 // loop_footer_branch
      %34 = sbr.rel target = $region3
    $region8: #{tpu_custom_call.1} parent=1 // loop_exit
      _
    %1772 = vsyncpa [#allocation5], 1
    %s1773 = scalar_lea.sflag [#allocation5], 1
    %1774 = vsyncpa %s1773, 1
    %1775 = vsyncpa [#allocation8], 1
    %1776 = vsyncpa [#allocation11], 1
    %1777 = vsyncpa [#allocation6], 1
    %s1778 = scalar_lea.sflag [#allocation6], 1
    %1779 = vsyncpa %s1778, 1
    %1780 = vsyncpa [#allocation15], 1
    %s1781 = scalar_lea.sflag [#allocation15], 1
    %1782 = vsyncpa %s1781, 1

// kernel: tpu_custom_call.1
$region0: #{tpu_custom_call.1}
  #allocation0 [shape = 'u32[]', space=smem, size = 0x4, offset = 0x4, fixed_abs, tag = 'smem constant byte address 0x4 - core index']
  #allocation1 [shape = 'u32[144,128]{1,0:T(1,128)}', space=vmem, size = 0x12000, scoped, tag = 'internal scratch']
  #allocation2 [shape = 'bf16[4,8,8]{2,1,0:T(8,128)(2,1)}', space=vmem, size = 0x2000, scoped, tag = 'scratch operand']
  #allocation3 [shape = 'bf16[4,8,8]{2,1,0:T(8,128)(2,1)}', space=vmem, size = 0x2000, scoped, tag = 'scratch operand']
  %s0 = inlined_call_operand.vmem [shape: f32[2,8,32], index: 0, kind: input, shape index: {}]
  %s1 = inlined_call_operand.vmem [shape: f32[2,8,32], index: 1, kind: input, shape index: {}]
  %s2 = inlined_call_operand.vmem [shape: bf16[32,32], index: 2, kind: input, shape index: {}]
  %s3 = inlined_call_operand.vmem [shape: f32[1,32], index: 3, kind: input, shape index: {}]
  %s4 = inlined_call_operand.hbm [shape: bf16[32,32], index: 4, kind: input, shape index: {}]
  %s5 = inlined_call_operand.vmem [shape: f32[1,32], index: 5, kind: input, shape index: {}]
  %s6 = inlined_call_operand.hbm [shape: bf16[32,32], index: 6, kind: input, shape index: {}]
  %s7 = inlined_call_operand.hbm [shape: f32[1,32], index: 7, kind: input, shape index: {}]
  %s8 = inlined_call_operand.hbm [shape: bf16[32,32], index: 8, kind: input, shape index: {}]
  %s9 = inlined_call_operand.hbm [shape: f32[1,32], index: 9, kind: input, shape index: {}]
  %s10 = inlined_call_operand.vmem [shape: f32[1,32], index: 10, kind: input, shape index: {}]
  %s11 = inlined_call_operand.vmem [shape: f32[1,32], index: 11, kind: input, shape index: {}]
  %s12 = inlined_call_operand.vmem [shape: bf16[32,64], index: 12, kind: input, shape index: {}]
  %s13 = inlined_call_operand.vmem [shape: f32[1,64], index: 13, kind: input, shape index: {}]
  %s14 = inlined_call_operand.vmem [shape: bf16[64,32], index: 14, kind: input, shape index: {}]
  %s15 = inlined_call_operand.vmem [shape: f32[1,32], index: 15, kind: input, shape index: {}]
  %s16 = inlined_call_operand.vmem [shape: f32[1,32], index: 16, kind: input, shape index: {}]
  %s17 = inlined_call_operand.vmem [shape: f32[1,32], index: 17, kind: input, shape index: {}]
  %s18 = inlined_call_operand.hbm [shape: f32[2,8,32], index: 18, kind: output, shape index: {0}]
  %s19 = inlined_call_operand.hbm [shape: bf16[4,2,8,8], index: 19, kind: output, shape index: {1}]
  %20 = xla_tuple %s18, %s19
  %s21 = sld [smem:[#allocation0]]
  $region137: #{tpu_custom_call.1} parent=0
    _
  %s23 = ssub.s32 1, %s21
  %s24 = scalar_select 0, %s23, %s21
  $region1: #{tpu_custom_call.1} parent=0
    #allocation4 [shape = 'u8[8192]{0}', space=vmem, size = 0x2000, scoped, tag = 'input window, operand 4, single buffered']
    #allocation5 [shape = 's32[2]{0}', space=sflag, size = 0x8, scoped, tag = 'scoped memory for tpu_custom_call.1']
    #allocation6 [shape = 's32[2]{0}', space=sflag, size = 0x8, scoped, tag = 'scoped memory for tpu_custom_call.1']
    #allocation7 [shape = 'u8[8192]{0}', space=vmem, size = 0x2000, scoped, tag = 'input window, operand 6, single buffered']
    #allocation8 [shape = 's32[1]{0}', space=sflag, size = 0x4, scoped, tag = 'scoped memory for tpu_custom_call.1']
    #allocation9 [shape = 'u8[512]{0}', space=vmem, size = 0x400, scoped, tag = 'input window, operand 7, single buffered']
    #allocation10 [shape = 'u8[8192]{0}', space=vmem, size = 0x2000, scoped, tag = 'input window, operand 8, single buffered']
    #allocation11 [shape = 's32[1]{0}', space=sflag, size = 0x4, scoped, tag = 'scoped memory for tpu_custom_call.1']
    #allocation12 [shape = 'u8[512]{0}', space=vmem, size = 0x400, scoped, tag = 'input window, operand 9, single buffered']
    #allocation13 [shape = 'u8[8192]{0}', space=vmem, size = 0x2000, scoped, tag = 'output window, operand 0']
    #allocation14 [shape = 'u8[16384]{0}', space=vmem, size = 0x4000, scoped, tag = 'output window, operand 1']
    #allocation15 [shape = 's32[2]{0}', space=sflag, size = 0x8, scoped, tag = 'scoped memory for tpu_custom_call.1']
    %25 = vsyncpa [#allocation5], 0
    %26 = vsyncpa [#allocation8], 0
    %27 = vsyncpa [#allocation11], 0
    %28 = vsyncpa [#allocation6], 0
    %s29 = scalar_lea.sflag [#allocation6], 1
    %30 = vsyncpa %s29, 0
    %31 = vsyncpa [#allocation15], 0
    %s32 = scalar_lea.sflag [#allocation15], 1
    %33 = vsyncpa %s32, 0
    loop: start=0, step=1, limit=4
    $region2: #{tpu_custom_call.1} parent=1 // loop_pre_header
      _
    $region3: #{tpu_custom_call.1} parent=1 // loop_header
      %s35 = sphi 0, %s39
      %p36 = scmp.ge.s32.totalorder %s35, 4
      %s42 = sphi 0, %s54
      %s43 = sphi 0, %s50
      %s44 = sphi 0, %s42
      %s45 = sphi 0, %s43
      %s46 = sphi 0, %s44
      %s47 = sphi 0, %s45
      %s57 = sphi 0, %s59
      %s60 = sphi 0, %s57
      %s61 = sphi 0, %s60
      %s77 = sphi 0, %s61
      %s85 = sphi 0, %s87
      %s88 = sphi 0, %s85
      %s89 = sphi 0, %s88
      %s105 = sphi 0, %s89
      %s109 = sphi 0, %s109
      %s111 = sphi 0, %s109
      %s112 = sphi 0, %s111
      %s126 = sphi 0, %s112
      %s130 = sphi 0, %s130
      %s132 = sphi 0, %s130
      %s133 = sphi 0, %s132
      %s147 = sphi 0, %s133
      %s151 = sphi 0, %s151
      %s153 = sphi 0, %s151
      %s154 = sphi 0, %s153
      %s168 = sphi 0, %s154
      %s172 = sphi 0, %s172
      %s174 = sphi 0, %s172
      %s175 = sphi 0, %s174
      %s189 = sphi 0, %s175
      %s193 = sphi 0, %s193
      %s195 = sphi 0, %s193
      %s196 = sphi 0, %s195
      %s210 = sphi 0, %s196
      %s214 = sphi 0, %s214
      %s216 = sphi 0, %s214
      %s217 = sphi 0, %s216
      %s231 = sphi 0, %s217
      %s235 = sphi 0, %s235
      %s237 = sphi 0, %s235
      %s238 = sphi 0, %s237
      %s252 = sphi 0, %s238
      %s256 = sphi 0, %s256
      %s258 = sphi 0, %s256
      %s259 = sphi 0, %s258
      %s273 = sphi 0, %s259
      %s277 = sphi 0, %s277
      %s279 = sphi 0, %s277
      %s280 = sphi 0, %s279
      %s294 = sphi 0, %s280
      %s298 = sphi 0, %s298
      %s300 = sphi 0, %s298
      %s301 = sphi 0, %s300
      %s315 = sphi 0, %s301
      %s319 = sphi 0, %s319
      %s321 = sphi 0, %s319
      %s322 = sphi 0, %s321
      %s336 = sphi 0, %s322
      %s340 = sphi 0, %s340
      %s342 = sphi 0, %s340
      %s343 = sphi 0, %s342
      %s357 = sphi 0, %s343
      %s361 = sphi 0, %s361
      %s363 = sphi 0, %s361
      %s364 = sphi 0, %s363
      %s378 = sphi 0, %s364
      %s382 = sphi 0, %s382
      %s384 = sphi 0, %s382
      %s385 = sphi 0, %s384
      %s399 = sphi 0, %s385
      %s403 = sphi 0, %s403
      %s405 = sphi 0, %s403
      %s406 = sphi 0, %s405
      %s420 = sphi 0, %s406
      %s424 = sphi 0, %s424
      %s426 = sphi 0, %s424
      %s427 = sphi 0, %s426
      %s441 = sphi 0, %s427
      %s449 = sphi 0, %s451
      %s452 = sphi 0, %s449
      %s453 = sphi 0, %s452
      %s469 = sphi 0, %s453
      %s477 = sphi 0, %s479
      %s480 = sphi 0, %s477
      %s481 = sphi 0, %s480
      %s497 = sphi 0, %s481
    $region4: #{tpu_custom_call.1} parent=1 // loop_header_branch
      %38 = sbr.rel (%p36) target = $region8
    $region5: #{tpu_custom_call.1} parent=1 // loop_body
      %s40 = ssub.s32 %s35, 1
      %s41 = ssub.s32 %s35, 2
      %s48 = sadd.s32 1, %s43
      %p49 = scmp.ge.s32.totalorder %s48, 1
      %s50 = scalar_select %p49, 0, %s48
      %s51 = sadd.s32 1, %s42
      %s52 = scalar_select %p49, %s51, %s42
      %p53 = scmp.ge.s32.totalorder %s52, 2
      %s54 = scalar_select %p53, 0, %s52
      %s55 = ssub.s32 %s42, %s54
      %p56 = scmp.eq.s32.totalorder %s55, 0
      %s58 = sadd.s32 %s57, 1
      %s59 = scalar_select %p56, %s57, %s58
      %p62 = pneg %p56
      %p63 = scmp.eq.s32.totalorder %s35, 1
      %p64 = por %p62, %p63
      %p65 = scmp.ne.s32.totalorder %s57, %s60
      %p66 = scmp.eq.s32.totalorder %s35, 0
      %p67 = por %p65, %p66
      %p68 = scmp.ne.s32.totalorder %s57, %s60
      %p69 = scmp.eq.s32.totalorder %s40, 1
      %p70 = por %p68, %p69
      %p71 = scmp.ne.s32.totalorder %s60, %s61
      %p72 = scmp.eq.s32.totalorder %s40, 0
      %p73 = por %p71, %p72
      %p74 = scmp.ne.s32.totalorder %s60, %s61
      %p75 = scmp.eq.s32.totalorder %s41, 1
      %p76 = por %p74, %p75
      %p78 = scmp.ne.s32.totalorder %s61, %s77
      %p79 = scmp.eq.s32.totalorder %s41, 0
      %p80 = por %p78, %p79
      %s81 = ssub.s32 %s42, %s54
      %s82 = ssub.s32 %s43, %s50
      %s83 = sor.u32 %s81, %s82
      %p84 = scmp.eq.s32.totalorder %s83, 0
      %s86 = sadd.s32 %s85, 1
      %s87 = scalar_select %p84, %s85, %s86
      %p90 = pneg %p84
      %p91 = scmp.eq.s32.totalorder %s35, 1
      %p92 = por %p90, %p91
      %p93 = scmp.ne.s32.totalorder %s85, %s88
      %p94 = scmp.eq.s32.totalorder %s35, 0
      %p95 = por %p93, %p94
      %p96 = scmp.ne.s32.totalorder %s85, %s88
      %p97 = scmp.eq.s32.totalorder %s40, 1
      %p98 = por %p96, %p97
      %p99 = scmp.ne.s32.totalorder %s88, %s89
      %p100 = scmp.eq.s32.totalorder %s40, 0
      %p101 = por %p99, %p100
      %p102 = scmp.ne.s32.totalorder %s88, %s89
      %p103 = scmp.eq.s32.totalorder %s41, 1
      %p104 = por %p102, %p103
      %p106 = scmp.ne.s32.totalorder %s89, %s105
      %p107 = scmp.eq.s32.totalorder %s41, 0
      %p108 = por %p106, %p107
      %s110 = sadd.s32 %s109, 1
      %p113 = scmp.eq.s32.totalorder %s35, 1
      %p114 = scmp.ne.s32.totalorder %s109, %s111
      %p115 = scmp.eq.s32.totalorder %s35, 0
      %p116 = por %p114, %p115
      %p117 = scmp.ne.s32.totalorder %s109, %s111
      %p118 = scmp.eq.s32.totalorder %s40, 1
      %p119 = por %p117, %p118
      %p120 = scmp.ne.s32.totalorder %s111, %s112
      %p121 = scmp.eq.s32.totalorder %s40, 0
      %p122 = por %p120, %p121
      %p123 = scmp.ne.s32.totalorder %s111, %s112
      %p124 = scmp.eq.s32.totalorder %s41, 1
      %p125 = por %p123, %p124
      %p127 = scmp.ne.s32.totalorder %s112, %s126
      %p128 = scmp.eq.s32.totalorder %s41, 0
      %p129 = por %p127, %p128
      %s131 = sadd.s32 %s130, 1
      %p134 = scmp.eq.s32.totalorder %s35, 1
      %p135 = scmp.ne.s32.totalorder %s130, %s132
      %p136 = scmp.eq.s32.totalorder %s35, 0
      %p137 = por %p135, %p136
      %p138 = scmp.ne.s32.totalorder %s130, %s132
      %p139 = scmp.eq.s32.totalorder %s40, 1
      %p140 = por %p138, %p139
      %p141 = scmp.ne.s32.totalorder %s132, %s133
      %p142 = scmp.eq.s32.totalorder %s40, 0
      %p143 = por %p141, %p142
      %p144 = scmp.ne.s32.totalorder %s132, %s133
      %p145 = scmp.eq.s32.totalorder %s41, 1
      %p146 = por %p144, %p145
      %p148 = scmp.ne.s32.totalorder %s133, %s147
      %p149 = scmp.eq.s32.totalorder %s41, 0
      %p150 = por %p148, %p149
      %s152 = sadd.s32 %s151, 1
      %p155 = scmp.eq.s32.totalorder %s35, 1
      %p156 = scmp.ne.s32.totalorder %s151, %s153
      %p157 = scmp.eq.s32.totalorder %s35, 0
      %p158 = por %p156, %p157
      %p159 = scmp.ne.s32.totalorder %s151, %s153
      %p160 = scmp.eq.s32.totalorder %s40, 1
      %p161 = por %p159, %p160
      %p162 = scmp.ne.s32.totalorder %s153, %s154
      %p163 = scmp.eq.s32.totalorder %s40, 0
      %p164 = por %p162, %p163
      %p165 = scmp.ne.s32.totalorder %s153, %s154
      %p166 = scmp.eq.s32.totalorder %s41, 1
      %p167 = por %p165, %p166
      %p169 = scmp.ne.s32.totalorder %s154, %s168
      %p170 = scmp.eq.s32.totalorder %s41, 0
      %p171 = por %p169, %p170
      %s173 = sadd.s32 %s172, 1
      %p176 = scmp.eq.s32.totalorder %s35, 1
      %p177 = scmp.ne.s32.totalorder %s172, %s174
      %p178 = scmp.eq.s32.totalorder %s35, 0
      %p179 = por %p177, %p178
      %p180 = scmp.ne.s32.totalorder %s172, %s174
      %p181 = scmp.eq.s32.totalorder %s40, 1
      %p182 = por %p180, %p181
      %p183 = scmp.ne.s32.totalorder %s174, %s175
      %p184 = scmp.eq.s32.totalorder %s40, 0
      %p185 = por %p183, %p184
      %p186 = scmp.ne.s32.totalorder %s174, %s175
      %p187 = scmp.eq.s32.totalorder %s41, 1
      %p188 = por %p186, %p187
      %p190 = scmp.ne.s32.totalorder %s175, %s189
      %p191 = scmp.eq.s32.totalorder %s41, 0
      %p192 = por %p190, %p191
      %s194 = sadd.s32 %s193, 1
      %p197 = scmp.eq.s32.totalorder %s35, 1
      %p198 = scmp.ne.s32.totalorder %s193, %s195
      %p199 = scmp.eq.s32.totalorder %s35, 0
      %p200 = por %p198, %p199
      %p201 = scmp.ne.s32.totalorder %s193, %s195
      %p202 = scmp.eq.s32.totalorder %s40, 1
      %p203 = por %p201, %p202
      %p204 = scmp.ne.s32.totalorder %s195, %s196
      %p205 = scmp.eq.s32.totalorder %s40, 0
      %p206 = por %p204, %p205
      %p207 = scmp.ne.s32.totalorder %s195, %s196
      %p208 = scmp.eq.s32.totalorder %s41, 1
      %p209 = por %p207, %p208
      %p211 = scmp.ne.s32.totalorder %s196, %s210
      %p212 = scmp.eq.s32.totalorder %s41, 0
      %p213 = por %p211, %p212
      %s215 = sadd.s32 %s214, 1
      %p218 = scmp.eq.s32.totalorder %s35, 1
      %p219 = scmp.ne.s32.totalorder %s214, %s216
      %p220 = scmp.eq.s32.totalorder %s35, 0
      %p221 = por %p219, %p220
      %p222 = scmp.ne.s32.totalorder %s214, %s216
      %p223 = scmp.eq.s32.totalorder %s40, 1
      %p224 = por %p222, %p223
      %p225 = scmp.ne.s32.totalorder %s216, %s217
      %p226 = scmp.eq.s32.totalorder %s40, 0
      %p227 = por %p225, %p226
      %p228 = scmp.ne.s32.totalorder %s216, %s217
      %p229 = scmp.eq.s32.totalorder %s41, 1
      %p230 = por %p228, %p229
      %p232 = scmp.ne.s32.totalorder %s217, %s231
      %p233 = scmp.eq.s32.totalorder %s41, 0
      %p234 = por %p232, %p233
      %s236 = sadd.s32 %s235, 1
      %p239 = scmp.eq.s32.totalorder %s35, 1
      %p240 = scmp.ne.s32.totalorder %s235, %s237
      %p241 = scmp.eq.s32.totalorder %s35, 0
      %p242 = por %p240, %p241
      %p243 = scmp.ne.s32.totalorder %s235, %s237
      %p244 = scmp.eq.s32.totalorder %s40, 1
      %p245 = por %p243, %p244
      %p246 = scmp.ne.s32.totalorder %s237, %s238
      %p247 = scmp.eq.s32.totalorder %s40, 0
      %p248 = por %p246, %p247
      %p249 = scmp.ne.s32.totalorder %s237, %s238
      %p250 = scmp.eq.s32.totalorder %s41, 1
      %p251 = por %p249, %p250
      %p253 = scmp.ne.s32.totalorder %s238, %s252
      %p254 = scmp.eq.s32.totalorder %s41, 0
      %p255 = por %p253, %p254
      %s257 = sadd.s32 %s256, 1
      %p260 = scmp.eq.s32.totalorder %s35, 1
      %p261 = scmp.ne.s32.totalorder %s256, %s258
      %p262 = scmp.eq.s32.totalorder %s35, 0
      %p263 = por %p261, %p262
      %p264 = scmp.ne.s32.totalorder %s256, %s258
      %p265 = scmp.eq.s32.totalorder %s40, 1
      %p266 = por %p264, %p265
      %p267 = scmp.ne.s32.totalorder %s258, %s259
      %p268 = scmp.eq.s32.totalorder %s40, 0
      %p269 = por %p267, %p268
      %p270 = scmp.ne.s32.totalorder %s258, %s259
      %p271 = scmp.eq.s32.totalorder %s41, 1
      %p272 = por %p270, %p271
      %p274 = scmp.ne.s32.totalorder %s259, %s273
      %p275 = scmp.eq.s32.totalorder %s41, 0
      %p276 = por %p274, %p275
      %s278 = sadd.s32 %s277, 1
      %p281 = scmp.eq.s32.totalorder %s35, 1
      %p282 = scmp.ne.s32.totalorder %s277, %s279
      %p283 = scmp.eq.s32.totalorder %s35, 0
      %p284 = por %p282, %p283
      %p285 = scmp.ne.s32.totalorder %s277, %s279
      %p286 = scmp.eq.s32.totalorder %s40, 1
      %p287 = por %p285, %p286
      %p288 = scmp.ne.s32.totalorder %s279, %s280
      %p289 = scmp.eq.s32.totalorder %s40, 0
      %p290 = por %p288, %p289
      %p291 = scmp.ne.s32.totalorder %s279, %s280
      %p292 = scmp.eq.s32.totalorder %s41, 1
      %p293 = por %p291, %p292
      %p295 = scmp.ne.s32.totalorder %s280, %s294
      %p296 = scmp.eq.s32.totalorder %s41, 0
      %p297 = por %p295, %p296
      %s299 = sadd.s32 %s298, 1
      %p302 = scmp.eq.s32.totalorder %s35, 1
      %p303 = scmp.ne.s32.totalorder %s298, %s300
      %p304 = scmp.eq.s32.totalorder %s35, 0
      %p305 = por %p303, %p304
      %p306 = scmp.ne.s32.totalorder %s298, %s300
      %p307 = scmp.eq.s32.totalorder %s40, 1
      %p308 = por %p306, %p307
      %p309 = scmp.ne.s32.totalorder %s300, %s301
      %p310 = scmp.eq.s32.totalorder %s40, 0
      %p311 = por %p309, %p310
      %p312 = scmp.ne.s32.totalorder %s300, %s301
      %p313 = scmp.eq.s32.totalorder %s41, 1
      %p314 = por %p312, %p313
      %p316 = scmp.ne.s32.totalorder %s301, %s315
      %p317 = scmp.eq.s32.totalorder %s41, 0
      %p318 = por %p316, %p317
      %s320 = sadd.s32 %s319, 1
      %p323 = scmp.eq.s32.totalorder %s35, 1
      %p324 = scmp.ne.s32.totalorder %s319, %s321
      %p325 = scmp.eq.s32.totalorder %s35, 0
      %p326 = por %p324, %p325
      %p327 = scmp.ne.s32.totalorder %s319, %s321
      %p328 = scmp.eq.s32.totalorder %s40, 1
      %p329 = por %p327, %p328
      %p330 = scmp.ne.s32.totalorder %s321, %s322
      %p331 = scmp.eq.s32.totalorder %s40, 0
      %p332 = por %p330, %p331
      %p333 = scmp.ne.s32.totalorder %s321, %s322
      %p334 = scmp.eq.s32.totalorder %s41, 1
      %p335 = por %p333, %p334
      %p337 = scmp.ne.s32.totalorder %s322, %s336
      %p338 = scmp.eq.s32.totalorder %s41, 0
      %p339 = por %p337, %p338
      %s341 = sadd.s32 %s340, 1
      %p344 = scmp.eq.s32.totalorder %s35, 1
      %p345 = scmp.ne.s32.totalorder %s340, %s342
      %p346 = scmp.eq.s32.totalorder %s35, 0
      %p347 = por %p345, %p346
      %p348 = scmp.ne.s32.totalorder %s340, %s342
      %p349 = scmp.eq.s32.totalorder %s40, 1
      %p350 = por %p348, %p349
      %p351 = scmp.ne.s32.totalorder %s342, %s343
      %p352 = scmp.eq.s32.totalorder %s40, 0
      %p353 = por %p351, %p352
      %p354 = scmp.ne.s32.totalorder %s342, %s343
      %p355 = scmp.eq.s32.totalorder %s41, 1
      %p356 = por %p354, %p355
      %p358 = scmp.ne.s32.totalorder %s343, %s357
      %p359 = scmp.eq.s32.totalorder %s41, 0
      %p360 = por %p358, %p359
      %s362 = sadd.s32 %s361, 1
      %p365 = scmp.eq.s32.totalorder %s35, 1
      %p366 = scmp.ne.s32.totalorder %s361, %s363
      %p367 = scmp.eq.s32.totalorder %s35, 0
      %p368 = por %p366, %p367
      %p369 = scmp.ne.s32.totalorder %s361, %s363
      %p370 = scmp.eq.s32.totalorder %s40, 1
      %p371 = por %p369, %p370
      %p372 = scmp.ne.s32.totalorder %s363, %s364
      %p373 = scmp.eq.s32.totalorder %s40, 0
      %p374 = por %p372, %p373
      %p375 = scmp.ne.s32.totalorder %s363, %s364
      %p376 = scmp.eq.s32.totalorder %s41, 1
      %p377 = por %p375, %p376
      %p379 = scmp.ne.s32.totalorder %s364, %s378
      %p380 = scmp.eq.s32.totalorder %s41, 0
      %p381 = por %p379, %p380
      %s383 = sadd.s32 %s382, 1
      %p386 = scmp.eq.s32.totalorder %s35, 1
      %p387 = scmp.ne.s32.totalorder %s382, %s384
      %p388 = scmp.eq.s32.totalorder %s35, 0
      %p389 = por %p387, %p388
      %p390 = scmp.ne.s32.totalorder %s382, %s384
      %p391 = scmp.eq.s32.totalorder %s40, 1
      %p392 = por %p390, %p391
      %p393 = scmp.ne.s32.totalorder %s384, %s385
      %p394 = scmp.eq.s32.totalorder %s40, 0
      %p395 = por %p393, %p394
      %p396 = scmp.ne.s32.totalorder %s384, %s385
      %p397 = scmp.eq.s32.totalorder %s41, 1
      %p398 = por %p396, %p397
      %p400 = scmp.ne.s32.totalorder %s385, %s399
      %p401 = scmp.eq.s32.totalorder %s41, 0
      %p402 = por %p400, %p401
      %s404 = sadd.s32 %s403, 1
      %p407 = scmp.eq.s32.totalorder %s35, 1
      %p408 = scmp.ne.s32.totalorder %s403, %s405
      %p409 = scmp.eq.s32.totalorder %s35, 0
      %p410 = por %p408, %p409
      %p411 = scmp.ne.s32.totalorder %s403, %s405
      %p412 = scmp.eq.s32.totalorder %s40, 1
      %p413 = por %p411, %p412
      %p414 = scmp.ne.s32.totalorder %s405, %s406
      %p415 = scmp.eq.s32.totalorder %s40, 0
      %p416 = por %p414, %p415
      %p417 = scmp.ne.s32.totalorder %s405, %s406
      %p418 = scmp.eq.s32.totalorder %s41, 1
      %p419 = por %p417, %p418
      %p421 = scmp.ne.s32.totalorder %s406, %s420
      %p422 = scmp.eq.s32.totalorder %s41, 0
      %p423 = por %p421, %p422
      %s425 = sadd.s32 %s424, 1
      %p428 = scmp.eq.s32.totalorder %s35, 1
      %p429 = scmp.ne.s32.totalorder %s424, %s426
      %p430 = scmp.eq.s32.totalorder %s35, 0
      %p431 = por %p429, %p430
      %p432 = scmp.ne.s32.totalorder %s424, %s426
      %p433 = scmp.eq.s32.totalorder %s40, 1
      %p434 = por %p432, %p433
      %p435 = scmp.ne.s32.totalorder %s426, %s427
      %p436 = scmp.eq.s32.totalorder %s40, 0
      %p437 = por %p435, %p436
      %p438 = scmp.ne.s32.totalorder %s426, %s427
      %p439 = scmp.eq.s32.totalorder %s41, 1
      %p440 = por %p438, %p439
      %p442 = scmp.ne.s32.totalorder %s427, %s441
      %p443 = scmp.eq.s32.totalorder %s41, 0
      %p444 = por %p442, %p443
      %s445 = ssub.s32 %s42, %s54
      %s446 = ssub.s32 %s43, %s50
      %s447 = sor.u32 %s445, %s446
      %p448 = scmp.eq.s32.totalorder %s447, 0
      %s450 = sadd.s32 %s449, 1
      %s451 = scalar_select %p448, %s449, %s450
      %p454 = pneg %p448
      %p455 = scmp.eq.s32.totalorder %s35, 1
      %p456 = por %p454, %p455
      %p457 = scmp.ne.s32.totalorder %s449, %s452
      %p458 = scmp.eq.s32.totalorder %s35, 0
      %p459 = por %p457, %p458
      %p460 = scmp.ne.s32.totalorder %s449, %s452
      %p461 = scmp.eq.s32.totalorder %s40, 1
      %p462 = por %p460, %p461
      %p463 = scmp.ne.s32.totalorder %s452, %s453
      %p464 = scmp.eq.s32.totalorder %s40, 0
      %p465 = por %p463, %p464
      %p466 = scmp.ne.s32.totalorder %s452, %s453
      %p467 = scmp.eq.s32.totalorder %s41, 1
      %p468 = por %p466, %p467
      %p470 = scmp.ne.s32.totalorder %s453, %s469
      %p471 = scmp.eq.s32.totalorder %s41, 0
      %p472 = por %p470, %p471
      %s473 = ssub.s32 %s42, %s54
      %s474 = ssub.s32 %s43, %s50
      %s475 = sor.u32 %s473, %s474
      %p476 = scmp.eq.s32.totalorder %s475, 0
      %s478 = sadd.s32 %s477, 1
      %s479 = scalar_select %p476, %s477, %s478
      %p482 = pneg %p476
      %p483 = scmp.eq.s32.totalorder %s35, 1
      %p484 = por %p482, %p483
      %p485 = scmp.ne.s32.totalorder %s477, %s480
      %p486 = scmp.eq.s32.totalorder %s35, 0
      %p487 = por %p485, %p486
      %p488 = scmp.ne.s32.totalorder %s477, %s480
      %p489 = scmp.eq.s32.totalorder %s40, 1
      %p490 = por %p488, %p489
      %p491 = scmp.ne.s32.totalorder %s480, %s481
      %p492 = scmp.eq.s32.totalorder %s40, 0
      %p493 = por %p491, %p492
      %p494 = scmp.ne.s32.totalorder %s480, %s481
      %p495 = scmp.eq.s32.totalorder %s41, 1
      %p496 = por %p494, %p495
      %p498 = scmp.ne.s32.totalorder %s481, %s497
      %p499 = scmp.eq.s32.totalorder %s41, 0
      %p500 = por %p498, %p499
      %p501 = scmp.le.s32.totalorder 1, %s35
      %p502 = scmp.lt.s32.totalorder %s35, 3
      %p503 = pnand %p501, %p502
      %p504 = pneg %p503
      // Predicated region
      $region9: #{tpu_custom_call.1} parent=5 // pred_check
        _
      $region10: #{tpu_custom_call.1} parent=5 // pred_check_branch
        %506 = sbr.rel (%p503) target = $region12
      $region11: #{tpu_custom_call.1} parent=5 // pred_region
        %s507 = ssub.s32 %s35, 1
        // Predicated region
        $region13: #{tpu_custom_call.1} parent=11 // pred_check
          %p508 = pneg %p122
        $region14: #{tpu_custom_call.1} parent=11 // pred_check_branch
          %510 = sbr.rel (%p508) target = $region16
        $region15: #{tpu_custom_call.1} parent=11 // pred_region
          _
        $region16: #{tpu_custom_call.1} parent=11 // pred_fallthru
          _
        // Predicated region
        $region17: #{tpu_custom_call.1} parent=11 // pred_check
          %p511 = pneg %p143
        $region18: #{tpu_custom_call.1} parent=11 // pred_check_branch
          %513 = sbr.rel (%p511) target = $region20
        $region19: #{tpu_custom_call.1} parent=11 // pred_region
          _
        $region20: #{tpu_custom_call.1} parent=11 // pred_fallthru
          _
        // Predicated region
        $region21: #{tpu_custom_call.1} parent=11 // pred_check
          %p514 = pneg %p164
        $region22: #{tpu_custom_call.1} parent=11 // pred_check_branch
          %516 = sbr.rel (%p514) target = $region24
        $region23: #{tpu_custom_call.1} parent=11 // pred_region
          %s518 = ssub.s32 256, 256
          %519 = vsyncadd [#allocation5], %s518
          %s520 = sshll.u32 [#allocation4], 4
          %s521 = int_to_ptr.vmem [resolvable:$true] %s520
          %526 = dma.hbm_to_vmem [thread:$0]  %s4, 256, %s521, [#allocation5], 64, 64, 4
        $region24: #{tpu_custom_call.1} parent=11 // pred_fallthru
          _
        // Predicated region
        $region25: #{tpu_custom_call.1} parent=11 // pred_check
          %p527 = pneg %p185
        $region26: #{tpu_custom_call.1} parent=11 // pred_check_branch
          %529 = sbr.rel (%p527) target = $region28
        $region27: #{tpu_custom_call.1} parent=11 // pred_region
          _
        $region28: #{tpu_custom_call.1} parent=11 // pred_fallthru
          _
        // Predicated region
        $region29: #{tpu_custom_call.1} parent=11 // pred_check
          %p530 = pneg %p206
        $region30: #{tpu_custom_call.1} parent=11 // pred_check_branch
          %532 = sbr.rel (%p530) target = $region32
        $region31: #{tpu_custom_call.1} parent=11 // pred_region
          %s534 = ssub.s32 256, 256
          %535 = vsyncadd [#allocation8], %s534
          %s536 = sshll.u32 [#allocation7], 4
          %s537 = int_to_ptr.vmem [resolvable:$true] %s536
          %542 = dma.hbm_to_vmem [thread:$0]  %s6, 256, %s537, [#allocation8], 64, 64, 4
        $region32: #{tpu_custom_call.1} parent=11 // pred_fallthru
          _
        // Predicated region
        $region33: #{tpu_custom_call.1} parent=11 // pred_check
          %p543 = pneg %p227
        $region34: #{tpu_custom_call.1} parent=11 // pred_check_branch
          %545 = sbr.rel (%p543) target = $region36
        $region35: #{tpu_custom_call.1} parent=11 // pred_region
          %s547 = ssub.s32 16, 16
          %548 = vsyncadd [#allocation8], %s547
          %s550 = sshll.u32 [#allocation9], 4
          %s551 = int_to_ptr.vmem [resolvable:$true] %s550
          %553 = dma.hbm_to_vmem [thread:$0]  %s7, 16, %s551, [#allocation8]
        $region36: #{tpu_custom_call.1} parent=11 // pred_fallthru
          _
        // Predicated region
        $region37: #{tpu_custom_call.1} parent=11 // pred_check
          %p554 = pneg %p248
        $region38: #{tpu_custom_call.1} parent=11 // pred_check_branch
          %556 = sbr.rel (%p554) target = $region40
        $region39: #{tpu_custom_call.1} parent=11 // pred_region
          %s558 = ssub.s32 256, 256
          %559 = vsyncadd [#allocation11], %s558
          %s560 = sshll.u32 [#allocation10], 4
          %s561 = int_to_ptr.vmem [resolvable:$true] %s560
          %566 = dma.hbm_to_vmem [thread:$0]  %s8, 256, %s561, [#allocation11], 64, 64, 4
        $region40: #{tpu_custom_call.1} parent=11 // pred_fallthru
          _
        // Predicated region
        $region41: #{tpu_custom_call.1} parent=11 // pred_check
          %p567 = pneg %p269
        $region42: #{tpu_custom_call.1} parent=11 // pred_check_branch
          %569 = sbr.rel (%p567) target = $region44
        $region43: #{tpu_custom_call.1} parent=11 // pred_region
          %s571 = ssub.s32 16, 16
          %572 = vsyncadd [#allocation11], %s571
          %s574 = sshll.u32 [#allocation12], 4
          %s575 = int_to_ptr.vmem [resolvable:$true] %s574
          %577 = dma.hbm_to_vmem [thread:$0]  %s9, 16, %s575, [#allocation11]
        $region44: #{tpu_custom_call.1} parent=11 // pred_fallthru
          _
        // Predicated region
        $region45: #{tpu_custom_call.1} parent=11 // pred_check
          %p578 = pneg %p290
        $region46: #{tpu_custom_call.1} parent=11 // pred_check_branch
          %580 = sbr.rel (%p578) target = $region48
        $region47: #{tpu_custom_call.1} parent=11 // pred_region
          _
        $region48: #{tpu_custom_call.1} parent=11 // pred_fallthru
          _
        // Predicated region
        $region49: #{tpu_custom_call.1} parent=11 // pred_check
          %p581 = pneg %p311
        $region50: #{tpu_custom_call.1} parent=11 // pred_check_branch
          %583 = sbr.rel (%p581) target = $region52
        $region51: #{tpu_custom_call.1} parent=11 // pred_region
          _
        $region52: #{tpu_custom_call.1} parent=11 // pred_fallthru
          _
        // Predicated region
        $region53: #{tpu_custom_call.1} parent=11 // pred_check
          %p584 = pneg %p332
        $region54: #{tpu_custom_call.1} parent=11 // pred_check_branch
          %586 = sbr.rel (%p584) target = $region56
        $region55: #{tpu_custom_call.1} parent=11 // pred_region
          _
        $region56: #{tpu_custom_call.1} parent=11 // pred_fallthru
          _
        // Predicated region
        $region57: #{tpu_custom_call.1} parent=11 // pred_check
          %p587 = pneg %p353
        $region58: #{tpu_custom_call.1} parent=11 // pred_check_branch
          %589 = sbr.rel (%p587) target = $region60
        $region59: #{tpu_custom_call.1} parent=11 // pred_region
          _
        $region60: #{tpu_custom_call.1} parent=11 // pred_fallthru
          _
        // Predicated region
        $region61: #{tpu_custom_call.1} parent=11 // pred_check
          %p590 = pneg %p374
        $region62: #{tpu_custom_call.1} parent=11 // pred_check_branch
          %592 = sbr.rel (%p590) target = $region64
        $region63: #{tpu_custom_call.1} parent=11 // pred_region
          _
        $region64: #{tpu_custom_call.1} parent=11 // pred_fallthru
          _
        // Predicated region
        $region65: #{tpu_custom_call.1} parent=11 // pred_check
          %p593 = pneg %p395
        $region66: #{tpu_custom_call.1} parent=11 // pred_check_branch
          %595 = sbr.rel (%p593) target = $region68
        $region67: #{tpu_custom_call.1} parent=11 // pred_region
          _
        $region68: #{tpu_custom_call.1} parent=11 // pred_fallthru
          _
        // Predicated region
        $region69: #{tpu_custom_call.1} parent=11 // pred_check
          %p596 = pneg %p416
        $region70: #{tpu_custom_call.1} parent=11 // pred_check_branch
          %598 = sbr.rel (%p596) target = $region72
        $region71: #{tpu_custom_call.1} parent=11 // pred_region
          _
        $region72: #{tpu_custom_call.1} parent=11 // pred_fallthru
          _
        // Predicated region
        $region73: #{tpu_custom_call.1} parent=11 // pred_check
          %p599 = pneg %p437
        $region74: #{tpu_custom_call.1} parent=11 // pred_check_branch
          %601 = sbr.rel (%p599) target = $region76
        $region75: #{tpu_custom_call.1} parent=11 // pred_region
          _
        $region76: #{tpu_custom_call.1} parent=11 // pred_fallthru
          _
      $region12: #{tpu_custom_call.1} parent=5 // pred_fallthru
        _
      %p602 = scmp.lt.s32.totalorder %s35, 2
      // Predicated region
      $region77: #{tpu_custom_call.1} parent=5 // pred_check
        %p603 = pneg %p602
      $region78: #{tpu_custom_call.1} parent=5 // pred_check_branch
        %605 = sbr.rel (%p603) target = $region80
      $region79: #{tpu_custom_call.1} parent=5 // pred_region
        // Predicated region
        $region81: #{tpu_custom_call.1} parent=79 // pred_check
          %p606 = pneg %p67
        $region82: #{tpu_custom_call.1} parent=79 // pred_check_branch
          %608 = sbr.rel (%p606) target = $region84
        $region83: #{tpu_custom_call.1} parent=79 // pred_region
          %p609 = scmp.lt.s32.totalorder %s42, 1
          %s610 = scalar_select %p609, %s42, 1
          %s611 = smul.addr %s610, 8
          %s612 = scalar_lea.vmem %s0, %s611
        $region84: #{tpu_custom_call.1} parent=79 // pred_fallthru
          _
        // Predicated region
        $region85: #{tpu_custom_call.1} parent=79 // pred_check
          %p613 = pneg %p95
        $region86: #{tpu_custom_call.1} parent=79 // pred_check_branch
          %615 = sbr.rel (%p613) target = $region88
        $region87: #{tpu_custom_call.1} parent=79 // pred_region
          %p616 = scmp.lt.s32.totalorder %s42, 1
          %s617 = scalar_select %p616, %s42, 1
          %p618 = scmp.lt.s32.totalorder %s43, 0
          %s619 = scalar_select %p618, %s43, 0
          %s620 = sadd.s32 %s619, %s617
          %s621 = smul.addr %s620, 8
          %s622 = scalar_lea.vmem %s1, %s621
        $region88: #{tpu_custom_call.1} parent=79 // pred_fallthru
          _
      $region80: #{tpu_custom_call.1} parent=5 // pred_fallthru
        _
      %p623 = scmp.le.s32.totalorder 1, %s35
      %p624 = scmp.lt.s32.totalorder %s35, 3
      %p625 = pnand %p623, %p624
      %p626 = pneg %p625
      // Predicated region
      $region89: #{tpu_custom_call.1} parent=5 // pred_check
        _
      $region90: #{tpu_custom_call.1} parent=5 // pred_check_branch
        %628 = sbr.rel (%p625) target = $region92
      $region91: #{tpu_custom_call.1} parent=5 // pred_region
        %s629 = ssub.s32 %s35, 1
        // Predicated region
        $region93: #{tpu_custom_call.1} parent=91 // pred_check
          %p630 = pneg %p164
        $region94: #{tpu_custom_call.1} parent=91 // pred_check_branch
          %632 = sbr.rel (%p630) target = $region96
        $region95: #{tpu_custom_call.1} parent=91 // pred_region
          %633 = dma.done [#allocation5], 256
        $region96: #{tpu_custom_call.1} parent=91 // pred_fallthru
          _
        // Predicated region
        $region97: #{tpu_custom_call.1} parent=91 // pred_check
          %p634 = pneg %p206
        $region98: #{tpu_custom_call.1} parent=91 // pred_check_branch
          %636 = sbr.rel (%p634) target = $region100
        $region99: #{tpu_custom_call.1} parent=91 // pred_region
          %637 = dma.done [#allocation8], 256
        $region100: #{tpu_custom_call.1} parent=91 // pred_fallthru
          _
        // Predicated region
        $region101: #{tpu_custom_call.1} parent=91 // pred_check
          %p638 = pneg %p227
        $region102: #{tpu_custom_call.1} parent=91 // pred_check_branch
          %640 = sbr.rel (%p638) target = $region104
        $region103: #{tpu_custom_call.1} parent=91 // pred_region
          %641 = dma.done [#allocation8], 16
        $region104: #{tpu_custom_call.1} parent=91 // pred_fallthru
          _
        // Predicated region
        $region105: #{tpu_custom_call.1} parent=91 // pred_check
          %p642 = pneg %p248
        $region106: #{tpu_custom_call.1} parent=91 // pred_check_branch
          %644 = sbr.rel (%p642) target = $region108
        $region107: #{tpu_custom_call.1} parent=91 // pred_region
          %645 = dma.done [#allocation11], 256
        $region108: #{tpu_custom_call.1} parent=91 // pred_fallthru
          _
        // Predicated region
        $region109: #{tpu_custom_call.1} parent=91 // pred_check
          %p646 = pneg %p269
        $region110: #{tpu_custom_call.1} parent=91 // pred_check_branch
          %648 = sbr.rel (%p646) target = $region112
        $region111: #{tpu_custom_call.1} parent=91 // pred_region
          %649 = dma.done [#allocation11], 16
        $region112: #{tpu_custom_call.1} parent=91 // pred_fallthru
          _
        %p650 = scmp.lt.s32.totalorder %s44, 1
        %s651 = scalar_select %p650, %s44, 1
        %s652 = smul.addr %s651, 8
        %s653 = scalar_lea.vmem %s0, %s652
        %p654 = pneg %p73
        %p655 = pneg %p70
        %p656 = scmp.lt.s32.totalorder %s44, 1
        %s657 = scalar_select %p656, %s44, 1
        %p658 = scmp.lt.s32.totalorder %s45, 0
        %s659 = scalar_select %p658, %s45, 0
        %s660 = sadd.s32 %s659, %s657
        %s661 = smul.addr %s660, 8
        %s662 = scalar_lea.vmem %s1, %s661
        %p663 = pneg %p101
        %p664 = pneg %p98
        %p665 = pneg %p122
        %p666 = pneg %p119
        %p667 = pneg %p143
        %p668 = pneg %p140
        %p669 = pneg %p164
        %p670 = pneg %p161
        %p671 = pneg %p185
        %p672 = pneg %p182
        %p673 = pneg %p206
        %p674 = pneg %p203
        %p675 = pneg %p227
        %p676 = pneg %p224
        %p677 = pneg %p248
        %p678 = pneg %p245
        %p679 = pneg %p269
        %p680 = pneg %p266
        %p681 = pneg %p290
        %p682 = pneg %p287
        %p683 = pneg %p311
        %p684 = pneg %p308
        %p685 = pneg %p332
        %p686 = pneg %p329
        %p687 = pneg %p353
        %p688 = pneg %p350
        %p689 = pneg %p374
        %p690 = pneg %p371
        %p691 = pneg %p395
        %p692 = pneg %p392
        %p693 = pneg %p416
        %p694 = pneg %p413
        %p695 = pneg %p437
        %p696 = pneg %p434
        %p697 = pneg %p465
        %p698 = pneg %p462
        %s699 = sand.u32 %s452, 1
        %s700 = scalar_lea.sflag [#allocation6], %s699
        %s701 = sand.u32 %s452, 1
        %s702 = smul.addr %s701, 8
        %s703 = scalar_lea.vmem [#allocation13], %s702
        %p704 = pneg %p493
        %p705 = pneg %p490
        %s706 = sand.u32 %s480, 1
        %s707 = scalar_lea.sflag [#allocation15], %s706
        %s708 = sand.u32 %s480, 1
        %s709 = smul.addr %s708, 16
        %s710 = scalar_lea.vmem [#allocation14], %s709
        %p711 = scmp.lt.s32.totalorder %s44, 1
        %s712 = scalar_select %p711, %s44, 1
        %s713 = smul.addr %s712, 8
        %s714 = scalar_lea.vmem %s0, %s713
        %p715 = scmp.lt.s32.totalorder %s44, 1
        %s716 = scalar_select %p715, %s44, 1
        %p717 = scmp.lt.s32.totalorder %s45, 0
        %s718 = scalar_select %p717, %s45, 0
        %s719 = sadd.s32 %s718, %s716
        %s720 = smul.addr %s719, 8
        %s721 = scalar_lea.vmem %s1, %s720
        %p723 = scmp.eq.s32.totalorder %s45, 0
        // Predicated region
        $region113: #{tpu_custom_call.1} parent=91 // pred_check
          %p724 = pneg %p723
        $region114: #{tpu_custom_call.1} parent=91 // pred_check_branch
          %726 = sbr.rel (%p724) target = $region116
        $region115: #{tpu_custom_call.1} parent=91 // pred_region
          %v727 = vld [vmem:[%s714] sm:$0xff]
          %v728 = vpack.c.bf16 %v727, %v727
          %v729 = vld [vmem:[#allocation4] sm:$0xf]
          %v730 = vld [vmem:[#allocation4 + $0x4] sm:$0xf]
          %v731 = vld [vmem:[#allocation4 + $0x8] sm:$0xf]
          %v732 = vld [vmem:[#allocation4 + $0xc] sm:$0xf]
          %v733 = vld [vmem:[%s5] sm:$0x1]
          %v735 = vlaneseq
          %v736 = vshrl.u32 %v735, 7
          %v737 = vsub.s32 0, %v736
          %v738 = vrot.slane %v733, %v737
          %v744 = vunpack.c.l.b16 %v729
          %v745 = vunpack.c.l.b16 %v730
          %v746 = vunpack.c.l.b16 %v731
          %v747 = vunpack.c.l.b16 %v732
          %v748 = vpack.c.b16 %v745, %v744
          %v749 = vpack.c.b16 %v747, %v746
          %vm752 = vcmask 261120
          %v754 = vsel %vm752, %v728, 0
          %756 = vmatprep.subr.bf16.mxu0 0
          %757 = vmatpush1.bf16.msra.mxu0 %v748
          %758 = vmatprep.subr.bf16.mxu0 0
          %759 = vmatpush1.bf16.msra.mxu0 %v749
          %760 = vmatprep.subr.bf16.mxu0 0
          %761 = vmatpush1.bf16.msra.mxu0 0
          %762 = vmatprep.subr.bf16.mxu0 0
          %763 = vmatpush1.bf16.msra.mxu0 0
          %764 = vmatprep.subr.bf16.mxu0 0
          %765 = vmatpush1.bf16.msra.mxu0 0
          %766 = vmatprep.subr.bf16.mxu0 0
          %767 = vmatpush1.bf16.msra.mxu0 0
          %768 = vmatprep.subr.bf16.mxu0 0
          %769 = vmatpush1.bf16.msra.mxu0 0
          %770 = vmatprep.subr.bf16.mxu0 0
          %771 = vmatpush1.bf16.msra.mxu0 0
          %772 = vmatprep.subr.bf16.mxu0 0
          %773 = vmatpush1.bf16.msra.mxu0 0
          %774 = vmatprep.subr.bf16.mxu0 0
          %775 = vmatpush1.bf16.msra.mxu0 0
          %776 = vmatprep.subr.bf16.mxu0 0
          %777 = vmatpush1.bf16.msra.mxu0 0
          %778 = vmatprep.subr.bf16.mxu0 0
          %779 = vmatpush1.bf16.msra.mxu0 0
          %780 = vmatprep.subr.bf16.mxu0 0
          %781 = vmatpush1.bf16.msra.mxu0 0
          %782 = vmatprep.subr.bf16.mxu0 0
          %783 = vmatpush1.bf16.msra.mxu0 0
          %784 = vmatprep.subr.bf16.mxu0 0
          %785 = vmatpush1.bf16.msra.mxu0 0
          %786 = vmatprep.subr.bf16.mxu0 0
          %787 = vmatpush1.bf16.msra.mxu0 0
          %788 = vmatprep.mubr.bf16.mxu0 0
          %789 = vmatmul.mubr.bf16.gmra.mrb[0].mxu0 %v754
          %v790 = vpop.f32.mrb[0].mxu0
          %v791 = vadd.f32 %v738, %v790
          %v792 = vpop.f32.mrb[0].mxu0
          %v793 = vpop.f32.mrb[0].mxu0
          %v794 = vpop.f32.mrb[0].mxu0
          %795 = vdwg.mxu0
          %v796 = vld [vmem:[#allocation7] sm:$0xf]
          %v797 = vld [vmem:[#allocation7 + $0x4] sm:$0xf]
          %v798 = vld [vmem:[#allocation7 + $0x8] sm:$0xf]
          %v799 = vld [vmem:[#allocation7 + $0xc] sm:$0xf]
          %v800 = vld [vmem:[#allocation9] sm:$0x1]
          %v802 = vlaneseq
          %v803 = vshrl.u32 %v802, 7
          %v804 = vsub.s32 0, %v803
          %v805 = vrot.slane %v800, %v804
          %v811 = vunpack.c.l.b16 %v796
          %v812 = vunpack.c.l.b16 %v797
          %v813 = vunpack.c.l.b16 %v798
          %v814 = vunpack.c.l.b16 %v799
          %v815 = vpack.c.b16 %v812, %v811
          %v816 = vpack.c.b16 %v814, %v813
          %819 = vmatprep.subr.bf16.mxu0 0
          %820 = vmatpush1.bf16.msra.mxu0 %v815
          %821 = vmatprep.subr.bf16.mxu0 0
          %822 = vmatpush1.bf16.msra.mxu0 %v816
          %823 = vmatprep.subr.bf16.mxu0 0
          %824 = vmatpush1.bf16.msra.mxu0 0
          %825 = vmatprep.subr.bf16.mxu0 0
          %826 = vmatpush1.bf16.msra.mxu0 0
          %827 = vmatprep.subr.bf16.mxu0 0
          %828 = vmatpush1.bf16.msra.mxu0 0
          %829 = vmatprep.subr.bf16.mxu0 0
          %830 = vmatpush1.bf16.msra.mxu0 0
          %831 = vmatprep.subr.bf16.mxu0 0
          %832 = vmatpush1.bf16.msra.mxu0 0
          %833 = vmatprep.subr.bf16.mxu0 0
          %834 = vmatpush1.bf16.msra.mxu0 0
          %835 = vmatprep.subr.bf16.mxu0 0
          %836 = vmatpush1.bf16.msra.mxu0 0
          %837 = vmatprep.subr.bf16.mxu0 0
          %838 = vmatpush1.bf16.msra.mxu0 0
          %839 = vmatprep.subr.bf16.mxu0 0
          %840 = vmatpush1.bf16.msra.mxu0 0
          %841 = vmatprep.subr.bf16.mxu0 0
          %842 = vmatpush1.bf16.msra.mxu0 0
          %843 = vmatprep.subr.bf16.mxu0 0
          %844 = vmatpush1.bf16.msra.mxu0 0
          %845 = vmatprep.subr.bf16.mxu0 0
          %846 = vmatpush1.bf16.msra.mxu0 0
          %847 = vmatprep.subr.bf16.mxu0 0
          %848 = vmatpush1.bf16.msra.mxu0 0
          %849 = vmatprep.subr.bf16.mxu0 0
          %850 = vmatpush1.bf16.msra.mxu0 0
          %851 = vmatprep.mubr.bf16.mxu0 0
          %852 = vmatmul.mubr.bf16.gmra.mrb[0].mxu0 %v754
          %v853 = vpop.f32.mrb[0].mxu0
          %v854 = vadd.f32 %v805, %v853
          %v855 = vpop.f32.mrb[0].mxu0
          %v856 = vpop.f32.mrb[0].mxu0
          %v857 = vpop.f32.mrb[0].mxu0
          %858 = vdwg.mxu0
          %860 = vrot.lane.b32.xlu0 %v791, 120
          %v861 = vpop.permute.xlu0 %860
          %863 = vrot.lane.b32.xlu0 %v791, 112
          %v864 = vpop.permute.xlu0 %863
          %866 = vrot.lane.b32.xlu0 %v791, 104
          %v867 = vpop.permute.xlu0 %866
          %v869 = vpack.c.bf16 %v791, %v791
          %v870 = vpack.c.bf16 %v861, %v861
          %v871 = vpack.c.bf16 %v864, %v864
          %v872 = vpack.c.bf16 %v867, %v867
          %vm873 = vcmask 60416
          %874 = vst.msk [vmem:[#allocation2] sm:$0xf] %vm873, %v869
          %875 = vst.msk [vmem:[#allocation2 + $0x4] sm:$0xf] %vm873, %v870
          %876 = vst.msk [vmem:[#allocation2 + $0x8] sm:$0xf] %vm873, %v871
          %877 = vst.msk [vmem:[#allocation2 + $0xc] sm:$0xf] %vm873, %v872
          %879 = vrot.lane.b32.xlu0 %v854, 120
          %v880 = vpop.permute.xlu0 %879
          %882 = vrot.lane.b32.xlu0 %v854, 112
          %v883 = vpop.permute.xlu0 %882
          %885 = vrot.lane.b32.xlu0 %v854, 104
          %v886 = vpop.permute.xlu0 %885
          %v888 = vpack.c.bf16 %v854, %v854
          %v889 = vpack.c.bf16 %v880, %v880
          %v890 = vpack.c.bf16 %v883, %v883
          %v891 = vpack.c.bf16 %v886, %v886
          %892 = vst.msk [vmem:[#allocation3] sm:$0xf] %vm873, %v888
          %893 = vst.msk [vmem:[#allocation3 + $0x4] sm:$0xf] %vm873, %v889
          %894 = vst.msk [vmem:[#allocation3 + $0x8] sm:$0xf] %vm873, %v890
          %895 = vst.msk [vmem:[#allocation3 + $0xc] sm:$0xf] %vm873, %v891
        $region116: #{tpu_custom_call.1} parent=91 // pred_fallthru
          _
        %v896 = vld [vmem:[%s721] sm:$0xff]
        %v897 = vpack.c.bf16 %v896, %v896
        %v898 = vld [vmem:[%s2] sm:$0xf]
        %v899 = vld [vmem:[%s2 + $0x4] sm:$0xf]
        %v900 = vld [vmem:[%s2 + $0x8] sm:$0xf]
        %v901 = vld [vmem:[%s2 + $0xc] sm:$0xf]
        %v902 = vld [vmem:[%s3] sm:$0x1]
        %v904 = vlaneseq
        %v905 = vshrl.u32 %v904, 7
        %v906 = vsub.s32 0, %v905
        %v907 = vrot.slane %v902, %v906
        %v913 = vunpack.c.l.b16 %v898
        %v914 = vunpack.c.l.b16 %v899
        %v915 = vunpack.c.l.b16 %v900
        %v916 = vunpack.c.l.b16 %v901
        %v917 = vpack.c.b16 %v914, %v913
        %v918 = vpack.c.b16 %v916, %v915
        %vm921 = vcmask 261120
        %v923 = vsel %vm921, %v897, 0
        %925 = vmatprep.subr.bf16.mxu0 0
        %926 = vmatpush1.bf16.msra.mxu0 %v917
        %927 = vmatprep.subr.bf16.mxu0 0
        %928 = vmatpush1.bf16.msra.mxu0 %v918
        %929 = vmatprep.subr.bf16.mxu0 0
        %930 = vmatpush1.bf16.msra.mxu0 0
        %931 = vmatprep.subr.bf16.mxu0 0
        %932 = vmatpush1.bf16.msra.mxu0 0
        %933 = vmatprep.subr.bf16.mxu0 0
        %934 = vmatpush1.bf16.msra.mxu0 0
        %935 = vmatprep.subr.bf16.mxu0 0
        %936 = vmatpush1.bf16.msra.mxu0 0
        %937 = vmatprep.subr.bf16.mxu0 0
        %938 = vmatpush1.bf16.msra.mxu0 0
        %939 = vmatprep.subr.bf16.mxu0 0
        %940 = vmatpush1.bf16.msra.mxu0 0
        %941 = vmatprep.subr.bf16.mxu0 0
        %942 = vmatpush1.bf16.msra.mxu0 0
        %943 = vmatprep.subr.bf16.mxu0 0
        %944 = vmatpush1.bf16.msra.mxu0 0
        %945 = vmatprep.subr.bf16.mxu0 0
        %946 = vmatpush1.bf16.msra.mxu0 0
        %947 = vmatprep.subr.bf16.mxu0 0
        %948 = vmatpush1.bf16.msra.mxu0 0
        %949 = vmatprep.subr.bf16.mxu0 0
        %950 = vmatpush1.bf16.msra.mxu0 0
        %951 = vmatprep.subr.bf16.mxu0 0
        %952 = vmatpush1.bf16.msra.mxu0 0
        %953 = vmatprep.subr.bf16.mxu0 0
        %954 = vmatpush1.bf16.msra.mxu0 0
        %955 = vmatprep.subr.bf16.mxu0 0
        %956 = vmatpush1.bf16.msra.mxu0 0
        %957 = vmatprep.mubr.bf16.mxu0 0
        %958 = vmatmul.mubr.bf16.gmra.mrb[0].mxu0 %v923
        %v959 = vpop.f32.mrb[0].mxu0
        %v960 = vadd.f32 %v907, %v959
        %v961 = vpop.f32.mrb[0].mxu0
        %v962 = vpop.f32.mrb[0].mxu0
        %v963 = vpop.f32.mrb[0].mxu0
        %964 = vdwg.mxu0
        %v965 = vmul.f32 %v960, 0.35355338
        %967 = vrot.lane.b32.xlu0 %v965, 120
        %v968 = vpop.permute.xlu0 %967
        %970 = vrot.lane.b32.xlu0 %v965, 112
        %v971 = vpop.permute.xlu0 %970
        %973 = vrot.lane.b32.xlu0 %v965, 104
        %v974 = vpop.permute.xlu0 %973
        %v976 = vpack.c.bf16 %v965, %v965
        %v977 = vpack.c.bf16 %v968, %v968
        %v978 = vpack.c.bf16 %v971, %v971
        %v979 = vpack.c.bf16 %v974, %v974
        %v980 = vld [vmem:[#allocation2] sm:$0xf]
        %v981 = vld [vmem:[#allocation2 + $0x4] sm:$0xf]
        %v982 = vld [vmem:[#allocation2 + $0x8] sm:$0xf]
        %v983 = vld [vmem:[#allocation2 + $0xc] sm:$0xf]
        %vm984 = vcmask 64512
        %v986 = vsel %vm984, %v976, 0
        %v989 = vsel %vm984, %v980, 0
        %991 = vmatprep.subr.bf16.mxu0 0
        %992 = vmatpush1.bf16.xpose.msra.mxu0 %v989
        %993 = vmatprep.subr.bf16.mxu0 0
        %994 = vmatpush1.bf16.xpose.msra.mxu0 0
        %995 = vmatprep.subr.bf16.mxu0 0
        %996 = vmatpush1.bf16.xpose.msra.mxu0 0
        %997 = vmatprep.subr.bf16.mxu0 0
        %998 = vmatpush1.bf16.xpose.msra.mxu0 0
        %999 = vmatprep.subr.bf16.mxu0 0
        %1000 = vmatpush1.bf16.xpose.msra.mxu0 0
        %1001 = vmatprep.subr.bf16.mxu0 0
        %1002 = vmatpush1.bf16.xpose.msra.mxu0 0
        %1003 = vmatprep.subr.bf16.mxu0 0
        %1004 = vmatpush1.bf16.xpose.msra.mxu0 0
        %1005 = vmatprep.subr.bf16.mxu0 0
        %1006 = vmatpush1.bf16.xpose.msra.mxu0 0
        %1007 = vmatprep.subr.bf16.mxu0 0
        %1008 = vmatpush1.bf16.xpose.msra.mxu0 0
        %1009 = vmatprep.subr.bf16.mxu0 0
        %1010 = vmatpush1.bf16.xpose.msra.mxu0 0
        %1011 = vmatprep.subr.bf16.mxu0 0
        %1012 = vmatpush1.bf16.xpose.msra.mxu0 0
        %1013 = vmatprep.subr.bf16.mxu0 0
        %1014 = vmatpush1.bf16.xpose.msra.mxu0 0
        %1015 = vmatprep.subr.bf16.mxu0 0
        %1016 = vmatpush1.bf16.xpose.msra.mxu0 0
        %1017 = vmatprep.subr.bf16.mxu0 0
        %1018 = vmatpush1.bf16.xpose.msra.mxu0 0
        %1019 = vmatprep.subr.bf16.mxu0 0
        %1020 = vmatpush1.bf16.xpose.msra.mxu0 0
        %1021 = vmatprep.subr.bf16.mxu0 0
        %1022 = vmatpush1.bf16.xpose.msra.mxu0 0
        %1023 = vmatprep.mubr.bf16.mxu0 0
        %1024 = vmatmul.mubr.bf16.gmra.mrb[0].mxu0 %v986
        %v1025 = vpop.f32.mrb[0].mxu0
        %v1026 = vadd.f32 0.0, %v1025
        %v1027 = vpop.f32.mrb[0].mxu0
        %v1028 = vpop.f32.mrb[0].mxu0
        %v1029 = vpop.f32.mrb[0].mxu0
        %1030 = vdwg.mxu0
        %v1032 = vsel %vm984, %v977, 0
        %v1035 = vsel %vm984, %v981, 0
        %1037 = vmatprep.subr.bf16.mxu0 0
        %1038 = vmatpush1.bf16.xpose.msra.mxu0 %v1035
        %1039 = vmatprep.subr.bf16.mxu0 0
        %1040 = vmatpush1.bf16.xpose.msra.mxu0 0
        %1041 = vmatprep.subr.bf16.mxu0 0
        %1042 = vmatpush1.bf16.xpose.msra.mxu0 0
        %1043 = vmatprep.subr.bf16.mxu0 0
        %1044 = vmatpush1.bf16.xpose.msra.mxu0 0
        %1045 = vmatprep.subr.bf16.mxu0 0
        %1046 = vmatpush1.bf16.xpose.msra.mxu0 0
        %1047 = vmatprep.subr.bf16.mxu0 0
        %1048 = vmatpush1.bf16.xpose.msra.mxu0 0
        %1049 = vmatprep.subr.bf16.mxu0 0
        %1050 = vmatpush1.bf16.xpose.msra.mxu0 0
        %1051 = vmatprep.subr.bf16.mxu0 0
        %1052 = vmatpush1.bf16.xpose.msra.mxu0 0
        %1053 = vmatprep.subr.bf16.mxu0 0
        %1054 = vmatpush1.bf16.xpose.msra.mxu0 0
        %1055 = vmatprep.subr.bf16.mxu0 0
        %1056 = vmatpush1.bf16.xpose.msra.mxu0 0
        %1057 = vmatprep.subr.bf16.mxu0 0
        %1058 = vmatpush1.bf16.xpose.msra.mxu0 0
        %1059 = vmatprep.subr.bf16.mxu0 0
        %1060 = vmatpush1.bf16.xpose.msra.mxu0 0
        %1061 = vmatprep.subr.bf16.mxu0 0
        %1062 = vmatpush1.bf16.xpose.msra.mxu0 0
        %1063 = vmatprep.subr.bf16.mxu0 0
        %1064 = vmatpush1.bf16.xpose.msra.mxu0 0
        %1065 = vmatprep.subr.bf16.mxu0 0
        %1066 = vmatpush1.bf16.xpose.msra.mxu0 0
        %1067 = vmatprep.subr.bf16.mxu0 0
        %1068 = vmatpush1.bf16.xpose.msra.mxu0 0
        %1069 = vmatprep.mubr.bf16.mxu0 0
        %1070 = vmatmul.mubr.bf16.gmra.mrb[0].mxu0 %v1032
        %v1071 = vpop.f32.mrb[0].mxu0
        %v1072 = vadd.f32 0.0, %v1071
        %v1073 = vpop.f32.mrb[0].mxu0
        %v1074 = vpop.f32.mrb[0].mxu0
        %v1075 = vpop.f32.mrb[0].mxu0
        %1076 = vdwg.mxu0
        %v1078 = vsel %vm984, %v978, 0
        %v1081 = vsel %vm984, %v982, 0
        %1083 = vmatprep.subr.bf16.mxu0 0
        %1084 = vmatpush1.bf16.xpose.msra.mxu0 %v1081
        %1085 = vmatprep.subr.bf16.mxu0 0
        %1086 = vmatpush1.bf16.xpose.msra.mxu0 0
        %1087 = vmatprep.subr.bf16.mxu0 0
        %1088 = vmatpush1.bf16.xpose.msra.mxu0 0
        %1089 = vmatprep.subr.bf16.mxu0 0
        %1090 = vmatpush1.bf16.xpose.msra.mxu0 0
        %1091 = vmatprep.subr.bf16.mxu0 0
        %1092 = vmatpush1.bf16.xpose.msra.mxu0 0
        %1093 = vmatprep.subr.bf16.mxu0 0
        %1094 = vmatpush1.bf16.xpose.msra.mxu0 0
        %1095 = vmatprep.subr.bf16.mxu0 0
        %1096 = vmatpush1.bf16.xpose.msra.mxu0 0
        %1097 = vmatprep.subr.bf16.mxu0 0
        %1098 = vmatpush1.bf16.xpose.msra.mxu0 0
        %1099 = vmatprep.subr.bf16.mxu0 0
        %1100 = vmatpush1.bf16.xpose.msra.mxu0 0
        %1101 = vmatprep.subr.bf16.mxu0 0
        %1102 = vmatpush1.bf16.xpose.msra.mxu0 0
        %1103 = vmatprep.subr.bf16.mxu0 0
        %1104 = vmatpush1.bf16.xpose.msra.mxu0 0
        %1105 = vmatprep.subr.bf16.mxu0 0
        %1106 = vmatpush1.bf16.xpose.msra.mxu0 0
        %1107 = vmatprep.subr.bf16.mxu0 0
        %1108 = vmatpush1.bf16.xpose.msra.mxu0 0
        %1109 = vmatprep.subr.bf16.mxu0 0
        %1110 = vmatpush1.bf16.xpose.msra.mxu0 0
        %1111 = vmatprep.subr.bf16.mxu0 0
        %1112 = vmatpush1.bf16.xpose.msra.mxu0 0
        %1113 = vmatprep.subr.bf16.mxu0 0
        %1114 = vmatpush1.bf16.xpose.msra.mxu0 0
        %1115 = vmatprep.mubr.bf16.mxu0 0
        %1116 = vmatmul.mubr.bf16.gmra.mrb[0].mxu0 %v1078
        %v1117 = vpop.f32.mrb[0].mxu0
        %v1118 = vadd.f32 0.0, %v1117
        %v1119 = vpop.f32.mrb[0].mxu0
        %v1120 = vpop.f32.mrb[0].mxu0
        %v1121 = vpop.f32.mrb[0].mxu0
        %1122 = vdwg.mxu0
        %v1124 = vsel %vm984, %v979, 0
        %v1127 = vsel %vm984, %v983, 0
        %1129 = vmatprep.subr.bf16.mxu0 0
        %1130 = vmatpush1.bf16.xpose.msra.mxu0 %v1127
        %1131 = vmatprep.subr.bf16.mxu0 0
        %1132 = vmatpush1.bf16.xpose.msra.mxu0 0
        %1133 = vmatprep.subr.bf16.mxu0 0
        %1134 = vmatpush1.bf16.xpose.msra.mxu0 0
        %1135 = vmatprep.subr.bf16.mxu0 0
        %1136 = vmatpush1.bf16.xpose.msra.mxu0 0
        %1137 = vmatprep.subr.bf16.mxu0 0
        %1138 = vmatpush1.bf16.xpose.msra.mxu0 0
        %1139 = vmatprep.subr.bf16.mxu0 0
        %1140 = vmatpush1.bf16.xpose.msra.mxu0 0
        %1141 = vmatprep.subr.bf16.mxu0 0
        %1142 = vmatpush1.bf16.xpose.msra.mxu0 0
        %1143 = vmatprep.subr.bf16.mxu0 0
        %1144 = vmatpush1.bf16.xpose.msra.mxu0 0
        %1145 = vmatprep.subr.bf16.mxu0 0
        %1146 = vmatpush1.bf16.xpose.msra.mxu0 0
        %1147 = vmatprep.subr.bf16.mxu0 0
        %1148 = vmatpush1.bf16.xpose.msra.mxu0 0
        %1149 = vmatprep.subr.bf16.mxu0 0
        %1150 = vmatpush1.bf16.xpose.msra.mxu0 0
        %1151 = vmatprep.subr.bf16.mxu0 0
        %1152 = vmatpush1.bf16.xpose.msra.mxu0 0
        %1153 = vmatprep.subr.bf16.mxu0 0
        %1154 = vmatpush1.bf16.xpose.msra.mxu0 0
        %1155 = vmatprep.subr.bf16.mxu0 0
        %1156 = vmatpush1.bf16.xpose.msra.mxu0 0
        %1157 = vmatprep.subr.bf16.mxu0 0
        %1158 = vmatpush1.bf16.xpose.msra.mxu0 0
        %1159 = vmatprep.subr.bf16.mxu0 0
        %1160 = vmatpush1.bf16.xpose.msra.mxu0 0
        %1161 = vmatprep.mubr.bf16.mxu0 0
        %1162 = vmatmul.mubr.bf16.gmra.mrb[0].mxu0 %v1124
        %v1163 = vpop.f32.mrb[0].mxu0
        %v1164 = vadd.f32 0.0, %v1163
        %v1165 = vpop.f32.mrb[0].mxu0
        %v1166 = vpop.f32.mrb[0].mxu0
        %v1167 = vpop.f32.mrb[0].mxu0
        %1168 = vdwg.mxu0
        %v1169 = vsel %vm984, %v1026, -inf
        %1170 = vmax.xlane.f32.xlu0 %v1169
        %v1171 = vpop.xlane.xlu0 %1170
        %v1172 = vsel %vm984, %v1072, -inf
        %1173 = vmax.xlane.f32.xlu0 %v1172
        %v1174 = vpop.xlane.xlu0 %1173
        %v1175 = vsel %vm984, %v1118, -inf
        %1176 = vmax.xlane.f32.xlu0 %v1175
        %v1177 = vpop.xlane.xlu0 %1176
        %v1178 = vsel %vm984, %v1164, -inf
        %1179 = vmax.xlane.f32.xlu0 %v1178
        %v1180 = vpop.xlane.xlu0 %1179
        %v1181 = vsub.f32 %v1026, %v1171
        %v1182 = vsub.f32 %v1072, %v1174
        %v1183 = vsub.f32 %v1118, %v1177
        %v1184 = vsub.f32 %v1164, %v1180
        %v1185 = vmul.f32 %v1181, 1.442695
        %v1186 = vpow.pop %v1185
        %v1187 = vmul.f32 %v1182, 1.442695
        %v1188 = vpow.pop %v1187
        %v1189 = vmul.f32 %v1183, 1.442695
        %v1190 = vpow.pop %v1189
        %v1191 = vmul.f32 %v1184, 1.442695
        %v1192 = vpow.pop %v1191
        %v1193 = vsel %vm984, %v1186, 0.0
        %1194 = vadd.xlane.f32.xlu0 %v1193
        %v1195 = vpop.xlane.xlu0 %1194
        %v1196 = vsel %vm984, %v1188, 0.0
        %1197 = vadd.xlane.f32.xlu0 %v1196
        %v1198 = vpop.xlane.xlu0 %1197
        %v1199 = vsel %vm984, %v1190, 0.0
        %1200 = vadd.xlane.f32.xlu0 %v1199
        %v1201 = vpop.xlane.xlu0 %1200
        %v1202 = vsel %vm984, %v1192, 0.0
        %1203 = vadd.xlane.f32.xlu0 %v1202
        %v1204 = vpop.xlane.xlu0 %1203
        %v1205 = vrcp.pop %v1195
        %v1206 = vrcp.pop %v1198
        %v1207 = vrcp.pop %v1201
        %v1208 = vrcp.pop %v1204
        %v1209 = vmul.f32 %v1186, %v1205
        %v1210 = vmul.f32 %v1188, %v1206
        %v1211 = vmul.f32 %v1190, %v1207
        %v1212 = vmul.f32 %v1192, %v1208
        %v1213 = vpack.c.bf16 %v1209, %v1209
        %v1214 = vpack.c.bf16 %v1210, %v1210
        %v1215 = vpack.c.bf16 %v1211, %v1211
        %v1216 = vpack.c.bf16 %v1212, %v1212
        %vm1217 = vcmask 60416
        %1218 = vst.msk [vmem:[%s710] sm:$0xf] %vm1217, %v1213
        %1219 = vst.msk [vmem:[%s710 + $0x4] sm:$0xf] %vm1217, %v1214
        %1220 = vst.msk [vmem:[%s710 + $0x8] sm:$0xf] %vm1217, %v1215
        %1221 = vst.msk [vmem:[%s710 + $0xc] sm:$0xf] %vm1217, %v1216
        %v1222 = vld [vmem:[#allocation3] sm:$0xf]
        %v1223 = vld [vmem:[#allocation3 + $0x4] sm:$0xf]
        %v1224 = vld [vmem:[#allocation3 + $0x8] sm:$0xf]
        %v1225 = vld [vmem:[#allocation3 + $0xc] sm:$0xf]
        %v1227 = vsel %vm984, %v1213, 0
        %vm1229 = vcmask 1043456
        %v1231 = vsel %vm1229, %v1222, 0
        %1233 = vmatprep.subr.bf16.mxu0 0
        %1234 = vmatpush1.bf16.msra.mxu0 %v1231
        %1235 = vmatprep.subr.bf16.mxu0 0
        %1236 = vmatpush1.bf16.msra.mxu0 0
        %1237 = vmatprep.subr.bf16.mxu0 0
        %1238 = vmatpush1.bf16.msra.mxu0 0
        %1239 = vmatprep.subr.bf16.mxu0 0
        %1240 = vmatpush1.bf16.msra.mxu0 0
        %1241 = vmatprep.subr.bf16.mxu0 0
        %1242 = vmatpush1.bf16.msra.mxu0 0
        %1243 = vmatprep.subr.bf16.mxu0 0
        %1244 = vmatpush1.bf16.msra.mxu0 0
        %1245 = vmatprep.subr.bf16.mxu0 0
        %1246 = vmatpush1.bf16.msra.mxu0 0
        %1247 = vmatprep.subr.bf16.mxu0 0
        %1248 = vmatpush1.bf16.msra.mxu0 0
        %1249 = vmatprep.subr.bf16.mxu0 0
        %1250 = vmatpush1.bf16.msra.mxu0 0
        %1251 = vmatprep.subr.bf16.mxu0 0
        %1252 = vmatpush1.bf16.msra.mxu0 0
        %1253 = vmatprep.subr.bf16.mxu0 0
        %1254 = vmatpush1.bf16.msra.mxu0 0
        %1255 = vmatprep.subr.bf16.mxu0 0
        %1256 = vmatpush1.bf16.msra.mxu0 0
        %1257 = vmatprep.subr.bf16.mxu0 0
        %1258 = vmatpush1.bf16.msra.mxu0 0
        %1259 = vmatprep.subr.bf16.mxu0 0
        %1260 = vmatpush1.bf16.msra.mxu0 0
        %1261 = vmatprep.subr.bf16.mxu0 0
        %1262 = vmatpush1.bf16.msra.mxu0 0
        %1263 = vmatprep.subr.bf16.mxu0 0
        %1264 = vmatpush1.bf16.msra.mxu0 0
        %1265 = vmatprep.mubr.bf16.mxu0 0
        %1266 = vmatmul.mubr.bf16.gmra.mrb[0].mxu0 %v1227
        %v1267 = vpop.f32.mrb[0].mxu0
        %v1268 = vadd.f32 0.0, %v1267
        %v1269 = vpop.f32.mrb[0].mxu0
        %v1270 = vpop.f32.mrb[0].mxu0
        %v1271 = vpop.f32.mrb[0].mxu0
        %1272 = vdwg.mxu0
        %v1274 = vsel %vm984, %v1214, 0
        %v1277 = vsel %vm1229, %v1223, 0
        %1279 = vmatprep.subr.bf16.mxu0 0
        %1280 = vmatpush1.bf16.msra.mxu0 %v1277
        %1281 = vmatprep.subr.bf16.mxu0 0
        %1282 = vmatpush1.bf16.msra.mxu0 0
        %1283 = vmatprep.subr.bf16.mxu0 0
        %1284 = vmatpush1.bf16.msra.mxu0 0
        %1285 = vmatprep.subr.bf16.mxu0 0
        %1286 = vmatpush1.bf16.msra.mxu0 0
        %1287 = vmatprep.subr.bf16.mxu0 0
        %1288 = vmatpush1.bf16.msra.mxu0 0
        %1289 = vmatprep.subr.bf16.mxu0 0
        %1290 = vmatpush1.bf16.msra.mxu0 0
        %1291 = vmatprep.subr.bf16.mxu0 0
        %1292 = vmatpush1.bf16.msra.mxu0 0
        %1293 = vmatprep.subr.bf16.mxu0 0
        %1294 = vmatpush1.bf16.msra.mxu0 0
        %1295 = vmatprep.subr.bf16.mxu0 0
        %1296 = vmatpush1.bf16.msra.mxu0 0
        %1297 = vmatprep.subr.bf16.mxu0 0
        %1298 = vmatpush1.bf16.msra.mxu0 0
        %1299 = vmatprep.subr.bf16.mxu0 0
        %1300 = vmatpush1.bf16.msra.mxu0 0
        %1301 = vmatprep.subr.bf16.mxu0 0
        %1302 = vmatpush1.bf16.msra.mxu0 0
        %1303 = vmatprep.subr.bf16.mxu0 0
        %1304 = vmatpush1.bf16.msra.mxu0 0
        %1305 = vmatprep.subr.bf16.mxu0 0
        %1306 = vmatpush1.bf16.msra.mxu0 0
        %1307 = vmatprep.subr.bf16.mxu0 0
        %1308 = vmatpush1.bf16.msra.mxu0 0
        %1309 = vmatprep.subr.bf16.mxu0 0
        %1310 = vmatpush1.bf16.msra.mxu0 0
        %1311 = vmatprep.mubr.bf16.mxu0 0
        %1312 = vmatmul.mubr.bf16.gmra.mrb[0].mxu0 %v1274
        %v1313 = vpop.f32.mrb[0].mxu0
        %v1314 = vadd.f32 0.0, %v1313
        %v1315 = vpop.f32.mrb[0].mxu0
        %v1316 = vpop.f32.mrb[0].mxu0
        %v1317 = vpop.f32.mrb[0].mxu0
        %1318 = vdwg.mxu0
        %v1320 = vsel %vm984, %v1215, 0
        %v1323 = vsel %vm1229, %v1224, 0
        %1325 = vmatprep.subr.bf16.mxu0 0
        %1326 = vmatpush1.bf16.msra.mxu0 %v1323
        %1327 = vmatprep.subr.bf16.mxu0 0
        %1328 = vmatpush1.bf16.msra.mxu0 0
        %1329 = vmatprep.subr.bf16.mxu0 0
        %1330 = vmatpush1.bf16.msra.mxu0 0
        %1331 = vmatprep.subr.bf16.mxu0 0
        %1332 = vmatpush1.bf16.msra.mxu0 0
        %1333 = vmatprep.subr.bf16.mxu0 0
        %1334 = vmatpush1.bf16.msra.mxu0 0
        %1335 = vmatprep.subr.bf16.mxu0 0
        %1336 = vmatpush1.bf16.msra.mxu0 0
        %1337 = vmatprep.subr.bf16.mxu0 0
        %1338 = vmatpush1.bf16.msra.mxu0 0
        %1339 = vmatprep.subr.bf16.mxu0 0
        %1340 = vmatpush1.bf16.msra.mxu0 0
        %1341 = vmatprep.subr.bf16.mxu0 0
        %1342 = vmatpush1.bf16.msra.mxu0 0
        %1343 = vmatprep.subr.bf16.mxu0 0
        %1344 = vmatpush1.bf16.msra.mxu0 0
        %1345 = vmatprep.subr.bf16.mxu0 0
        %1346 = vmatpush1.bf16.msra.mxu0 0
        %1347 = vmatprep.subr.bf16.mxu0 0
        %1348 = vmatpush1.bf16.msra.mxu0 0
        %1349 = vmatprep.subr.bf16.mxu0 0
        %1350 = vmatpush1.bf16.msra.mxu0 0
        %1351 = vmatprep.subr.bf16.mxu0 0
        %1352 = vmatpush1.bf16.msra.mxu0 0
        %1353 = vmatprep.subr.bf16.mxu0 0
        %1354 = vmatpush1.bf16.msra.mxu0 0
        %1355 = vmatprep.subr.bf16.mxu0 0
        %1356 = vmatpush1.bf16.msra.mxu0 0
        %1357 = vmatprep.mubr.bf16.mxu0 0
        %1358 = vmatmul.mubr.bf16.gmra.mrb[0].mxu0 %v1320
        %v1359 = vpop.f32.mrb[0].mxu0
        %v1360 = vadd.f32 0.0, %v1359
        %v1361 = vpop.f32.mrb[0].mxu0
        %v1362 = vpop.f32.mrb[0].mxu0
        %v1363 = vpop.f32.mrb[0].mxu0
        %1364 = vdwg.mxu0
        %v1366 = vsel %vm984, %v1216, 0
        %v1369 = vsel %vm1229, %v1225, 0
        %1371 = vmatprep.subr.bf16.mxu0 0
        %1372 = vmatpush1.bf16.msra.mxu0 %v1369
        %1373 = vmatprep.subr.bf16.mxu0 0
        %1374 = vmatpush1.bf16.msra.mxu0 0
        %1375 = vmatprep.subr.bf16.mxu0 0
        %1376 = vmatpush1.bf16.msra.mxu0 0
        %1377 = vmatprep.subr.bf16.mxu0 0
        %1378 = vmatpush1.bf16.msra.mxu0 0
        %1379 = vmatprep.subr.bf16.mxu0 0
        %1380 = vmatpush1.bf16.msra.mxu0 0
        %1381 = vmatprep.subr.bf16.mxu0 0
        %1382 = vmatpush1.bf16.msra.mxu0 0
        %1383 = vmatprep.subr.bf16.mxu0 0
        %1384 = vmatpush1.bf16.msra.mxu0 0
        %1385 = vmatprep.subr.bf16.mxu0 0
        %1386 = vmatpush1.bf16.msra.mxu0 0
        %1387 = vmatprep.subr.bf16.mxu0 0
        %1388 = vmatpush1.bf16.msra.mxu0 0
        %1389 = vmatprep.subr.bf16.mxu0 0
        %1390 = vmatpush1.bf16.msra.mxu0 0
        %1391 = vmatprep.subr.bf16.mxu0 0
        %1392 = vmatpush1.bf16.msra.mxu0 0
        %1393 = vmatprep.subr.bf16.mxu0 0
        %1394 = vmatpush1.bf16.msra.mxu0 0
        %1395 = vmatprep.subr.bf16.mxu0 0
        %1396 = vmatpush1.bf16.msra.mxu0 0
        %1397 = vmatprep.subr.bf16.mxu0 0
        %1398 = vmatpush1.bf16.msra.mxu0 0
        %1399 = vmatprep.subr.bf16.mxu0 0
        %1400 = vmatpush1.bf16.msra.mxu0 0
        %1401 = vmatprep.subr.bf16.mxu0 0
        %1402 = vmatpush1.bf16.msra.mxu0 0
        %1403 = vmatprep.mubr.bf16.mxu0 0
        %1404 = vmatmul.mubr.bf16.gmra.mrb[0].mxu0 %v1366
        %v1405 = vpop.f32.mrb[0].mxu0
        %v1406 = vadd.f32 0.0, %v1405
        %v1407 = vpop.f32.mrb[0].mxu0
        %v1408 = vpop.f32.mrb[0].mxu0
        %v1409 = vpop.f32.mrb[0].mxu0
        %1410 = vdwg.mxu0
        %1412 = vrot.lane.b32.xlu0 %v1314, 8
        %v1413 = vpop.permute.xlu0 %1412
        %1416 = vrot.lane.b32.xlu0 %v1360, 16
        %v1417 = vpop.permute.xlu0 %1416
        %1420 = vrot.lane.b32.xlu0 %v1406, 24
        %v1421 = vpop.permute.xlu0 %1420
        %v1423 = vsel %vm984, %v1268, %v1413
        %vm1424 = vcmask 130048
        %v1425 = vsel %vm1424, %v1423, %v1417
        %vm1426 = vcmask 195584
        %v1427 = vsel %vm1426, %v1425, %v1421
        %v1428 = vpack.c.bf16 %v1427, %v1427
        %v1429 = vld [vmem:[#allocation10] sm:$0xf]
        %v1430 = vld [vmem:[#allocation10 + $0x4] sm:$0xf]
        %v1431 = vld [vmem:[#allocation10 + $0x8] sm:$0xf]
        %v1432 = vld [vmem:[#allocation10 + $0xc] sm:$0xf]
        %v1433 = vld [vmem:[#allocation12] sm:$0x1]
        %v1435 = vlaneseq
        %v1436 = vshrl.u32 %v1435, 7
        %v1437 = vsub.s32 0, %v1436
        %v1438 = vrot.slane %v1433, %v1437
        %v1444 = vunpack.c.l.b16 %v1429
        %v1445 = vunpack.c.l.b16 %v1430
        %v1446 = vunpack.c.l.b16 %v1431
        %v1447 = vunpack.c.l.b16 %v1432
        %v1448 = vpack.c.b16 %v1445, %v1444
        %v1449 = vpack.c.b16 %v1447, %v1446
        %v1453 = vsel %vm921, %v1428, 0
        %1455 = vmatprep.subr.bf16.mxu0 0
        %1456 = vmatpush1.bf16.msra.mxu0 %v1448
        %1457 = vmatprep.subr.bf16.mxu0 0
        %1458 = vmatpush1.bf16.msra.mxu0 %v1449
        %1459 = vmatprep.subr.bf16.mxu0 0
        %1460 = vmatpush1.bf16.msra.mxu0 0
        %1461 = vmatprep.subr.bf16.mxu0 0
        %1462 = vmatpush1.bf16.msra.mxu0 0
        %1463 = vmatprep.subr.bf16.mxu0 0
        %1464 = vmatpush1.bf16.msra.mxu0 0
        %1465 = vmatprep.subr.bf16.mxu0 0
        %1466 = vmatpush1.bf16.msra.mxu0 0
        %1467 = vmatprep.subr.bf16.mxu0 0
        %1468 = vmatpush1.bf16.msra.mxu0 0
        %1469 = vmatprep.subr.bf16.mxu0 0
        %1470 = vmatpush1.bf16.msra.mxu0 0
        %1471 = vmatprep.subr.bf16.mxu0 0
        %1472 = vmatpush1.bf16.msra.mxu0 0
        %1473 = vmatprep.subr.bf16.mxu0 0
        %1474 = vmatpush1.bf16.msra.mxu0 0
        %1475 = vmatprep.subr.bf16.mxu0 0
        %1476 = vmatpush1.bf16.msra.mxu0 0
        %1477 = vmatprep.subr.bf16.mxu0 0
        %1478 = vmatpush1.bf16.msra.mxu0 0
        %1479 = vmatprep.subr.bf16.mxu0 0
        %1480 = vmatpush1.bf16.msra.mxu0 0
        %1481 = vmatprep.subr.bf16.mxu0 0
        %1482 = vmatpush1.bf16.msra.mxu0 0
        %1483 = vmatprep.subr.bf16.mxu0 0
        %1484 = vmatpush1.bf16.msra.mxu0 0
        %1485 = vmatprep.subr.bf16.mxu0 0
        %1486 = vmatpush1.bf16.msra.mxu0 0
        %1487 = vmatprep.mubr.bf16.mxu0 0
        %1488 = vmatmul.mubr.bf16.gmra.mrb[0].mxu0 %v1453
        %v1489 = vpop.f32.mrb[0].mxu0
        %v1490 = vadd.f32 %v1438, %v1489
        %v1491 = vpop.f32.mrb[0].mxu0
        %v1492 = vpop.f32.mrb[0].mxu0
        %v1493 = vpop.f32.mrb[0].mxu0
        %1494 = vdwg.mxu0
        %v1495 = vadd.f32 %v1490, %v896
        %v1496 = vld [vmem:[%s10] sm:$0x1]
        %v1497 = vld [vmem:[%s11] sm:$0x1]
        %v1498 = vsel %vm921, %v1495, 0.0
        %1499 = vadd.xlane.f32.xlu0 %v1498
        %v1500 = vpop.xlane.xlu0 %1499
        %v1501 = vrcp.pop 32.0
        %v1502 = vmul.f32 %v1500, %v1501
        %v1503 = vsub.f32 %v1495, %v1502
        %v1504 = vmul.f32 %v1503, %v1503
        %v1505 = vsel %vm921, %v1504, 0.0
        %1506 = vadd.xlane.f32.xlu0 %v1505
        %v1507 = vpop.xlane.xlu0 %1506
        %v1508 = vmul.f32 %v1507, %v1501
        %v1509 = vadd.f32 %v1508, 1e-05
        %v1510 = vrsqrt.pop %v1509
        %v1511 = vmul.f32 %v1503, %v1510
        %v1513 = vlaneseq
        %v1514 = vshrl.u32 %v1513, 7
        %v1515 = vsub.s32 0, %v1514
        %v1516 = vrot.slane %v1496, %v1515
        %v1518 = vmul.f32 %v1511, %v1516
        %v1520 = vlaneseq
        %v1521 = vshrl.u32 %v1520, 7
        %v1522 = vsub.s32 0, %v1521
        %v1523 = vrot.slane %v1497, %v1522
        %v1525 = vadd.f32 %v1518, %v1523
        %v1526 = vpack.c.bf16 %v1525, %v1525
        %v1527 = vld [vmem:[%s12] sm:$0xf]
        %v1528 = vld [vmem:[%s12 + $0x4] sm:$0xf]
        %v1529 = vld [vmem:[%s12 + $0x8] sm:$0xf]
        %v1530 = vld [vmem:[%s12 + $0xc] sm:$0xf]
        %v1531 = vld [vmem:[%s13] sm:$0x1]
        %v1533 = vlaneseq
        %v1534 = vshrl.u32 %v1533, 7
        %v1535 = vsub.s32 0, %v1534
        %v1536 = vrot.slane %v1531, %v1535
        %v1542 = vunpack.c.l.b16 %v1527
        %v1543 = vunpack.c.l.b16 %v1528
        %v1544 = vunpack.c.l.b16 %v1529
        %v1545 = vunpack.c.l.b16 %v1530
        %v1546 = vpack.c.b16 %v1543, %v1542
        %v1547 = vpack.c.b16 %v1545, %v1544
        %v1551 = vsel %vm921, %v1526, 0
        %1553 = vmatprep.subr.bf16.mxu0 0
        %1554 = vmatpush1.bf16.msra.mxu0 %v1546
        %1555 = vmatprep.subr.bf16.mxu0 0
        %1556 = vmatpush1.bf16.msra.mxu0 %v1547
        %1557 = vmatprep.subr.bf16.mxu0 0
        %1558 = vmatpush1.bf16.msra.mxu0 0
        %1559 = vmatprep.subr.bf16.mxu0 0
        %1560 = vmatpush1.bf16.msra.mxu0 0
        %1561 = vmatprep.subr.bf16.mxu0 0
        %1562 = vmatpush1.bf16.msra.mxu0 0
        %1563 = vmatprep.subr.bf16.mxu0 0
        %1564 = vmatpush1.bf16.msra.mxu0 0
        %1565 = vmatprep.subr.bf16.mxu0 0
        %1566 = vmatpush1.bf16.msra.mxu0 0
        %1567 = vmatprep.subr.bf16.mxu0 0
        %1568 = vmatpush1.bf16.msra.mxu0 0
        %1569 = vmatprep.subr.bf16.mxu0 0
        %1570 = vmatpush1.bf16.msra.mxu0 0
        %1571 = vmatprep.subr.bf16.mxu0 0
        %1572 = vmatpush1.bf16.msra.mxu0 0
        %1573 = vmatprep.subr.bf16.mxu0 0
        %1574 = vmatpush1.bf16.msra.mxu0 0
        %1575 = vmatprep.subr.bf16.mxu0 0
        %1576 = vmatpush1.bf16.msra.mxu0 0
        %1577 = vmatprep.subr.bf16.mxu0 0
        %1578 = vmatpush1.bf16.msra.mxu0 0
        %1579 = vmatprep.subr.bf16.mxu0 0
        %1580 = vmatpush1.bf16.msra.mxu0 0
        %1581 = vmatprep.subr.bf16.mxu0 0
        %1582 = vmatpush1.bf16.msra.mxu0 0
        %1583 = vmatprep.subr.bf16.mxu0 0
        %1584 = vmatpush1.bf16.msra.mxu0 0
        %1585 = vmatprep.mubr.bf16.mxu0 0
        %1586 = vmatmul.mubr.bf16.gmra.mrb[0].mxu0 %v1551
        %v1587 = vpop.f32.mrb[0].mxu0
        %v1588 = vadd.f32 %v1536, %v1587
        %v1589 = vpop.f32.mrb[0].mxu0
        %v1590 = vpop.f32.mrb[0].mxu0
        %v1591 = vpop.f32.mrb[0].mxu0
        %1592 = vdwg.mxu0
        %v1593 = vmax.f32 %v1588, 0.0
        %v1594 = vpack.c.bf16 %v1593, %v1593
        %v1595 = vld [vmem:[%s14] sm:$0xf]
        %v1596 = vld [vmem:[%s14 + $0x4] sm:$0xf]
        %v1597 = vld [vmem:[%s14 + $0x8] sm:$0xf]
        %v1598 = vld [vmem:[%s14 + $0xc] sm:$0xf]
        %v1599 = vld [vmem:[%s14 + $0x10] sm:$0xf]
        %v1600 = vld [vmem:[%s14 + $0x14] sm:$0xf]
        %v1601 = vld [vmem:[%s14 + $0x18] sm:$0xf]
        %v1602 = vld [vmem:[%s14 + $0x1c] sm:$0xf]
        %v1603 = vld [vmem:[%s15] sm:$0x1]
        %v1605 = vlaneseq
        %v1606 = vshrl.u32 %v1605, 7
        %v1607 = vsub.s32 0, %v1606
        %v1608 = vrot.slane %v1603, %v1607
        %v1618 = vunpack.c.l.b16 %v1595
        %v1619 = vunpack.c.l.b16 %v1596
        %v1620 = vunpack.c.l.b16 %v1597
        %v1621 = vunpack.c.l.b16 %v1598
        %v1622 = vunpack.c.l.b16 %v1599
        %v1623 = vunpack.c.l.b16 %v1600
        %v1624 = vunpack.c.l.b16 %v1601
        %v1625 = vunpack.c.l.b16 %v1602
        %v1626 = vpack.c.b16 %v1619, %v1618
        %v1627 = vpack.c.b16 %v1621, %v1620
        %v1628 = vpack.c.b16 %v1623, %v1622
        %v1629 = vpack.c.b16 %v1625, %v1624
        %vm1634 = vcmask 523264
        %v1636 = vsel %vm1634, %v1594, 0
        %1638 = vmatprep.subr.bf16.mxu0 0
        %1639 = vmatpush1.bf16.msra.mxu0 %v1626
        %1640 = vmatprep.subr.bf16.mxu0 0
        %1641 = vmatpush1.bf16.msra.mxu0 %v1627
        %1642 = vmatprep.subr.bf16.mxu0 0
        %1643 = vmatpush1.bf16.msra.mxu0 %v1628
        %1644 = vmatprep.subr.bf16.mxu0 0
        %1645 = vmatpush1.bf16.msra.mxu0 %v1629
        %1646 = vmatprep.subr.bf16.mxu0 0
        %1647 = vmatpush1.bf16.msra.mxu0 0
        %1648 = vmatprep.subr.bf16.mxu0 0
        %1649 = vmatpush1.bf16.msra.mxu0 0
        %1650 = vmatprep.subr.bf16.mxu0 0
        %1651 = vmatpush1.bf16.msra.mxu0 0
        %1652 = vmatprep.subr.bf16.mxu0 0
        %1653 = vmatpush1.bf16.msra.mxu0 0
        %1654 = vmatprep.subr.bf16.mxu0 0
        %1655 = vmatpush1.bf16.msra.mxu0 0
        %1656 = vmatprep.subr.bf16.mxu0 0
        %1657 = vmatpush1.bf16.msra.mxu0 0
        %1658 = vmatprep.subr.bf16.mxu0 0
        %1659 = vmatpush1.bf16.msra.mxu0 0
        %1660 = vmatprep.subr.bf16.mxu0 0
        %1661 = vmatpush1.bf16.msra.mxu0 0
        %1662 = vmatprep.subr.bf16.mxu0 0
        %1663 = vmatpush1.bf16.msra.mxu0 0
        %1664 = vmatprep.subr.bf16.mxu0 0
        %1665 = vmatpush1.bf16.msra.mxu0 0
        %1666 = vmatprep.subr.bf16.mxu0 0
        %1667 = vmatpush1.bf16.msra.mxu0 0
        %1668 = vmatprep.subr.bf16.mxu0 0
        %1669 = vmatpush1.bf16.msra.mxu0 0
        %1670 = vmatprep.mubr.bf16.mxu0 0
        %1671 = vmatmul.mubr.bf16.gmra.mrb[0].mxu0 %v1636
        %v1672 = vpop.f32.mrb[0].mxu0
        %v1673 = vadd.f32 %v1608, %v1672
        %v1674 = vpop.f32.mrb[0].mxu0
        %v1675 = vpop.f32.mrb[0].mxu0
        %v1676 = vpop.f32.mrb[0].mxu0
        %1677 = vdwg.mxu0
        %v1678 = vadd.f32 %v1673, %v1525
        %v1679 = vld [vmem:[%s16] sm:$0x1]
        %v1680 = vld [vmem:[%s17] sm:$0x1]
        %v1681 = vsel %vm921, %v1678, 0.0
        %1682 = vadd.xlane.f32.xlu0 %v1681
        %v1683 = vpop.xlane.xlu0 %1682
        %v1684 = vmul.f32 %v1683, %v1501
        %v1685 = vsub.f32 %v1678, %v1684
        %v1686 = vmul.f32 %v1685, %v1685
        %v1687 = vsel %vm921, %v1686, 0.0
        %1688 = vadd.xlane.f32.xlu0 %v1687
        %v1689 = vpop.xlane.xlu0 %1688
        %v1690 = vmul.f32 %v1689, %v1501
        %v1691 = vadd.f32 %v1690, 1e-05
        %v1692 = vrsqrt.pop %v1691
        %v1693 = vmul.f32 %v1685, %v1692
        %v1695 = vlaneseq
        %v1696 = vshrl.u32 %v1695, 7
        %v1697 = vsub.s32 0, %v1696
        %v1698 = vrot.slane %v1679, %v1697
        %v1700 = vmul.f32 %v1693, %v1698
        %v1702 = vlaneseq
        %v1703 = vshrl.u32 %v1702, 7
        %v1704 = vsub.s32 0, %v1703
        %v1705 = vrot.slane %v1680, %v1704
        %v1707 = vadd.f32 %v1700, %v1705
        %1708 = vst.msk [vmem:[%s703] sm:$0xff] %vm921, %v1707
        %s1709 = sand.u32 %s452, 1
        %s1710 = scalar_lea.sflag [#allocation6], %s1709
        %s1711 = sand.u32 %s452, 1
        %s1712 = smul.addr %s1711, 8
        %s1713 = scalar_lea.vmem [#allocation13], %s1712
        %s1714 = sand.u32 %s480, 1
        %s1715 = scalar_lea.sflag [#allocation15], %s1714
        %s1716 = sand.u32 %s480, 1
        %s1717 = smul.addr %s1716, 16
        %s1718 = scalar_lea.vmem [#allocation14], %s1717
        // Predicated region
        $region117: #{tpu_custom_call.1} parent=91 // pred_check
          %p1719 = pneg %p462
        $region118: #{tpu_custom_call.1} parent=91 // pred_check_branch
          %1721 = sbr.rel (%p1719) target = $region120
        $region119: #{tpu_custom_call.1} parent=91 // pred_region
          %s1723 = ssub.s32 128, 128
          %1724 = vsyncadd %s1710, %s1723
          %s1725 = sadd.s32 %s45, %s44
          %s1726 = smul.addr %s1725, 128
          %s1727 = scalar_lea.hbm %s18, %s1726
          %s1729 = sshll.u32 %s1713, 4
          %s1730 = int_to_ptr.vmem [resolvable:$true] %s1729
          %1732 = dma.vmem_to_hbm [thread:$0]  %s1730, 128, %s1727, %s1710
        $region120: #{tpu_custom_call.1} parent=91 // pred_fallthru
          _
        // Predicated region
        $region121: #{tpu_custom_call.1} parent=91 // pred_check
          %p1733 = pneg %p490
        $region122: #{tpu_custom_call.1} parent=91 // pred_check_branch
          %1735 = sbr.rel (%p1733) target = $region124
        $region123: #{tpu_custom_call.1} parent=91 // pred_region
          %s1737 = ssub.s32 256, 256
          %1738 = vsyncadd %s1715, %s1737
          %s1739 = sadd.s32 %s45, %s44
          %s1740 = smul.addr %s1739, 64
          %s1741 = scalar_lea.hbm %s19, %s1740
          %s1742 = sshll.u32 %s1718, 4
          %s1743 = int_to_ptr.vmem [resolvable:$true] %s1742
          %1748 = dma.vmem_to_hbm [thread:$0]  %s1743, 256, %s1741, %s1715, 64, 128, 4
        $region124: #{tpu_custom_call.1} parent=91 // pred_fallthru
          _
      $region92: #{tpu_custom_call.1} parent=5 // pred_fallthru
        _
      %p1749 = scmp.le.s32.totalorder 2, %s35
      // Predicated region
      $region125: #{tpu_custom_call.1} parent=5 // pred_check
        %p1750 = pneg %p1749
      $region126: #{tpu_custom_call.1} parent=5 // pred_check_branch
        %1752 = sbr.rel (%p1750) target = $region128
      $region127: #{tpu_custom_call.1} parent=5 // pred_region
        %s1753 = ssub.s32 %s35, 2
        // Predicated region
        $region129: #{tpu_custom_call.1} parent=127 // pred_check
          %p1754 = pneg %p468
        $region130: #{tpu_custom_call.1} parent=127 // pred_check_branch
          %1756 = sbr.rel (%p1754) target = $region132
        $region131: #{tpu_custom_call.1} parent=127 // pred_region
          %s1757 = sand.u32 %s453, 1
          %s1758 = scalar_lea.sflag [#allocation6], %s1757
          %s1759 = sand.u32 %s453, 1
          %s1760 = smul.addr %s1759, 8
          %s1761 = scalar_lea.vmem [#allocation13], %s1760
          %1762 = dma.done %s1758, 128
        $region132: #{tpu_custom_call.1} parent=127 // pred_fallthru
          _
        // Predicated region
        $region133: #{tpu_custom_call.1} parent=127 // pred_check
          %p1763 = pneg %p496
        $region134: #{tpu_custom_call.1} parent=127 // pred_check_branch
          %1765 = sbr.rel (%p1763) target = $region136
        $region135: #{tpu_custom_call.1} parent=127 // pred_region
          %s1766 = sand.u32 %s481, 1
          %s1767 = scalar_lea.sflag [#allocation15], %s1766
          %s1768 = sand.u32 %s481, 1
          %s1769 = smul.addr %s1768, 16
          %s1770 = scalar_lea.vmem [#allocation14], %s1769
          %1771 = dma.done %s1767, 256
        $region136: #{tpu_custom_call.1} parent=127 // pred_fallthru
          _
      $region128: #{tpu_custom_call.1} parent=5 // pred_fallthru
        _
    $region6: #{tpu_custom_call.1} parent=1 // loop_footer
      %s39 = sadd.s32 1, %s35
    $region7: #{tpu_custom_call.1} parent=1 // loop_footer_branch
      %34 = sbr.rel target = $region3
    $region8: #{tpu_custom_call.1} parent=1 // loop_exit
      _
    %1772 = vsyncpa [#allocation5], 1
    %s1773 = scalar_lea.sflag [#allocation5], 1
    %1774 = vsyncpa %s1773, 1
    %1775 = vsyncpa [#allocation8], 1
    %1776 = vsyncpa [#allocation11], 1
    %1777 = vsyncpa [#allocation6], 1
    %s1778 = scalar_lea.sflag [#allocation6], 1
    %1779 = vsyncpa %s1778, 1
    %1780 = vsyncpa [#allocation15], 1
    %s1781 = scalar_lea.sflag [#allocation15], 1
    %1782 = vsyncpa %s1781, 1

</llo_original>
